<compile_context>
chip_gen: v7x
topology: tpu7x:2x2x1
jax: 0.10.0
libtpu: 0.0.40
codegen_flags: <defaults>
</compile_context>

<pallas_src>
import functools

import numpy as np
import jax
import jax.numpy as jnp
from jax import lax
from jax.experimental import pallas as pl
from jax.experimental.pallas import tpu as pltpu

# Architecture constants.  Linear(2304, 256) pins conv2's output to 32 x 9 x 8,
# which in turn pins the input spatial size to 84 x 80.
C_IN, H_IN, W_IN = 4, 84, 80
C1, KH1, ST1 = 16, 8, 4            # conv1: Conv2d(4, 16, 8, stride=4)
C2, KH2, ST2 = 32, 4, 2            # conv2: Conv2d(16, 32, 4, stride=2)
HO2, WO2 = 9, 8                    # conv2 output spatial
HIDDEN = 256
NOUT_PAD = 128                     # fc2 output padded to a full lane width
Q = ST1 * ST1 * C_IN               # 64 space-to-depth(4) input channels
HS, WS = H_IN // ST1, W_IN // ST1  # 21, 20 : s2d(4) grid
HO1S, WO1S = 10, 9                 # conv1 output grid in 2x2-block coords
K1 = 3 * 3 * Q                     # 576  : conv1 GEMM K (host-built patches)
K2 = 2 * WO1S * 4 * C1             # 1152 : conv2 GEMM K (in-kernel lane concat)
K3 = HO2 * WO2 * C2                # 2304 : fc1 GEMM K
PAD1 = 8                           # overrun pad rows on the conv1 scratch (>= B)


def _agent_net_kernel(p1_ref, w1_ref, b1_ref, w2_ref, b2_ref,
                      wf1_ref, bf1_ref, wf2_ref, bf2_ref,
                      out_ref, y1_scr, y2_scr):
    B = out_ref.shape[0]
    rows2 = HO1S * B               # rows per conv2-lhs slice / conv2 output rows
    nr1 = WO1S * rows2             # valid conv1 rows (row order (W, H, b))

    # Zero the pad rows of y1: they are only read for the discarded ho2==9
    # garbage rows, but keep them finite/deterministic.
    y1_scr[pl.ds(nr1, PAD1), :] = jnp.zeros((PAD1, 4 * C1), y1_scr.dtype)

    # ---- conv1: one GEMM.  Output rows (W, H, b), lanes (a, wp, c) where the
    #      conv1 pixel is (h, w) = (2H + a, 2W + wp).
    a1 = jnp.dot(p1_ref[...], w1_ref[...], preferred_element_type=jnp.float32)
    y1_scr[pl.ds(0, nr1), :] = jnp.maximum(a1 + b1_ref[...], 0.0).astype(y1_scr.dtype)

    # ---- conv2: 18 contiguous row-slices of y1, lane-concatenated to
    #      (10B, 1152) with lane order (dH, W, a, wp, c), then one GEMM whose
    #      output lanes are (wo2, c2).  Rows are (ho2, b); ho2 == 9 is garbage.
    lhs2 = jnp.concatenate(
        [y1_scr[pl.ds(w * rows2 + dh * B, rows2), :]
         for dh in range(2) for w in range(WO1S)], axis=1)
    a2 = jnp.dot(lhs2, w2_ref[...], preferred_element_type=jnp.float32)
    y2_scr[...] = jnp.maximum(a2 + b2_ref[...], 0.0).astype(y2_scr.dtype)

    # ---- fc1: 9 contiguous B-row slices (valid ho2 only) lane-concatenated to
    #      (B, 2304) with lane order (ho2, wo2, c2); the PyTorch flatten
    #      permutation is folded into the pre-packed weight.
    lhs3 = jnp.concatenate(
        [y2_scr[pl.ds(h * B, B), :] for h in range(HO2)], axis=1)
    h1 = jnp.dot(lhs3, wf1_ref[...], preferred_element_type=jnp.float32)
    h1 = jnp.maximum(h1 + bf1_ref[...], 0.0)

    # ---- fc2 (lane-dense 128-wide output; sliced to output_size outside).
    out_ref[...] = (jnp.dot(h1.astype(jnp.bfloat16), wf2_ref[...],
                            preferred_element_type=jnp.float32) + bf2_ref[...])


def init_params(key, output_size):
    """PyTorch-layout parameters (same layouts / fan-in init as the nn.Module)."""
    ks = jax.random.split(key, 8)

    def u(k, shape, fan_in):
        bound = 1.0 / jnp.sqrt(jnp.float32(fan_in))
        return jax.random.uniform(k, shape, jnp.float32, -bound, bound)

    return {
        "conv1_w": u(ks[0], (C1, C_IN, KH1, KH1), C_IN * KH1 * KH1),
        "conv1_b": u(ks[1], (C1,), C_IN * KH1 * KH1),
        "conv2_w": u(ks[2], (C2, C1, KH2, KH2), C1 * KH2 * KH2),
        "conv2_b": u(ks[3], (C2,), C1 * KH2 * KH2),
        "fc1_w": u(ks[4], (HIDDEN, C2 * HO2 * WO2), C2 * HO2 * WO2),  # (out, in)
        "fc1_b": u(ks[5], (HIDDEN,), C2 * HO2 * WO2),
        "fc2_w": u(ks[6], (output_size, HIDDEN), HIDDEN),
        "fc2_b": u(ks[7], (output_size,), HIDDEN),
    }


def pack_params(p):
    """One-time repack of PyTorch-layout weights into kernel GEMM layout (bf16)."""
    out_size = p["fc2_w"].shape[0]
    cw1 = np.asarray(p["conv1_w"], np.float32)          # (16, 4, 8, 8)  OIHW
    cw2 = np.asarray(p["conv2_w"], np.float32)          # (32, 16, 4, 4) OIHW
    fw1 = np.asarray(p["fc1_w"], np.float32)            # (256, 2304)
    fw2 = np.asarray(p["fc2_w"], np.float32)            # (out, 256)

    # conv1 in s2d(4) space: kernel taps (di, dj) in {0,1}^2 over q=(hr, wr, ci).
    w1s = cw1.reshape(C1, C_IN, 2, ST1, 2, ST1).transpose(2, 4, 3, 5, 1, 0)
    w1s = w1s.reshape(2, 2, Q, C1)                       # (di, dj, q, c)
    # Expand so one GEMM row (3x3 patch, features (u, v, q)) produces a 2x2
    # pixel block in the lanes (a, wp, c).
    w1big = np.zeros((3, 3, Q, 2, 2, C1), np.float32)
    for a in range(2):
        for wp in range(2):
            for di in range(2):
                for dj in range(2):
                    w1big[a + di, wp + dj, :, a, wp, :] = w1s[di, dj]
    w1big = w1big.reshape(K1, 4 * C1)
    b1big = np.tile(np.asarray(p["conv1_b"], np.float32), 4).reshape(1, 4 * C1)

    # conv2 becomes a 2x2/stride-1 conv over the (a, wp, c) blocks.  Rows of the
    # packed weight are (dH, W, a, wp, c); columns are (wo2, c2).
    w2big = np.zeros((2, WO1S, 2, 2, C1, WO2, C2), np.float32)
    for dH in range(2):
        for a in range(2):
            for dW in range(2):
                for wp in range(2):
                    blk = cw2[:, :, 2 * dH + a, 2 * dW + wp].T   # (c, c2)
                    for wo2 in range(WO2):
                        w2big[dH, wo2 + dW, a, wp, :, wo2, :] = blk
    w2big = w2big.reshape(K2, WO2 * C2)
    b2big = np.tile(np.asarray(p["conv2_b"], np.float32), WO2).reshape(1, WO2 * C2)

    # fc1 (256, 2304), PyTorch flatten index c2*72 + ho2*8 + wo2 -> rows (ho2, wo2, c2).
    wf1 = fw1.reshape(HIDDEN, C2, HO2, WO2).transpose(2, 3, 1, 0).reshape(K3, HIDDEN)
    bf1 = np.asarray(p["fc1_b"], np.float32).reshape(1, HIDDEN)

    # fc2 (out, 256) -> (256, 128) with zero-padded columns (lane-dense output).
    wf2 = np.zeros((HIDDEN, NOUT_PAD), np.float32)
    wf2[:, :out_size] = fw2.T
    bf2 = np.zeros((1, NOUT_PAD), np.float32)
    bf2[0, :out_size] = np.asarray(p["fc2_b"], np.float32)

    return {
        "w1": jnp.asarray(w1big, jnp.bfloat16), "b1": jnp.asarray(b1big),
        "w2": jnp.asarray(w2big, jnp.bfloat16), "b2": jnp.asarray(b2big),
        "wf1": jnp.asarray(wf1, jnp.bfloat16), "bf1": jnp.asarray(bf1),
        "wf2": jnp.asarray(wf2, jnp.bfloat16), "bf2": jnp.asarray(bf2),
    }


def agent_net_forward(params, x, *, output_size):
    """Forward pass; `params` must come from pack_params().  x is NCHW f32."""
    B = x.shape[0]
    assert B <= PAD1

    # Host-side layout prep on the tiny input (215 KB):
    # NCHW -> space-to-depth(4) channels-last (B, 21, 20, 64), q = hr*16 + wr*4 + c.
    xs = x.reshape(B, C_IN, HS, ST1, WS, ST1).transpose(0, 2, 4, 3, 5, 1)
    xs = xs.reshape(B, HS, WS, Q)
    # 3x3 / stride-2 patches over the s2d grid, features ordered (u, v, q),
    # output grid H in [0,10), W in [0,9); rows ordered (W, H, b) so that the
    # in-kernel conv2 im2col is plain contiguous row slices.
    pieces = [xs[:, u:u + 2 * HO1S - 1:2, v:v + 2 * WO1S - 1:2, :]
              for u in range(3) for v in range(3)]       # each (B, 10, 9, 64)
    p1 = jnp.concatenate(pieces, axis=-1)                 # (B, 10, 9, 576)
    p1 = p1.transpose(2, 1, 0, 3).reshape(WO1S * HO1S * B, K1).astype(jnp.bfloat16)

    m1, m2 = WO1S * HO1S * B, HO1S * B
    flops = 2 * (m1 * K1 * 4 * C1 + m2 * K2 * WO2 * C2
                 + B * K3 * HIDDEN + B * HIDDEN * NOUT_PAD)
    bytes_accessed = (p1.size * p1.dtype.itemsize + B * NOUT_PAD * 4
                      + sum(int(v.size) * v.dtype.itemsize for v in params.values()))

    out = pl.pallas_call(
        _agent_net_kernel,
        out_shape=jax.ShapeDtypeStruct((B, NOUT_PAD), jnp.float32),
        scratch_shapes=[
            pltpu.VMEM((m1 + PAD1, 4 * C1), jnp.bfloat16),   # conv1 output (+pad)
            pltpu.VMEM((m2, WO2 * C2), jnp.bfloat16),        # conv2 output
        ],
        cost_estimate=pl.CostEstimate(flops=flops, transcendentals=0,
                                      bytes_accessed=bytes_accessed),
    )(p1, params["w1"], params["b1"], params["w2"], params["b2"],
      params["wf1"], params["bf1"], params["wf2"], params["bf2"])
    return out[:, :output_size]


def agent_net_reference(raw_params, x):
    """Pure-JAX/XLA reference of the PyTorch forward, for validation."""
    dn = ("NCHW", "OIHW", "NCHW")
    h = lax.conv_general_dilated(x, raw_params["conv1_w"], (ST1, ST1), "VALID",
                                 dimension_numbers=dn)
    h = jax.nn.relu(h + raw_params["conv1_b"][None, :, None, None])
    h = lax.conv_general_dilated(h, raw_params["conv2_w"], (ST2, ST2), "VALID",
                                 dimension_numbers=dn)
    h = jax.nn.relu(h + raw_params["conv2_b"][None, :, None, None])
    h = h.reshape(h.shape[0], -1)                        # NCHW flatten, like torch
    h = jax.nn.relu(h @ raw_params["fc1_w"].T + raw_params["fc1_b"])
    return h @ raw_params["fc2_w"].T + raw_params["fc2_b"]


if __name__ == "__main__":
    key = jax.random.PRNGKey(0)
    k_params, k_x = jax.random.split(key)

    output_size = 6
    raw_params = init_params(k_params, output_size)
    params = pack_params(raw_params)     # one-time weight repack (GEMM layout, bf16)

    # Spatial 84x80 -> conv1 -> 20x19 -> conv2 -> 9x8 -> flatten = 32*9*8 = 2304,
    # as required by the hard-coded Linear(2304, 256).
    x = jax.random.normal(k_x, (2, C_IN, H_IN, W_IN), jnp.float32)

    fwd = jax.jit(functools.partial(agent_net_forward, output_size=output_size))
    out = jax.block_until_ready(fwd(params, x))
    assert out.shape == (2, output_size)

    # Numerical sanity check vs. the pure-JAX reference (bf16 MXU operands ->
    # loose tolerance; accumulation is f32 so errors stay ~1e-2).
    ref = jax.jit(agent_net_reference)(raw_params, x)
    assert jnp.allclose(out, ref, atol=5e-2, rtol=5e-2), \
        float(jnp.max(jnp.abs(out - ref)))

    print("KERNEL_OK")
</pallas_src>

<mosaic_0001>
module attributes {stable_mosaic.version = 11 : i64} {
  func.func @_agent_net_kernel(%arg0: memref<180x576xbf16, #tpu.memory_space<vmem>>, %arg1: memref<576x64xbf16, #tpu.memory_space<vmem>>, %arg2: memref<1x64xf32, #tpu.memory_space<vmem>>, %arg3: memref<1152x256xbf16, #tpu.memory_space<vmem>>, %arg4: memref<1x256xf32, #tpu.memory_space<vmem>>, %arg5: memref<2304x256xbf16, #tpu.memory_space<vmem>>, %arg6: memref<1x256xf32, #tpu.memory_space<vmem>>, %arg7: memref<256x128xbf16, #tpu.memory_space<vmem>>, %arg8: memref<1x128xf32, #tpu.memory_space<vmem>>, %arg9: memref<2x128xf32, #tpu.memory_space<vmem>>, %arg10: memref<188x64xbf16, #tpu.memory_space<vmem>>, %arg11: memref<20x256xbf16, #tpu.memory_space<vmem>>) attributes {dimension_semantics = [], scalar_prefetch = 0 : i64, scratch_operands = 2 : i64, tpu.core_type = #tpu.core_type<tc>} {
    %cst = arith.constant 0.000000e+00 : bf16
    %0 = vector.broadcast %cst : bf16 to vector<8x64xbf16>
    %c180 = arith.constant 180 : index
    %c0 = arith.constant 0 : index
    %1 = vector.load %arg10[%c180, %c0] : memref<188x64xbf16, #tpu.memory_space<vmem>>, vector<8x64xbf16>
    tpu.vector_store %arg10[%c180, %c0], %0 {strides = array<i32>} : memref<188x64xbf16, #tpu.memory_space<vmem>>, vector<8x64xbf16>,
    %c0_0 = arith.constant 0 : index
    %c0_1 = arith.constant 0 : index
    %2 = vector.load %arg0[%c0_0, %c0_1] : memref<180x576xbf16, #tpu.memory_space<vmem>>, vector<180x576xbf16>
    %c0_2 = arith.constant 0 : index
    %c0_3 = arith.constant 0 : index
    %3 = vector.load %arg1[%c0_2, %c0_3] : memref<576x64xbf16, #tpu.memory_space<vmem>>, vector<576x64xbf16>
    %cst_4 = arith.constant dense<0.000000e+00> : vector<180x64xf32>
    %4 = tpu.matmul %2, %3, %cst_4 {dimension_numbers = #tpu.dot_dimension_numbers<[1], [0], [0], [1], [0, 0, 1, 1], [], []>} : vector<180x576xbf16>, vector<576x64xbf16>, vector<180x64xf32> -> vector<180x64xf32>
    %c0_5 = arith.constant 0 : index
    %c0_6 = arith.constant 0 : index
    %5 = vector.load %arg2[%c0_5, %c0_6] : memref<1x64xf32, #tpu.memory_space<vmem>>, vector<1x64xf32>
    %6 = vector.broadcast %5 : vector<1x64xf32> to vector<180x64xf32>
    %7 = arith.addf %4, %6 : vector<180x64xf32>
    %cst_7 = arith.constant 0.000000e+00 : f32
    %8 = vector.broadcast %cst_7 : f32 to vector<180x64xf32>
    %9 = arith.maximumf %7, %8 : vector<180x64xf32>
    %10 = arith.truncf %9 : vector<180x64xf32> to vector<180x64xbf16>
    %c0_8 = arith.constant 0 : index
    %c0_9 = arith.constant 0 : index
    %11 = vector.load %arg10[%c0_8, %c0_9] : memref<188x64xbf16, #tpu.memory_space<vmem>>, vector<180x64xbf16>
    tpu.vector_store %arg10[%c0_8, %c0_9], %10 {strides = array<i32>} : memref<188x64xbf16, #tpu.memory_space<vmem>>, vector<180x64xbf16>,
    %c0_10 = arith.constant 0 : index
    %c0_11 = arith.constant 0 : index
    %12 = vector.load %arg10[%c0_10, %c0_11] : memref<188x64xbf16, #tpu.memory_space<vmem>>, vector<20x64xbf16>
    %c20 = arith.constant 20 : index
    %c0_12 = arith.constant 0 : index
    %13 = vector.load %arg10[%c20, %c0_12] : memref<188x64xbf16, #tpu.memory_space<vmem>>, vector<20x64xbf16>
    %c40 = arith.constant 40 : index
    %c0_13 = arith.constant 0 : index
    %14 = vector.load %arg10[%c40, %c0_13] : memref<188x64xbf16, #tpu.memory_space<vmem>>, vector<20x64xbf16>
    %c60 = arith.constant 60 : index
    %c0_14 = arith.constant 0 : index
    %15 = vector.load %arg10[%c60, %c0_14] : memref<188x64xbf16, #tpu.memory_space<vmem>>, vector<20x64xbf16>
    %c80 = arith.constant 80 : index
    %c0_15 = arith.constant 0 : index
    %16 = vector.load %arg10[%c80, %c0_15] : memref<188x64xbf16, #tpu.memory_space<vmem>>, vector<20x64xbf16>
    %c100 = arith.constant 100 : index
    %c0_16 = arith.constant 0 : index
    %17 = vector.load %arg10[%c100, %c0_16] : memref<188x64xbf16, #tpu.memory_space<vmem>>, vector<20x64xbf16>
    %c120 = arith.constant 120 : index
    %c0_17 = arith.constant 0 : index
    %18 = vector.load %arg10[%c120, %c0_17] : memref<188x64xbf16, #tpu.memory_space<vmem>>, vector<20x64xbf16>
    %c140 = arith.constant 140 : index
    %c0_18 = arith.constant 0 : index
    %19 = vector.load %arg10[%c140, %c0_18] : memref<188x64xbf16, #tpu.memory_space<vmem>>, vector<20x64xbf16>
    %c160 = arith.constant 160 : index
    %c0_19 = arith.constant 0 : index
    %20 = vector.load %arg10[%c160, %c0_19] : memref<188x64xbf16, #tpu.memory_space<vmem>>, vector<20x64xbf16>
    %c2 = arith.constant 2 : index
    %c0_20 = arith.constant 0 : index
    %21 = vector.load %arg10[%c2, %c0_20] : memref<188x64xbf16, #tpu.memory_space<vmem>>, vector<20x64xbf16>
    %c22 = arith.constant 22 : index
    %c0_21 = arith.constant 0 : index
    %22 = vector.load %arg10[%c22, %c0_21] : memref<188x64xbf16, #tpu.memory_space<vmem>>, vector<20x64xbf16>
    %c42 = arith.constant 42 : index
    %c0_22 = arith.constant 0 : index
    %23 = vector.load %arg10[%c42, %c0_22] : memref<188x64xbf16, #tpu.memory_space<vmem>>, vector<20x64xbf16>
    %c62 = arith.constant 62 : index
    %c0_23 = arith.constant 0 : index
    %24 = vector.load %arg10[%c62, %c0_23] : memref<188x64xbf16, #tpu.memory_space<vmem>>, vector<20x64xbf16>
    %c82 = arith.constant 82 : index
    %c0_24 = arith.constant 0 : index
    %25 = vector.load %arg10[%c82, %c0_24] : memref<188x64xbf16, #tpu.memory_space<vmem>>, vector<20x64xbf16>
    %c102 = arith.constant 102 : index
    %c0_25 = arith.constant 0 : index
    %26 = vector.load %arg10[%c102, %c0_25] : memref<188x64xbf16, #tpu.memory_space<vmem>>, vector<20x64xbf16>
    %c122 = arith.constant 122 : index
    %c0_26 = arith.constant 0 : index
    %27 = vector.load %arg10[%c122, %c0_26] : memref<188x64xbf16, #tpu.memory_space<vmem>>, vector<20x64xbf16>
    %c142 = arith.constant 142 : index
    %c0_27 = arith.constant 0 : index
    %28 = vector.load %arg10[%c142, %c0_27] : memref<188x64xbf16, #tpu.memory_space<vmem>>, vector<20x64xbf16>
    %c162 = arith.constant 162 : index
    %c0_28 = arith.constant 0 : index
    %29 = vector.load %arg10[%c162, %c0_28] : memref<188x64xbf16, #tpu.memory_space<vmem>>, vector<20x64xbf16>
    %30 = tpu.concatenate %12, %13, %14, %15, %16, %17, %18, %19, %20, %21, %22, %23, %24, %25, %26, %27 in 1 : vector<20x64xbf16>, vector<20x64xbf16>, vector<20x64xbf16>, vector<20x64xbf16>, vector<20x64xbf16>, vector<20x64xbf16>, vector<20x64xbf16>, vector<20x64xbf16>, vector<20x64xbf16>, vector<20x64xbf16>, vector<20x64xbf16>, vector<20x64xbf16>, vector<20x64xbf16>, vector<20x64xbf16>, vector<20x64xbf16>, vector<20x64xbf16> -> vector<20x1024xbf16>
    %31 = tpu.concatenate %28, %29 in 1 : vector<20x64xbf16>, vector<20x64xbf16> -> vector<20x128xbf16>
    %32 = tpu.concatenate %30, %31 in 1 : vector<20x1024xbf16>, vector<20x128xbf16> -> vector<20x1152xbf16>
    %c0_29 = arith.constant 0 : index
    %c0_30 = arith.constant 0 : index
    %33 = vector.load %arg3[%c0_29, %c0_30] : memref<1152x256xbf16, #tpu.memory_space<vmem>>, vector<1152x256xbf16>
    %cst_31 = arith.constant dense<0.000000e+00> : vector<20x256xf32>
    %34 = tpu.matmul %32, %33, %cst_31 {dimension_numbers = #tpu.dot_dimension_numbers<[1], [0], [0], [1], [0, 0, 1, 1], [], []>} : vector<20x1152xbf16>, vector<1152x256xbf16>, vector<20x256xf32> -> vector<20x256xf32>
    %c0_32 = arith.constant 0 : index
    %c0_33 = arith.constant 0 : index
    %35 = vector.load %arg4[%c0_32, %c0_33] : memref<1x256xf32, #tpu.memory_space<vmem>>, vector<1x256xf32>
    %36 = vector.broadcast %35 : vector<1x256xf32> to vector<20x256xf32>
    %37 = arith.addf %34, %36 : vector<20x256xf32>
    %cst_34 = arith.constant 0.000000e+00 : f32
    %38 = vector.broadcast %cst_34 : f32 to vector<20x256xf32>
    %39 = arith.maximumf %37, %38 : vector<20x256xf32>
    %40 = arith.truncf %39 : vector<20x256xf32> to vector<20x256xbf16>
    %c0_35 = arith.constant 0 : index
    %c0_36 = arith.constant 0 : index
    %41 = vector.load %arg11[%c0_35, %c0_36] : memref<20x256xbf16, #tpu.memory_space<vmem>>, vector<20x256xbf16>
    tpu.vector_store %arg11[%c0_35, %c0_36], %40 {strides = array<i32>} : memref<20x256xbf16, #tpu.memory_space<vmem>>, vector<20x256xbf16>,
    %c0_37 = arith.constant 0 : index
    %c0_38 = arith.constant 0 : index
    %42 = vector.load %arg11[%c0_37, %c0_38] : memref<20x256xbf16, #tpu.memory_space<vmem>>, vector<2x256xbf16>
    %c2_39 = arith.constant 2 : index
    %c0_40 = arith.constant 0 : index
    %43 = vector.load %arg11[%c2_39, %c0_40] : memref<20x256xbf16, #tpu.memory_space<vmem>>, vector<2x256xbf16>
    %c4 = arith.constant 4 : index
    %c0_41 = arith.constant 0 : index
    %44 = vector.load %arg11[%c4, %c0_41] : memref<20x256xbf16, #tpu.memory_space<vmem>>, vector<2x256xbf16>
    %c6 = arith.constant 6 : index
    %c0_42 = arith.constant 0 : index
    %45 = vector.load %arg11[%c6, %c0_42] : memref<20x256xbf16, #tpu.memory_space<vmem>>, vector<2x256xbf16>
    %c8 = arith.constant 8 : index
    %c0_43 = arith.constant 0 : index
    %46 = vector.load %arg11[%c8, %c0_43] : memref<20x256xbf16, #tpu.memory_space<vmem>>, vector<2x256xbf16>
    %c10 = arith.constant 10 : index
    %c0_44 = arith.constant 0 : index
    %47 = vector.load %arg11[%c10, %c0_44] : memref<20x256xbf16, #tpu.memory_space<vmem>>, vector<2x256xbf16>
    %c12 = arith.constant 12 : index
    %c0_45 = arith.constant 0 : index
    %48 = vector.load %arg11[%c12, %c0_45] : memref<20x256xbf16, #tpu.memory_space<vmem>>, vector<2x256xbf16>
    %c14 = arith.constant 14 : index
    %c0_46 = arith.constant 0 : index
    %49 = vector.load %arg11[%c14, %c0_46] : memref<20x256xbf16, #tpu.memory_space<vmem>>, vector<2x256xbf16>
    %c16 = arith.constant 16 : index
    %c0_47 = arith.constant 0 : index
    %50 = vector.load %arg11[%c16, %c0_47] : memref<20x256xbf16, #tpu.memory_space<vmem>>, vector<2x256xbf16>
    %51 = tpu.concatenate %42, %43, %44, %45, %46, %47, %48, %49, %50 in 1 : vector<2x256xbf16>, vector<2x256xbf16>, vector<2x256xbf16>, vector<2x256xbf16>, vector<2x256xbf16>, vector<2x256xbf16>, vector<2x256xbf16>, vector<2x256xbf16>, vector<2x256xbf16> -> vector<2x2304xbf16>
    %c0_48 = arith.constant 0 : index
    %c0_49 = arith.constant 0 : index
    %52 = vector.load %arg5[%c0_48, %c0_49] : memref<2304x256xbf16, #tpu.memory_space<vmem>>, vector<2304x256xbf16>
    %cst_50 = arith.constant dense<0.000000e+00> : vector<2x256xf32>
    %53 = tpu.matmul %51, %52, %cst_50 {dimension_numbers = #tpu.dot_dimension_numbers<[1], [0], [0], [1], [0, 0, 1, 1], [], []>} : vector<2x2304xbf16>, vector<2304x256xbf16>, vector<2x256xf32> -> vector<2x256xf32>
    %c0_51 = arith.constant 0 : index
    %c0_52 = arith.constant 0 : index
    %54 = vector.load %arg6[%c0_51, %c0_52] : memref<1x256xf32, #tpu.memory_space<vmem>>, vector<1x256xf32>
    %55 = vector.broadcast %54 : vector<1x256xf32> to vector<2x256xf32>
    %56 = arith.addf %53, %55 : vector<2x256xf32>
    %cst_53 = arith.constant 0.000000e+00 : f32
    %57 = vector.broadcast %cst_53 : f32 to vector<2x256xf32>
    %58 = arith.maximumf %56, %57 : vector<2x256xf32>
    %59 = arith.truncf %58 : vector<2x256xf32> to vector<2x256xbf16>
    %c0_54 = arith.constant 0 : index
    %c0_55 = arith.constant 0 : index
    %60 = vector.load %arg7[%c0_54, %c0_55] : memref<256x128xbf16, #tpu.memory_space<vmem>>, vector<256x128xbf16>
    %cst_56 = arith.constant dense<0.000000e+00> : vector<2x128xf32>
    %61 = tpu.matmul %59, %60, %cst_56 {dimension_numbers = #tpu.dot_dimension_numbers<[1], [0], [0], [1], [0, 0, 1, 1], [], []>} : vector<2x256xbf16>, vector<256x128xbf16>, vector<2x128xf32> -> vector<2x128xf32>
    %c0_57 = arith.constant 0 : index
    %c0_58 = arith.constant 0 : index
    %62 = vector.load %arg8[%c0_57, %c0_58] : memref<1x128xf32, #tpu.memory_space<vmem>>, vector<1x128xf32>
    %63 = vector.broadcast %62 : vector<1x128xf32> to vector<2x128xf32>
    %64 = arith.addf %61, %63 : vector<2x128xf32>
    %c0_59 = arith.constant 0 : index
    %c0_60 = arith.constant 0 : index
    %65 = vector.load %arg9[%c0_59, %c0_60] : memref<2x128xf32, #tpu.memory_space<vmem>>, vector<2x128xf32>
    tpu.vector_store %arg9[%c0_59, %c0_60], %64 {strides = array<i32>} : memref<2x128xf32, #tpu.memory_space<vmem>>, vector<2x128xf32>,
    return
  }
}

</mosaic_0001>

<llo_original>
// kernel: agent_net_forward.1
$region0: #{agent_net_forward.1}
  #allocation0 [shape = 'u32[]', space=smem, size = 0x4, offset = 0x4, fixed_abs, tag = 'smem constant byte address 0x4 - core index']
  #allocation1 [shape = 'u32[144,128]{1,0:T(1,128)}', space=vmem, size = 0x12000, scoped, tag = 'internal scratch']
  #allocation2 [shape = 'bf16[188,64]{1,0:T(8,128)(2,1)}', space=vmem, size = 0xc000, scoped, tag = 'scratch operand']
  #allocation3 [shape = 'bf16[20,256]{1,0:T(8,128)(2,1)}', space=vmem, size = 0x3000, scoped, tag = 'scratch operand']
  %s0 = inlined_call_operand.vmem [shape: bf16[180,576], index: 0, kind: input, shape index: {}]
  %s1 = inlined_call_operand.vmem [shape: bf16[576,64], index: 1, kind: input, shape index: {}]
  %s2 = inlined_call_operand.vmem [shape: f32[1,64], index: 2, kind: input, shape index: {}]
  %s3 = inlined_call_operand.vmem [shape: bf16[1152,256], index: 3, kind: input, shape index: {}]
  %s4 = inlined_call_operand.vmem [shape: f32[1,256], index: 4, kind: input, shape index: {}]
  %s5 = inlined_call_operand.vmem [shape: bf16[2304,256], index: 5, kind: input, shape index: {}]
  %s6 = inlined_call_operand.vmem [shape: f32[1,256], index: 6, kind: input, shape index: {}]
  %s7 = inlined_call_operand.vmem [shape: bf16[256,128], index: 7, kind: input, shape index: {}]
  %s8 = inlined_call_operand.vmem [shape: f32[1,128], index: 8, kind: input, shape index: {}]
  %s9 = inlined_call_operand.hbm [shape: f32[2,128], index: 9, kind: output, shape index: {}]
  %s10 = sld [smem:[#allocation0]]
  $region46: #{agent_net_forward.1} parent=0
    _
  %s12 = ssub.s32 1, %s10
  %s13 = scalar_select 0, %s12, %s10
  $region1: #{agent_net_forward.1} parent=0
    #allocation4 [shape = 'u8[1024]{0}', space=vmem, size = 0x400, scoped, tag = 'output window, operand 0, single buffered']
    #allocation5 [shape = 's32[1]{0}', space=sflag, size = 0x4, scoped, tag = 'scoped memory for agent_net_forward.1']
    %14 = vsyncpa [#allocation5], 0
    // Predicated region
    $region2: #{agent_net_forward.1} parent=1 // pred_check
      _
    $region3: #{agent_net_forward.1} parent=1 // pred_check_branch
      %16 = sbr.rel (0) target = $region5
    $region4: #{agent_net_forward.1} parent=1 // pred_region
      _
    $region5: #{agent_net_forward.1} parent=1 // pred_fallthru
      _
    // Predicated region
    $region6: #{agent_net_forward.1} parent=1 // pred_check
      _
    $region7: #{agent_net_forward.1} parent=1 // pred_check_branch
      %18 = sbr.rel (0) target = $region9
    $region8: #{agent_net_forward.1} parent=1 // pred_region
      _
    $region9: #{agent_net_forward.1} parent=1 // pred_fallthru
      _
    // Predicated region
    $region10: #{agent_net_forward.1} parent=1 // pred_check
      _
    $region11: #{agent_net_forward.1} parent=1 // pred_check_branch
      %20 = sbr.rel (0) target = $region13
    $region12: #{agent_net_forward.1} parent=1 // pred_region
      _
    $region13: #{agent_net_forward.1} parent=1 // pred_fallthru
      _
    // Predicated region
    $region14: #{agent_net_forward.1} parent=1 // pred_check
      _
    $region15: #{agent_net_forward.1} parent=1 // pred_check_branch
      %22 = sbr.rel (0) target = $region17
    $region16: #{agent_net_forward.1} parent=1 // pred_region
      _
    $region17: #{agent_net_forward.1} parent=1 // pred_fallthru
      _
    // Predicated region
    $region18: #{agent_net_forward.1} parent=1 // pred_check
      _
    $region19: #{agent_net_forward.1} parent=1 // pred_check_branch
      %24 = sbr.rel (0) target = $region21
    $region20: #{agent_net_forward.1} parent=1 // pred_region
      _
    $region21: #{agent_net_forward.1} parent=1 // pred_fallthru
      _
    // Predicated region
    $region22: #{agent_net_forward.1} parent=1 // pred_check
      _
    $region23: #{agent_net_forward.1} parent=1 // pred_check_branch
      %26 = sbr.rel (0) target = $region25
    $region24: #{agent_net_forward.1} parent=1 // pred_region
      _
    $region25: #{agent_net_forward.1} parent=1 // pred_fallthru
      _
    // Predicated region
    $region26: #{agent_net_forward.1} parent=1 // pred_check
      _
    $region27: #{agent_net_forward.1} parent=1 // pred_check_branch
      %28 = sbr.rel (0) target = $region29
    $region28: #{agent_net_forward.1} parent=1 // pred_region
      _
    $region29: #{agent_net_forward.1} parent=1 // pred_fallthru
      _
    // Predicated region
    $region30: #{agent_net_forward.1} parent=1 // pred_check
      _
    $region31: #{agent_net_forward.1} parent=1 // pred_check_branch
      %30 = sbr.rel (0) target = $region33
    $region32: #{agent_net_forward.1} parent=1 // pred_region
      _
    $region33: #{agent_net_forward.1} parent=1 // pred_fallthru
      _
    // Predicated region
    $region34: #{agent_net_forward.1} parent=1 // pred_check
      _
    $region35: #{agent_net_forward.1} parent=1 // pred_check_branch
      %32 = sbr.rel (0) target = $region37
    $region36: #{agent_net_forward.1} parent=1 // pred_region
      _
    $region37: #{agent_net_forward.1} parent=1 // pred_fallthru
      _
    %vm34 = vcmask 519170
    %35 = vst.msk [vmem:[#allocation2 + $0x58] sm:$0xc] %vm34, 0
    %vm36 = vcmask 517120
    %37 = vst.msk [vmem:[#allocation2 + $0x5c] sm:$0x3] %vm36, 0
    %v38 = vld [vmem:[%s0] sm:$0xff]
    %v39 = vld [vmem:[%s0 + $0x8] sm:$0xff]
    %v40 = vld [vmem:[%s0 + $0x10] sm:$0xf]
    %v41 = vld [vmem:[%s0 + $0x14] sm:$0xff]
    %v42 = vld [vmem:[%s0 + $0x1c] sm:$0xff]
    %v43 = vld [vmem:[%s0 + $0x24] sm:$0xf]
    %v44 = vld [vmem:[%s0 + $0x28] sm:$0xff]
    %v45 = vld [vmem:[%s0 + $0x30] sm:$0xff]
    %v46 = vld [vmem:[%s0 + $0x38] sm:$0xf]
    %v47 = vld [vmem:[%s0 + $0x3c] sm:$0xff]
    %v48 = vld [vmem:[%s0 + $0x44] sm:$0xff]
    %v49 = vld [vmem:[%s0 + $0x4c] sm:$0xf]
    %v50 = vld [vmem:[%s0 + $0x50] sm:$0xff]
    %v51 = vld [vmem:[%s0 + $0x58] sm:$0xff]
    %v52 = vld [vmem:[%s0 + $0x60] sm:$0xf]
    %v53 = vld [vmem:[%s0 + $0x64] sm:$0xff]
    %v54 = vld [vmem:[%s0 + $0x6c] sm:$0xff]
    %v55 = vld [vmem:[%s0 + $0x74] sm:$0xf]
    %v56 = vld [vmem:[%s0 + $0x78] sm:$0xff]
    %v57 = vld [vmem:[%s0 + $0x80] sm:$0xff]
    %v58 = vld [vmem:[%s0 + $0x88] sm:$0xf]
    %v59 = vld [vmem:[%s0 + $0x8c] sm:$0xff]
    %v60 = vld [vmem:[%s0 + $0x94] sm:$0xff]
    %v61 = vld [vmem:[%s0 + $0x9c] sm:$0xf]
    %v62 = vld [vmem:[%s0 + $0xa0] sm:$0xff]
    %v63 = vld [vmem:[%s0 + $0xa8] sm:$0xff]
    %v64 = vld [vmem:[%s0 + $0xb0] sm:$0xf]
    %v65 = vld [vmem:[%s0 + $0xb4] sm:$0xff]
    %v66 = vld [vmem:[%s0 + $0xbc] sm:$0xff]
    %v67 = vld [vmem:[%s0 + $0xc4] sm:$0xf]
    %v68 = vld [vmem:[%s0 + $0xc8] sm:$0xff]
    %v69 = vld [vmem:[%s0 + $0xd0] sm:$0xff]
    %v70 = vld [vmem:[%s0 + $0xd8] sm:$0xf]
    %v71 = vld [vmem:[%s0 + $0xdc] sm:$0xff]
    %v72 = vld [vmem:[%s0 + $0xe4] sm:$0xff]
    %v73 = vld [vmem:[%s0 + $0xec] sm:$0xf]
    %v74 = vld [vmem:[%s0 + $0xf0] sm:$0xff]
    %v75 = vld [vmem:[%s0 + $0xf8] sm:$0xff]
    %v76 = vld [vmem:[%s0 + $0x100] sm:$0xf]
    %v77 = vld [vmem:[%s0 + $0x104] sm:$0xff]
    %v78 = vld [vmem:[%s0 + $0x10c] sm:$0xff]
    %v79 = vld [vmem:[%s0 + $0x114] sm:$0xf]
    %v80 = vld [vmem:[%s0 + $0x118] sm:$0xff]
    %v81 = vld [vmem:[%s0 + $0x120] sm:$0xff]
    %v82 = vld [vmem:[%s0 + $0x128] sm:$0xf]
    %v83 = vld [vmem:[%s0 + $0x12c] sm:$0xff]
    %v84 = vld [vmem:[%s0 + $0x134] sm:$0xff]
    %v85 = vld [vmem:[%s0 + $0x13c] sm:$0xf]
    %v86 = vld [vmem:[%s0 + $0x140] sm:$0xff]
    %v87 = vld [vmem:[%s0 + $0x148] sm:$0xff]
    %v88 = vld [vmem:[%s0 + $0x150] sm:$0xf]
    %v89 = vld [vmem:[%s0 + $0x154] sm:$0xff]
    %v90 = vld [vmem:[%s0 + $0x15c] sm:$0xff]
    %v91 = vld [vmem:[%s0 + $0x164] sm:$0xf]
    %v92 = vld [vmem:[%s0 + $0x168] sm:$0xff]
    %v93 = vld [vmem:[%s0 + $0x170] sm:$0xff]
    %v94 = vld [vmem:[%s0 + $0x178] sm:$0xf]
    %v95 = vld [vmem:[%s0 + $0x17c] sm:$0xff]
    %v96 = vld [vmem:[%s0 + $0x184] sm:$0xff]
    %v97 = vld [vmem:[%s0 + $0x18c] sm:$0xf]
    %v98 = vld [vmem:[%s0 + $0x190] sm:$0xff]
    %v99 = vld [vmem:[%s0 + $0x198] sm:$0xff]
    %v100 = vld [vmem:[%s0 + $0x1a0] sm:$0xf]
    %v101 = vld [vmem:[%s0 + $0x1a4] sm:$0xff]
    %v102 = vld [vmem:[%s0 + $0x1ac] sm:$0xff]
    %v103 = vld [vmem:[%s0 + $0x1b4] sm:$0xf]
    %v104 = vld [vmem:[%s0 + $0x1b8] sm:$0x33]
    %v105 = vld [vmem:[%s0 + $0x1c0] sm:$0x33]
    %v106 = vld [vmem:[%s0 + $0x1c8] sm:$0x3]
    %v107 = vld [vmem:[%s1] sm:$0xf]
    %v108 = vld [vmem:[%s1 + $0x4] sm:$0xf]
    %v109 = vld [vmem:[%s1 + $0x8] sm:$0xf]
    %v110 = vld [vmem:[%s1 + $0xc] sm:$0xf]
    %v111 = vld [vmem:[%s1 + $0x10] sm:$0xf]
    %v112 = vld [vmem:[%s1 + $0x14] sm:$0xf]
    %v113 = vld [vmem:[%s1 + $0x18] sm:$0xf]
    %v114 = vld [vmem:[%s1 + $0x1c] sm:$0xf]
    %v115 = vld [vmem:[%s1 + $0x20] sm:$0xf]
    %v116 = vld [vmem:[%s1 + $0x24] sm:$0xf]
    %v117 = vld [vmem:[%s1 + $0x28] sm:$0xf]
    %v118 = vld [vmem:[%s1 + $0x2c] sm:$0xf]
    %v119 = vld [vmem:[%s1 + $0x30] sm:$0xf]
    %v120 = vld [vmem:[%s1 + $0x34] sm:$0xf]
    %v121 = vld [vmem:[%s1 + $0x38] sm:$0xf]
    %v122 = vld [vmem:[%s1 + $0x3c] sm:$0xf]
    %v123 = vld [vmem:[%s1 + $0x40] sm:$0xf]
    %v124 = vld [vmem:[%s1 + $0x44] sm:$0xf]
    %v125 = vld [vmem:[%s1 + $0x48] sm:$0xf]
    %v126 = vld [vmem:[%s1 + $0x4c] sm:$0xf]
    %v127 = vld [vmem:[%s1 + $0x50] sm:$0xf]
    %v128 = vld [vmem:[%s1 + $0x54] sm:$0xf]
    %v129 = vld [vmem:[%s1 + $0x58] sm:$0xf]
    %v130 = vld [vmem:[%s1 + $0x5c] sm:$0xf]
    %v131 = vld [vmem:[%s1 + $0x60] sm:$0xf]
    %v132 = vld [vmem:[%s1 + $0x64] sm:$0xf]
    %v133 = vld [vmem:[%s1 + $0x68] sm:$0xf]
    %v134 = vld [vmem:[%s1 + $0x6c] sm:$0xf]
    %v135 = vld [vmem:[%s1 + $0x70] sm:$0xf]
    %v136 = vld [vmem:[%s1 + $0x74] sm:$0xf]
    %v137 = vld [vmem:[%s1 + $0x78] sm:$0xf]
    %v138 = vld [vmem:[%s1 + $0x7c] sm:$0xf]
    %v139 = vld [vmem:[%s1 + $0x80] sm:$0xf]
    %v140 = vld [vmem:[%s1 + $0x84] sm:$0xf]
    %v141 = vld [vmem:[%s1 + $0x88] sm:$0xf]
    %v142 = vld [vmem:[%s1 + $0x8c] sm:$0xf]
    %v143 = vld [vmem:[%s1 + $0x90] sm:$0xf]
    %v144 = vld [vmem:[%s1 + $0x94] sm:$0xf]
    %v145 = vld [vmem:[%s1 + $0x98] sm:$0xf]
    %v146 = vld [vmem:[%s1 + $0x9c] sm:$0xf]
    %v147 = vld [vmem:[%s1 + $0xa0] sm:$0xf]
    %v148 = vld [vmem:[%s1 + $0xa4] sm:$0xf]
    %v149 = vld [vmem:[%s1 + $0xa8] sm:$0xf]
    %v150 = vld [vmem:[%s1 + $0xac] sm:$0xf]
    %v151 = vld [vmem:[%s1 + $0xb0] sm:$0xf]
    %v152 = vld [vmem:[%s1 + $0xb4] sm:$0xf]
    %v153 = vld [vmem:[%s1 + $0xb8] sm:$0xf]
    %v154 = vld [vmem:[%s1 + $0xbc] sm:$0xf]
    %v155 = vld [vmem:[%s1 + $0xc0] sm:$0xf]
    %v156 = vld [vmem:[%s1 + $0xc4] sm:$0xf]
    %v157 = vld [vmem:[%s1 + $0xc8] sm:$0xf]
    %v158 = vld [vmem:[%s1 + $0xcc] sm:$0xf]
    %v159 = vld [vmem:[%s1 + $0xd0] sm:$0xf]
    %v160 = vld [vmem:[%s1 + $0xd4] sm:$0xf]
    %v161 = vld [vmem:[%s1 + $0xd8] sm:$0xf]
    %v162 = vld [vmem:[%s1 + $0xdc] sm:$0xf]
    %v163 = vld [vmem:[%s1 + $0xe0] sm:$0xf]
    %v164 = vld [vmem:[%s1 + $0xe4] sm:$0xf]
    %v165 = vld [vmem:[%s1 + $0xe8] sm:$0xf]
    %v166 = vld [vmem:[%s1 + $0xec] sm:$0xf]
    %v167 = vld [vmem:[%s1 + $0xf0] sm:$0xf]
    %v168 = vld [vmem:[%s1 + $0xf4] sm:$0xf]
    %v169 = vld [vmem:[%s1 + $0xf8] sm:$0xf]
    %v170 = vld [vmem:[%s1 + $0xfc] sm:$0xf]
    %v171 = vld [vmem:[%s1 + $0x100] sm:$0xf]
    %v172 = vld [vmem:[%s1 + $0x104] sm:$0xf]
    %v173 = vld [vmem:[%s1 + $0x108] sm:$0xf]
    %v174 = vld [vmem:[%s1 + $0x10c] sm:$0xf]
    %v175 = vld [vmem:[%s1 + $0x110] sm:$0xf]
    %v176 = vld [vmem:[%s1 + $0x114] sm:$0xf]
    %v177 = vld [vmem:[%s1 + $0x118] sm:$0xf]
    %v178 = vld [vmem:[%s1 + $0x11c] sm:$0xf]
    %v179 = vld [vmem:[%s2] sm:$0x1]
    %v181 = vlaneseq
    %v182 = vshrl.u32 %v181, 7
    %v183 = vsub.s32 0, %v182
    %v184 = vrot.slane %v179, %v183
    %v255 = vunpack.c.l.b16 %v38
    %v256 = vunpack.c.h.b16 %v38
    %v257 = vunpack.c.l.b16 %v39
    %v258 = vunpack.c.h.b16 %v39
    %v259 = vunpack.c.l.b16 %v40
    %v260 = vunpack.c.l.b16 %v41
    %v261 = vunpack.c.h.b16 %v41
    %v262 = vunpack.c.l.b16 %v42
    %v263 = vunpack.c.h.b16 %v42
    %v264 = vunpack.c.l.b16 %v43
    %v265 = vunpack.c.l.b16 %v44
    %v266 = vunpack.c.h.b16 %v44
    %v267 = vunpack.c.l.b16 %v45
    %v268 = vunpack.c.h.b16 %v45
    %v269 = vunpack.c.l.b16 %v46
    %v270 = vunpack.c.l.b16 %v47
    %v271 = vunpack.c.h.b16 %v47
    %v272 = vunpack.c.l.b16 %v48
    %v273 = vunpack.c.h.b16 %v48
    %v274 = vunpack.c.l.b16 %v49
    %v275 = vunpack.c.l.b16 %v50
    %v276 = vunpack.c.h.b16 %v50
    %v277 = vunpack.c.l.b16 %v51
    %v278 = vunpack.c.h.b16 %v51
    %v279 = vunpack.c.l.b16 %v52
    %v280 = vunpack.c.l.b16 %v53
    %v281 = vunpack.c.h.b16 %v53
    %v282 = vunpack.c.l.b16 %v54
    %v283 = vunpack.c.h.b16 %v54
    %v284 = vunpack.c.l.b16 %v55
    %v285 = vunpack.c.l.b16 %v56
    %v286 = vunpack.c.h.b16 %v56
    %v287 = vunpack.c.l.b16 %v57
    %v288 = vunpack.c.h.b16 %v57
    %v289 = vunpack.c.l.b16 %v58
    %v290 = vunpack.c.l.b16 %v59
    %v291 = vunpack.c.h.b16 %v59
    %v292 = vunpack.c.l.b16 %v60
    %v293 = vunpack.c.h.b16 %v60
    %v294 = vunpack.c.l.b16 %v61
    %v295 = vunpack.c.l.b16 %v62
    %v296 = vunpack.c.h.b16 %v62
    %v297 = vunpack.c.l.b16 %v63
    %v298 = vunpack.c.h.b16 %v63
    %v299 = vunpack.c.l.b16 %v64
    %v300 = vunpack.c.l.b16 %v65
    %v301 = vunpack.c.h.b16 %v65
    %v302 = vunpack.c.l.b16 %v66
    %v303 = vunpack.c.h.b16 %v66
    %v304 = vunpack.c.l.b16 %v67
    %v305 = vunpack.c.l.b16 %v68
    %v306 = vunpack.c.h.b16 %v68
    %v307 = vunpack.c.l.b16 %v69
    %v308 = vunpack.c.h.b16 %v69
    %v309 = vunpack.c.l.b16 %v70
    %v310 = vunpack.c.l.b16 %v71
    %v311 = vunpack.c.h.b16 %v71
    %v312 = vunpack.c.l.b16 %v72
    %v313 = vunpack.c.h.b16 %v72
    %v314 = vunpack.c.l.b16 %v73
    %v315 = vunpack.c.l.b16 %v74
    %v316 = vunpack.c.h.b16 %v74
    %v317 = vunpack.c.l.b16 %v75
    %v318 = vunpack.c.h.b16 %v75
    %v319 = vunpack.c.l.b16 %v76
    %v320 = vunpack.c.l.b16 %v77
    %v321 = vunpack.c.h.b16 %v77
    %v322 = vunpack.c.l.b16 %v78
    %v323 = vunpack.c.h.b16 %v78
    %v324 = vunpack.c.l.b16 %v79
    %v325 = vunpack.c.l.b16 %v80
    %v326 = vunpack.c.h.b16 %v80
    %v327 = vunpack.c.l.b16 %v81
    %v328 = vunpack.c.h.b16 %v81
    %v329 = vunpack.c.l.b16 %v82
    %v330 = vunpack.c.l.b16 %v83
    %v331 = vunpack.c.h.b16 %v83
    %v332 = vunpack.c.l.b16 %v84
    %v333 = vunpack.c.h.b16 %v84
    %v334 = vunpack.c.l.b16 %v85
    %v335 = vunpack.c.l.b16 %v86
    %v336 = vunpack.c.h.b16 %v86
    %v337 = vunpack.c.l.b16 %v87
    %v338 = vunpack.c.h.b16 %v87
    %v339 = vunpack.c.l.b16 %v88
    %v340 = vunpack.c.l.b16 %v89
    %v341 = vunpack.c.h.b16 %v89
    %v342 = vunpack.c.l.b16 %v90
    %v343 = vunpack.c.h.b16 %v90
    %v344 = vunpack.c.l.b16 %v91
    %v345 = vunpack.c.l.b16 %v92
    %v346 = vunpack.c.h.b16 %v92
    %v347 = vunpack.c.l.b16 %v93
    %v348 = vunpack.c.h.b16 %v93
    %v349 = vunpack.c.l.b16 %v94
    %v350 = vunpack.c.l.b16 %v95
    %v351 = vunpack.c.h.b16 %v95
    %v352 = vunpack.c.l.b16 %v96
    %v353 = vunpack.c.h.b16 %v96
    %v354 = vunpack.c.l.b16 %v97
    %v355 = vunpack.c.l.b16 %v98
    %v356 = vunpack.c.h.b16 %v98
    %v357 = vunpack.c.l.b16 %v99
    %v358 = vunpack.c.h.b16 %v99
    %v359 = vunpack.c.l.b16 %v100
    %v360 = vunpack.c.l.b16 %v101
    %v361 = vunpack.c.h.b16 %v101
    %v362 = vunpack.c.l.b16 %v102
    %v363 = vunpack.c.h.b16 %v102
    %v364 = vunpack.c.l.b16 %v103
    %v365 = vunpack.c.l.b16 %v104
    %v366 = vunpack.c.h.b16 %v104
    %v367 = vunpack.c.l.b16 %v105
    %v368 = vunpack.c.h.b16 %v105
    %v369 = vunpack.c.l.b16 %v106
    %v370 = vpack.c.b16 %v260, %v255
    %v371 = vpack.c.b16 %v261, %v256
    %v372 = vpack.c.b16 %v262, %v257
    %v373 = vpack.c.b16 %v263, %v258
    %v374 = vpack.c.b16 %v264, %v259
    %v375 = vpack.c.b16 %v270, %v265
    %v376 = vpack.c.b16 %v271, %v266
    %v377 = vpack.c.b16 %v272, %v267
    %v378 = vpack.c.b16 %v273, %v268
    %v379 = vpack.c.b16 %v274, %v269
    %v380 = vpack.c.b16 %v280, %v275
    %v381 = vpack.c.b16 %v281, %v276
    %v382 = vpack.c.b16 %v282, %v277
    %v383 = vpack.c.b16 %v283, %v278
    %v384 = vpack.c.b16 %v284, %v279
    %v385 = vpack.c.b16 %v290, %v285
    %v386 = vpack.c.b16 %v291, %v286
    %v387 = vpack.c.b16 %v292, %v287
    %v388 = vpack.c.b16 %v293, %v288
    %v389 = vpack.c.b16 %v294, %v289
    %v390 = vpack.c.b16 %v300, %v295
    %v391 = vpack.c.b16 %v301, %v296
    %v392 = vpack.c.b16 %v302, %v297
    %v393 = vpack.c.b16 %v303, %v298
    %v394 = vpack.c.b16 %v304, %v299
    %v395 = vpack.c.b16 %v310, %v305
    %v396 = vpack.c.b16 %v311, %v306
    %v397 = vpack.c.b16 %v312, %v307
    %v398 = vpack.c.b16 %v313, %v308
    %v399 = vpack.c.b16 %v314, %v309
    %v400 = vpack.c.b16 %v320, %v315
    %v401 = vpack.c.b16 %v321, %v316
    %v402 = vpack.c.b16 %v322, %v317
    %v403 = vpack.c.b16 %v323, %v318
    %v404 = vpack.c.b16 %v324, %v319
    %v405 = vpack.c.b16 %v330, %v325
    %v406 = vpack.c.b16 %v331, %v326
    %v407 = vpack.c.b16 %v332, %v327
    %v408 = vpack.c.b16 %v333, %v328
    %v409 = vpack.c.b16 %v334, %v329
    %v410 = vpack.c.b16 %v340, %v335
    %v411 = vpack.c.b16 %v341, %v336
    %v412 = vpack.c.b16 %v342, %v337
    %v413 = vpack.c.b16 %v343, %v338
    %v414 = vpack.c.b16 %v344, %v339
    %v415 = vpack.c.b16 %v350, %v345
    %v416 = vpack.c.b16 %v351, %v346
    %v417 = vpack.c.b16 %v352, %v347
    %v418 = vpack.c.b16 %v353, %v348
    %v419 = vpack.c.b16 %v354, %v349
    %v420 = vpack.c.b16 %v360, %v355
    %v421 = vpack.c.b16 %v361, %v356
    %v422 = vpack.c.b16 %v362, %v357
    %v423 = vpack.c.b16 %v363, %v358
    %v424 = vpack.c.b16 %v364, %v359
    %v425 = vpack.c.b16 %v365, %v365
    %v426 = vpack.c.b16 %v366, %v366
    %v427 = vpack.c.b16 %v367, %v367
    %v428 = vpack.c.b16 %v368, %v368
    %v429 = vpack.c.b16 %v369, %v369
    %v550 = vunpack.c.l.b16 %v107
    %v551 = vunpack.c.l.b16 %v108
    %v552 = vunpack.c.l.b16 %v109
    %v553 = vunpack.c.l.b16 %v110
    %v554 = vunpack.c.l.b16 %v111
    %v555 = vunpack.c.l.b16 %v112
    %v556 = vunpack.c.l.b16 %v113
    %v557 = vunpack.c.l.b16 %v114
    %v558 = vunpack.c.l.b16 %v115
    %v559 = vunpack.c.l.b16 %v116
    %v560 = vunpack.c.l.b16 %v117
    %v561 = vunpack.c.l.b16 %v118
    %v562 = vunpack.c.l.b16 %v119
    %v563 = vunpack.c.l.b16 %v120
    %v564 = vunpack.c.l.b16 %v121
    %v565 = vunpack.c.l.b16 %v122
    %v566 = vunpack.c.l.b16 %v123
    %v567 = vunpack.c.l.b16 %v124
    %v568 = vunpack.c.l.b16 %v125
    %v569 = vunpack.c.l.b16 %v126
    %v570 = vunpack.c.l.b16 %v127
    %v571 = vunpack.c.l.b16 %v128
    %v572 = vunpack.c.l.b16 %v129
    %v573 = vunpack.c.l.b16 %v130
    %v574 = vunpack.c.l.b16 %v131
    %v575 = vunpack.c.l.b16 %v132
    %v576 = vunpack.c.l.b16 %v133
    %v577 = vunpack.c.l.b16 %v134
    %v578 = vunpack.c.l.b16 %v135
    %v579 = vunpack.c.l.b16 %v136
    %v580 = vunpack.c.l.b16 %v137
    %v581 = vunpack.c.l.b16 %v138
    %v582 = vunpack.c.l.b16 %v139
    %v583 = vunpack.c.l.b16 %v140
    %v584 = vunpack.c.l.b16 %v141
    %v585 = vunpack.c.l.b16 %v142
    %v586 = vunpack.c.l.b16 %v143
    %v587 = vunpack.c.l.b16 %v144
    %v588 = vunpack.c.l.b16 %v145
    %v589 = vunpack.c.l.b16 %v146
    %v590 = vunpack.c.l.b16 %v147
    %v591 = vunpack.c.l.b16 %v148
    %v592 = vunpack.c.l.b16 %v149
    %v593 = vunpack.c.l.b16 %v150
    %v594 = vunpack.c.l.b16 %v151
    %v595 = vunpack.c.l.b16 %v152
    %v596 = vunpack.c.l.b16 %v153
    %v597 = vunpack.c.l.b16 %v154
    %v598 = vunpack.c.l.b16 %v155
    %v599 = vunpack.c.l.b16 %v156
    %v600 = vunpack.c.l.b16 %v157
    %v601 = vunpack.c.l.b16 %v158
    %v602 = vunpack.c.l.b16 %v159
    %v603 = vunpack.c.l.b16 %v160
    %v604 = vunpack.c.l.b16 %v161
    %v605 = vunpack.c.l.b16 %v162
    %v606 = vunpack.c.l.b16 %v163
    %v607 = vunpack.c.l.b16 %v164
    %v608 = vunpack.c.l.b16 %v165
    %v609 = vunpack.c.l.b16 %v166
    %v610 = vunpack.c.l.b16 %v167
    %v611 = vunpack.c.l.b16 %v168
    %v612 = vunpack.c.l.b16 %v169
    %v613 = vunpack.c.l.b16 %v170
    %v614 = vunpack.c.l.b16 %v171
    %v615 = vunpack.c.l.b16 %v172
    %v616 = vunpack.c.l.b16 %v173
    %v617 = vunpack.c.l.b16 %v174
    %v618 = vunpack.c.l.b16 %v175
    %v619 = vunpack.c.l.b16 %v176
    %v620 = vunpack.c.l.b16 %v177
    %v621 = vunpack.c.l.b16 %v178
    %v622 = vpack.c.b16 %v551, %v550
    %v623 = vpack.c.b16 %v553, %v552
    %v624 = vpack.c.b16 %v555, %v554
    %v625 = vpack.c.b16 %v557, %v556
    %v626 = vpack.c.b16 %v559, %v558
    %v627 = vpack.c.b16 %v561, %v560
    %v628 = vpack.c.b16 %v563, %v562
    %v629 = vpack.c.b16 %v565, %v564
    %v630 = vpack.c.b16 %v567, %v566
    %v631 = vpack.c.b16 %v569, %v568
    %v632 = vpack.c.b16 %v571, %v570
    %v633 = vpack.c.b16 %v573, %v572
    %v634 = vpack.c.b16 %v575, %v574
    %v635 = vpack.c.b16 %v577, %v576
    %v636 = vpack.c.b16 %v579, %v578
    %v637 = vpack.c.b16 %v581, %v580
    %v638 = vpack.c.b16 %v583, %v582
    %v639 = vpack.c.b16 %v585, %v584
    %v640 = vpack.c.b16 %v587, %v586
    %v641 = vpack.c.b16 %v589, %v588
    %v642 = vpack.c.b16 %v591, %v590
    %v643 = vpack.c.b16 %v593, %v592
    %v644 = vpack.c.b16 %v595, %v594
    %v645 = vpack.c.b16 %v597, %v596
    %v646 = vpack.c.b16 %v599, %v598
    %v647 = vpack.c.b16 %v601, %v600
    %v648 = vpack.c.b16 %v603, %v602
    %v649 = vpack.c.b16 %v605, %v604
    %v650 = vpack.c.b16 %v607, %v606
    %v651 = vpack.c.b16 %v609, %v608
    %v652 = vpack.c.b16 %v611, %v610
    %v653 = vpack.c.b16 %v613, %v612
    %v654 = vpack.c.b16 %v615, %v614
    %v655 = vpack.c.b16 %v617, %v616
    %v656 = vpack.c.b16 %v619, %v618
    %v657 = vpack.c.b16 %v621, %v620
    %vm694 = vcmask 523264
    %v696 = vsel %vm694, %v374, 0
    %v699 = vsel %vm694, %v379, 0
    %v702 = vsel %vm694, %v384, 0
    %v705 = vsel %vm694, %v389, 0
    %v708 = vsel %vm694, %v394, 0
    %v711 = vsel %vm694, %v399, 0
    %v714 = vsel %vm694, %v404, 0
    %v717 = vsel %vm694, %v409, 0
    %v720 = vsel %vm694, %v414, 0
    %v723 = vsel %vm694, %v419, 0
    %v726 = vsel %vm694, %v424, 0
    %v729 = vsel %vm694, %v429, 0
    %731 = vmatprep.subr.bf16.mxu0 0
    %732 = vmatpush1.bf16.msra.mxu0 %v622
    %733 = vmatprep.subr.bf16.mxu0 0
    %734 = vmatpush1.bf16.msra.mxu0 %v623
    %735 = vmatprep.subr.bf16.mxu0 0
    %736 = vmatpush1.bf16.msra.mxu0 %v624
    %737 = vmatprep.subr.bf16.mxu0 0
    %738 = vmatpush1.bf16.msra.mxu0 %v625
    %739 = vmatprep.subr.bf16.mxu0 0
    %740 = vmatpush1.bf16.msra.mxu0 %v626
    %741 = vmatprep.subr.bf16.mxu0 0
    %742 = vmatpush1.bf16.msra.mxu0 %v627
    %743 = vmatprep.subr.bf16.mxu0 0
    %744 = vmatpush1.bf16.msra.mxu0 %v628
    %745 = vmatprep.subr.bf16.mxu0 0
    %746 = vmatpush1.bf16.msra.mxu0 %v629
    %747 = vmatprep.subr.bf16.mxu0 0
    %748 = vmatpush1.bf16.msra.mxu0 %v630
    %749 = vmatprep.subr.bf16.mxu0 0
    %750 = vmatpush1.bf16.msra.mxu0 %v631
    %751 = vmatprep.subr.bf16.mxu0 0
    %752 = vmatpush1.bf16.msra.mxu0 %v632
    %753 = vmatprep.subr.bf16.mxu0 0
    %754 = vmatpush1.bf16.msra.mxu0 %v633
    %755 = vmatprep.subr.bf16.mxu0 0
    %756 = vmatpush1.bf16.msra.mxu0 %v634
    %757 = vmatprep.subr.bf16.mxu0 0
    %758 = vmatpush1.bf16.msra.mxu0 %v635
    %759 = vmatprep.subr.bf16.mxu0 0
    %760 = vmatpush1.bf16.msra.mxu0 %v636
    %761 = vmatprep.subr.bf16.mxu0 0
    %762 = vmatpush1.bf16.msra.mxu0 %v637
    %763 = vmatprep.mubr.bf16.mxu0 %v371
    %764 = vmatmul.mubr.bf16.gmra.mrb[0].mxu0 %v370
    %v765 = vpop.f32.mrb[0].mxu0
    %v766 = vadd.f32 %v184, %v765
    %v767 = vpop.f32.mrb[0].mxu0
    %v768 = vpop.f32.mrb[0].mxu0
    %v769 = vadd.f32 %v184, %v768
    %v770 = vpop.f32.mrb[0].mxu0
    %771 = vmatprep.mubr.bf16.mxu0 %v376
    %772 = vmatmul.mubr.bf16.gmra.mrb[0].mxu0 %v375
    %v773 = vpop.f32.mrb[0].mxu0
    %v774 = vadd.f32 %v184, %v773
    %v775 = vpop.f32.mrb[0].mxu0
    %v776 = vpop.f32.mrb[0].mxu0
    %v777 = vadd.f32 %v184, %v776
    %v778 = vpop.f32.mrb[0].mxu0
    %779 = vmatprep.mubr.bf16.mxu0 %v381
    %780 = vmatmul.mubr.bf16.gmra.mrb[0].mxu0 %v380
    %v781 = vpop.f32.mrb[0].mxu0
    %v782 = vadd.f32 %v184, %v781
    %v783 = vpop.f32.mrb[0].mxu0
    %v784 = vpop.f32.mrb[0].mxu0
    %v785 = vadd.f32 %v184, %v784
    %v786 = vpop.f32.mrb[0].mxu0
    %787 = vmatprep.mubr.bf16.mxu0 %v386
    %788 = vmatmul.mubr.bf16.gmra.mrb[0].mxu0 %v385
    %v789 = vpop.f32.mrb[0].mxu0
    %v790 = vadd.f32 %v184, %v789
    %v791 = vpop.f32.mrb[0].mxu0
    %v792 = vpop.f32.mrb[0].mxu0
    %v793 = vadd.f32 %v184, %v792
    %v794 = vpop.f32.mrb[0].mxu0
    %795 = vmatprep.mubr.bf16.mxu0 %v391
    %796 = vmatmul.mubr.bf16.gmra.mrb[0].mxu0 %v390
    %v797 = vpop.f32.mrb[0].mxu0
    %v798 = vadd.f32 %v184, %v797
    %v799 = vpop.f32.mrb[0].mxu0
    %v800 = vpop.f32.mrb[0].mxu0
    %v801 = vadd.f32 %v184, %v800
    %v802 = vpop.f32.mrb[0].mxu0
    %803 = vmatprep.mubr.bf16.mxu0 %v396
    %804 = vmatmul.mubr.bf16.gmra.mrb[0].mxu0 %v395
    %v805 = vpop.f32.mrb[0].mxu0
    %v806 = vadd.f32 %v184, %v805
    %v807 = vpop.f32.mrb[0].mxu0
    %v808 = vpop.f32.mrb[0].mxu0
    %v809 = vadd.f32 %v184, %v808
    %v810 = vpop.f32.mrb[0].mxu0
    %811 = vmatprep.mubr.bf16.mxu0 %v401
    %812 = vmatmul.mubr.bf16.gmra.mrb[0].mxu0 %v400
    %v813 = vpop.f32.mrb[0].mxu0
    %v814 = vadd.f32 %v184, %v813
    %v815 = vpop.f32.mrb[0].mxu0
    %v816 = vpop.f32.mrb[0].mxu0
    %v817 = vadd.f32 %v184, %v816
    %v818 = vpop.f32.mrb[0].mxu0
    %819 = vmatprep.mubr.bf16.mxu0 %v406
    %820 = vmatmul.mubr.bf16.gmra.mrb[0].mxu0 %v405
    %v821 = vpop.f32.mrb[0].mxu0
    %v822 = vadd.f32 %v184, %v821
    %v823 = vpop.f32.mrb[0].mxu0
    %v824 = vpop.f32.mrb[0].mxu0
    %v825 = vadd.f32 %v184, %v824
    %v826 = vpop.f32.mrb[0].mxu0
    %827 = vmatprep.mubr.bf16.mxu0 %v411
    %828 = vmatmul.mubr.bf16.gmra.mrb[0].mxu0 %v410
    %v829 = vpop.f32.mrb[0].mxu0
    %v830 = vadd.f32 %v184, %v829
    %v831 = vpop.f32.mrb[0].mxu0
    %v832 = vpop.f32.mrb[0].mxu0
    %v833 = vadd.f32 %v184, %v832
    %v834 = vpop.f32.mrb[0].mxu0
    %835 = vmatprep.mubr.bf16.mxu0 %v416
    %836 = vmatmul.mubr.bf16.gmra.mrb[0].mxu0 %v415
    %v837 = vpop.f32.mrb[0].mxu0
    %v838 = vadd.f32 %v184, %v837
    %v839 = vpop.f32.mrb[0].mxu0
    %v840 = vpop.f32.mrb[0].mxu0
    %v841 = vadd.f32 %v184, %v840
    %v842 = vpop.f32.mrb[0].mxu0
    %843 = vmatprep.mubr.bf16.mxu0 %v421
    %844 = vmatmul.mubr.bf16.gmra.mrb[0].mxu0 %v420
    %v845 = vpop.f32.mrb[0].mxu0
    %v846 = vadd.f32 %v184, %v845
    %v847 = vpop.f32.mrb[0].mxu0
    %v848 = vpop.f32.mrb[0].mxu0
    %v849 = vadd.f32 %v184, %v848
    %v850 = vpop.f32.mrb[0].mxu0
    %851 = vmatprep.mubr.bf16.mxu0 %v426
    %852 = vmatmul.mubr.bf16.gmra.mrb[0].mxu0 %v425
    %v853 = vpop.f32.mrb[0].mxu0
    %v854 = vadd.f32 %v184, %v853
    %v855 = vpop.f32.mrb[0].mxu0
    %v856 = vpop.f32.mrb[0].mxu0
    %v857 = vpop.f32.mrb[0].mxu0
    %858 = vdwg.mxu0
    %859 = vmatprep.subr.bf16.mxu0 0
    %860 = vmatpush1.bf16.msra.mxu0 %v638
    %861 = vmatprep.subr.bf16.mxu0 0
    %862 = vmatpush1.bf16.msra.mxu0 %v639
    %863 = vmatprep.subr.bf16.mxu0 0
    %864 = vmatpush1.bf16.msra.mxu0 %v640
    %865 = vmatprep.subr.bf16.mxu0 0
    %866 = vmatpush1.bf16.msra.mxu0 %v641
    %867 = vmatprep.subr.bf16.mxu0 0
    %868 = vmatpush1.bf16.msra.mxu0 %v642
    %869 = vmatprep.subr.bf16.mxu0 0
    %870 = vmatpush1.bf16.msra.mxu0 %v643
    %871 = vmatprep.subr.bf16.mxu0 0
    %872 = vmatpush1.bf16.msra.mxu0 %v644
    %873 = vmatprep.subr.bf16.mxu0 0
    %874 = vmatpush1.bf16.msra.mxu0 %v645
    %875 = vmatprep.subr.bf16.mxu0 0
    %876 = vmatpush1.bf16.msra.mxu0 %v646
    %877 = vmatprep.subr.bf16.mxu0 0
    %878 = vmatpush1.bf16.msra.mxu0 %v647
    %879 = vmatprep.subr.bf16.mxu0 0
    %880 = vmatpush1.bf16.msra.mxu0 %v648
    %881 = vmatprep.subr.bf16.mxu0 0
    %882 = vmatpush1.bf16.msra.mxu0 %v649
    %883 = vmatprep.subr.bf16.mxu0 0
    %884 = vmatpush1.bf16.msra.mxu0 %v650
    %885 = vmatprep.subr.bf16.mxu0 0
    %886 = vmatpush1.bf16.msra.mxu0 %v651
    %887 = vmatprep.subr.bf16.mxu0 0
    %888 = vmatpush1.bf16.msra.mxu0 %v652
    %889 = vmatprep.subr.bf16.mxu0 0
    %890 = vmatpush1.bf16.msra.mxu0 %v653
    %891 = vmatprep.mubr.bf16.mxu0 %v373
    %892 = vmatmul.mubr.bf16.gmra.mrb[0].mxu0 %v372
    %v893 = vpop.f32.mrb[0].mxu0
    %v894 = vadd.f32 %v766, %v893
    %v895 = vpop.f32.mrb[0].mxu0
    %v896 = vpop.f32.mrb[0].mxu0
    %v897 = vadd.f32 %v769, %v896
    %v898 = vpop.f32.mrb[0].mxu0
    %899 = vmatprep.mubr.bf16.mxu0 %v378
    %900 = vmatmul.mubr.bf16.gmra.mrb[0].mxu0 %v377
    %v901 = vpop.f32.mrb[0].mxu0
    %v902 = vadd.f32 %v774, %v901
    %v903 = vpop.f32.mrb[0].mxu0
    %v904 = vpop.f32.mrb[0].mxu0
    %v905 = vadd.f32 %v777, %v904
    %v906 = vpop.f32.mrb[0].mxu0
    %907 = vmatprep.mubr.bf16.mxu0 %v383
    %908 = vmatmul.mubr.bf16.gmra.mrb[0].mxu0 %v382
    %v909 = vpop.f32.mrb[0].mxu0
    %v910 = vadd.f32 %v782, %v909
    %v911 = vpop.f32.mrb[0].mxu0
    %v912 = vpop.f32.mrb[0].mxu0
    %v913 = vadd.f32 %v785, %v912
    %v914 = vpop.f32.mrb[0].mxu0
    %915 = vmatprep.mubr.bf16.mxu0 %v388
    %916 = vmatmul.mubr.bf16.gmra.mrb[0].mxu0 %v387
    %v917 = vpop.f32.mrb[0].mxu0
    %v918 = vadd.f32 %v790, %v917
    %v919 = vpop.f32.mrb[0].mxu0
    %v920 = vpop.f32.mrb[0].mxu0
    %v921 = vadd.f32 %v793, %v920
    %v922 = vpop.f32.mrb[0].mxu0
    %923 = vmatprep.mubr.bf16.mxu0 %v393
    %924 = vmatmul.mubr.bf16.gmra.mrb[0].mxu0 %v392
    %v925 = vpop.f32.mrb[0].mxu0
    %v926 = vadd.f32 %v798, %v925
    %v927 = vpop.f32.mrb[0].mxu0
    %v928 = vpop.f32.mrb[0].mxu0
    %v929 = vadd.f32 %v801, %v928
    %v930 = vpop.f32.mrb[0].mxu0
    %931 = vmatprep.mubr.bf16.mxu0 %v398
    %932 = vmatmul.mubr.bf16.gmra.mrb[0].mxu0 %v397
    %v933 = vpop.f32.mrb[0].mxu0
    %v934 = vadd.f32 %v806, %v933
    %v935 = vpop.f32.mrb[0].mxu0
    %v936 = vpop.f32.mrb[0].mxu0
    %v937 = vadd.f32 %v809, %v936
    %v938 = vpop.f32.mrb[0].mxu0
    %939 = vmatprep.mubr.bf16.mxu0 %v403
    %940 = vmatmul.mubr.bf16.gmra.mrb[0].mxu0 %v402
    %v941 = vpop.f32.mrb[0].mxu0
    %v942 = vadd.f32 %v814, %v941
    %v943 = vpop.f32.mrb[0].mxu0
    %v944 = vpop.f32.mrb[0].mxu0
    %v945 = vadd.f32 %v817, %v944
    %v946 = vpop.f32.mrb[0].mxu0
    %947 = vmatprep.mubr.bf16.mxu0 %v408
    %948 = vmatmul.mubr.bf16.gmra.mrb[0].mxu0 %v407
    %v949 = vpop.f32.mrb[0].mxu0
    %v950 = vadd.f32 %v822, %v949
    %v951 = vpop.f32.mrb[0].mxu0
    %v952 = vpop.f32.mrb[0].mxu0
    %v953 = vadd.f32 %v825, %v952
    %v954 = vpop.f32.mrb[0].mxu0
    %955 = vmatprep.mubr.bf16.mxu0 %v413
    %956 = vmatmul.mubr.bf16.gmra.mrb[0].mxu0 %v412
    %v957 = vpop.f32.mrb[0].mxu0
    %v958 = vadd.f32 %v830, %v957
    %v959 = vpop.f32.mrb[0].mxu0
    %v960 = vpop.f32.mrb[0].mxu0
    %v961 = vadd.f32 %v833, %v960
    %v962 = vpop.f32.mrb[0].mxu0
    %963 = vmatprep.mubr.bf16.mxu0 %v418
    %964 = vmatmul.mubr.bf16.gmra.mrb[0].mxu0 %v417
    %v965 = vpop.f32.mrb[0].mxu0
    %v966 = vadd.f32 %v838, %v965
    %v967 = vpop.f32.mrb[0].mxu0
    %v968 = vpop.f32.mrb[0].mxu0
    %v969 = vadd.f32 %v841, %v968
    %v970 = vpop.f32.mrb[0].mxu0
    %971 = vmatprep.mubr.bf16.mxu0 %v423
    %972 = vmatmul.mubr.bf16.gmra.mrb[0].mxu0 %v422
    %v973 = vpop.f32.mrb[0].mxu0
    %v974 = vadd.f32 %v846, %v973
    %v975 = vpop.f32.mrb[0].mxu0
    %v976 = vpop.f32.mrb[0].mxu0
    %v977 = vadd.f32 %v849, %v976
    %v978 = vpop.f32.mrb[0].mxu0
    %979 = vmatprep.mubr.bf16.mxu0 %v428
    %980 = vmatmul.mubr.bf16.gmra.mrb[0].mxu0 %v427
    %v981 = vpop.f32.mrb[0].mxu0
    %v982 = vadd.f32 %v854, %v981
    %v983 = vpop.f32.mrb[0].mxu0
    %v984 = vpop.f32.mrb[0].mxu0
    %v985 = vpop.f32.mrb[0].mxu0
    %986 = vdwg.mxu0
    %987 = vmatprep.subr.bf16.mxu0 0
    %988 = vmatpush1.bf16.msra.mxu0 %v654
    %989 = vmatprep.subr.bf16.mxu0 0
    %990 = vmatpush1.bf16.msra.mxu0 %v655
    %991 = vmatprep.subr.bf16.mxu0 0
    %992 = vmatpush1.bf16.msra.mxu0 %v656
    %993 = vmatprep.subr.bf16.mxu0 0
    %994 = vmatpush1.bf16.msra.mxu0 %v657
    %995 = vmatprep.subr.bf16.mxu0 0
    %996 = vmatpush1.bf16.msra.mxu0 0
    %997 = vmatprep.subr.bf16.mxu0 0
    %998 = vmatpush1.bf16.msra.mxu0 0
    %999 = vmatprep.subr.bf16.mxu0 0
    %1000 = vmatpush1.bf16.msra.mxu0 0
    %1001 = vmatprep.subr.bf16.mxu0 0
    %1002 = vmatpush1.bf16.msra.mxu0 0
    %1003 = vmatprep.subr.bf16.mxu0 0
    %1004 = vmatpush1.bf16.msra.mxu0 0
    %1005 = vmatprep.subr.bf16.mxu0 0
    %1006 = vmatpush1.bf16.msra.mxu0 0
    %1007 = vmatprep.subr.bf16.mxu0 0
    %1008 = vmatpush1.bf16.msra.mxu0 0
    %1009 = vmatprep.subr.bf16.mxu0 0
    %1010 = vmatpush1.bf16.msra.mxu0 0
    %1011 = vmatprep.subr.bf16.mxu0 0
    %1012 = vmatpush1.bf16.msra.mxu0 0
    %1013 = vmatprep.subr.bf16.mxu0 0
    %1014 = vmatpush1.bf16.msra.mxu0 0
    %1015 = vmatprep.subr.bf16.mxu0 0
    %1016 = vmatpush1.bf16.msra.mxu0 0
    %1017 = vmatprep.subr.bf16.mxu0 0
    %1018 = vmatpush1.bf16.msra.mxu0 0
    %1019 = vmatprep.mubr.bf16.mxu0 0
    %1020 = vmatmul.mubr.bf16.gmra.mrb[0].mxu0 %v696
    %v1021 = vpop.f32.mrb[0].mxu0
    %v1022 = vadd.f32 %v894, %v1021
    %v1023 = vpop.f32.mrb[0].mxu0
    %v1024 = vpop.f32.mrb[0].mxu0
    %v1025 = vadd.f32 %v897, %v1024
    %v1026 = vpop.f32.mrb[0].mxu0
    %1027 = vmatprep.mubr.bf16.mxu0 0
    %1028 = vmatmul.mubr.bf16.gmra.mrb[0].mxu0 %v699
    %v1029 = vpop.f32.mrb[0].mxu0
    %v1030 = vadd.f32 %v902, %v1029
    %v1031 = vpop.f32.mrb[0].mxu0
    %v1032 = vpop.f32.mrb[0].mxu0
    %v1033 = vadd.f32 %v905, %v1032
    %v1034 = vpop.f32.mrb[0].mxu0
    %1035 = vmatprep.mubr.bf16.mxu0 0
    %1036 = vmatmul.mubr.bf16.gmra.mrb[0].mxu0 %v702
    %v1037 = vpop.f32.mrb[0].mxu0
    %v1038 = vadd.f32 %v910, %v1037
    %v1039 = vpop.f32.mrb[0].mxu0
    %v1040 = vpop.f32.mrb[0].mxu0
    %v1041 = vadd.f32 %v913, %v1040
    %v1042 = vpop.f32.mrb[0].mxu0
    %1043 = vmatprep.mubr.bf16.mxu0 0
    %1044 = vmatmul.mubr.bf16.gmra.mrb[0].mxu0 %v705
    %v1045 = vpop.f32.mrb[0].mxu0
    %v1046 = vadd.f32 %v918, %v1045
    %v1047 = vpop.f32.mrb[0].mxu0
    %v1048 = vpop.f32.mrb[0].mxu0
    %v1049 = vadd.f32 %v921, %v1048
    %v1050 = vpop.f32.mrb[0].mxu0
    %1051 = vmatprep.mubr.bf16.mxu0 0
    %1052 = vmatmul.mubr.bf16.gmra.mrb[0].mxu0 %v708
    %v1053 = vpop.f32.mrb[0].mxu0
    %v1054 = vadd.f32 %v926, %v1053
    %v1055 = vpop.f32.mrb[0].mxu0
    %v1056 = vpop.f32.mrb[0].mxu0
    %v1057 = vadd.f32 %v929, %v1056
    %v1058 = vpop.f32.mrb[0].mxu0
    %1059 = vmatprep.mubr.bf16.mxu0 0
    %1060 = vmatmul.mubr.bf16.gmra.mrb[0].mxu0 %v711
    %v1061 = vpop.f32.mrb[0].mxu0
    %v1062 = vadd.f32 %v934, %v1061
    %v1063 = vpop.f32.mrb[0].mxu0
    %v1064 = vpop.f32.mrb[0].mxu0
    %v1065 = vadd.f32 %v937, %v1064
    %v1066 = vpop.f32.mrb[0].mxu0
    %1067 = vmatprep.mubr.bf16.mxu0 0
    %1068 = vmatmul.mubr.bf16.gmra.mrb[0].mxu0 %v714
    %v1069 = vpop.f32.mrb[0].mxu0
    %v1070 = vadd.f32 %v942, %v1069
    %v1071 = vpop.f32.mrb[0].mxu0
    %v1072 = vpop.f32.mrb[0].mxu0
    %v1073 = vadd.f32 %v945, %v1072
    %v1074 = vpop.f32.mrb[0].mxu0
    %1075 = vmatprep.mubr.bf16.mxu0 0
    %1076 = vmatmul.mubr.bf16.gmra.mrb[0].mxu0 %v717
    %v1077 = vpop.f32.mrb[0].mxu0
    %v1078 = vadd.f32 %v950, %v1077
    %v1079 = vpop.f32.mrb[0].mxu0
    %v1080 = vpop.f32.mrb[0].mxu0
    %v1081 = vadd.f32 %v953, %v1080
    %v1082 = vpop.f32.mrb[0].mxu0
    %1083 = vmatprep.mubr.bf16.mxu0 0
    %1084 = vmatmul.mubr.bf16.gmra.mrb[0].mxu0 %v720
    %v1085 = vpop.f32.mrb[0].mxu0
    %v1086 = vadd.f32 %v958, %v1085
    %v1087 = vpop.f32.mrb[0].mxu0
    %v1088 = vpop.f32.mrb[0].mxu0
    %v1089 = vadd.f32 %v961, %v1088
    %v1090 = vpop.f32.mrb[0].mxu0
    %1091 = vmatprep.mubr.bf16.mxu0 0
    %1092 = vmatmul.mubr.bf16.gmra.mrb[0].mxu0 %v723
    %v1093 = vpop.f32.mrb[0].mxu0
    %v1094 = vadd.f32 %v966, %v1093
    %v1095 = vpop.f32.mrb[0].mxu0
    %v1096 = vpop.f32.mrb[0].mxu0
    %v1097 = vadd.f32 %v969, %v1096
    %v1098 = vpop.f32.mrb[0].mxu0
    %1099 = vmatprep.mubr.bf16.mxu0 0
    %1100 = vmatmul.mubr.bf16.gmra.mrb[0].mxu0 %v726
    %v1101 = vpop.f32.mrb[0].mxu0
    %v1102 = vadd.f32 %v974, %v1101
    %v1103 = vpop.f32.mrb[0].mxu0
    %v1104 = vpop.f32.mrb[0].mxu0
    %v1105 = vadd.f32 %v977, %v1104
    %v1106 = vpop.f32.mrb[0].mxu0
    %1107 = vmatprep.mubr.bf16.mxu0 0
    %1108 = vmatmul.mubr.bf16.gmra.mrb[0].mxu0 %v729
    %v1109 = vpop.f32.mrb[0].mxu0
    %v1110 = vadd.f32 %v982, %v1109
    %v1111 = vpop.f32.mrb[0].mxu0
    %v1112 = vpop.f32.mrb[0].mxu0
    %v1113 = vpop.f32.mrb[0].mxu0
    %1114 = vdwg.mxu0
    %v1115 = vmax.f32 %v1022, 0.0
    %v1116 = vmax.f32 %v1025, 0.0
    %v1117 = vmax.f32 %v1030, 0.0
    %v1118 = vmax.f32 %v1033, 0.0
    %v1119 = vmax.f32 %v1038, 0.0
    %v1120 = vmax.f32 %v1041, 0.0
    %v1121 = vmax.f32 %v1046, 0.0
    %v1122 = vmax.f32 %v1049, 0.0
    %v1123 = vmax.f32 %v1054, 0.0
    %v1124 = vmax.f32 %v1057, 0.0
    %v1125 = vmax.f32 %v1062, 0.0
    %v1126 = vmax.f32 %v1065, 0.0
    %v1127 = vmax.f32 %v1070, 0.0
    %v1128 = vmax.f32 %v1073, 0.0
    %v1129 = vmax.f32 %v1078, 0.0
    %v1130 = vmax.f32 %v1081, 0.0
    %v1131 = vmax.f32 %v1086, 0.0
    %v1132 = vmax.f32 %v1089, 0.0
    %v1133 = vmax.f32 %v1094, 0.0
    %v1134 = vmax.f32 %v1097, 0.0
    %v1135 = vmax.f32 %v1102, 0.0
    %v1136 = vmax.f32 %v1105, 0.0
    %v1137 = vmax.f32 %v1110, 0.0
    %v1138 = vpack.c.bf16 %v1116, %v1115
    %v1139 = vpack.c.bf16 %v1118, %v1117
    %v1140 = vpack.c.bf16 %v1120, %v1119
    %v1141 = vpack.c.bf16 %v1122, %v1121
    %v1142 = vpack.c.bf16 %v1124, %v1123
    %v1143 = vpack.c.bf16 %v1126, %v1125
    %v1144 = vpack.c.bf16 %v1128, %v1127
    %v1145 = vpack.c.bf16 %v1130, %v1129
    %v1146 = vpack.c.bf16 %v1132, %v1131
    %v1147 = vpack.c.bf16 %v1134, %v1133
    %v1148 = vpack.c.bf16 %v1136, %v1135
    %v1149 = vpack.c.bf16 %v1137, %v1137
    %v1162 = vunpack.c.l.b16 %v1138
    %v1163 = vunpack.c.h.b16 %v1138
    %v1164 = vunpack.c.l.b16 %v1139
    %v1165 = vunpack.c.h.b16 %v1139
    %v1166 = vunpack.c.l.b16 %v1140
    %v1167 = vunpack.c.h.b16 %v1140
    %v1168 = vunpack.c.l.b16 %v1141
    %v1169 = vunpack.c.h.b16 %v1141
    %v1170 = vunpack.c.l.b16 %v1142
    %v1171 = vunpack.c.h.b16 %v1142
    %v1172 = vunpack.c.l.b16 %v1143
    %v1173 = vunpack.c.h.b16 %v1143
    %v1174 = vunpack.c.l.b16 %v1144
    %v1175 = vunpack.c.h.b16 %v1144
    %v1176 = vunpack.c.l.b16 %v1145
    %v1177 = vunpack.c.h.b16 %v1145
    %v1178 = vunpack.c.l.b16 %v1146
    %v1179 = vunpack.c.h.b16 %v1146
    %v1180 = vunpack.c.l.b16 %v1147
    %v1181 = vunpack.c.h.b16 %v1147
    %v1182 = vunpack.c.l.b16 %v1148
    %v1183 = vunpack.c.h.b16 %v1148
    %v1184 = vunpack.c.l.b16 %v1149
    %v1185 = vpack.c.b16 %v1162, %v1162
    %v1186 = vpack.c.b16 %v1163, %v1163
    %v1187 = vpack.c.b16 %v1164, %v1164
    %v1188 = vpack.c.b16 %v1165, %v1165
    %v1189 = vpack.c.b16 %v1166, %v1166
    %v1190 = vpack.c.b16 %v1167, %v1167
    %v1191 = vpack.c.b16 %v1168, %v1168
    %v1192 = vpack.c.b16 %v1169, %v1169
    %v1193 = vpack.c.b16 %v1170, %v1170
    %v1194 = vpack.c.b16 %v1171, %v1171
    %v1195 = vpack.c.b16 %v1172, %v1172
    %v1196 = vpack.c.b16 %v1173, %v1173
    %v1197 = vpack.c.b16 %v1174, %v1174
    %v1198 = vpack.c.b16 %v1175, %v1175
    %v1199 = vpack.c.b16 %v1176, %v1176
    %v1200 = vpack.c.b16 %v1177, %v1177
    %v1201 = vpack.c.b16 %v1178, %v1178
    %v1202 = vpack.c.b16 %v1179, %v1179
    %v1203 = vpack.c.b16 %v1180, %v1180
    %v1204 = vpack.c.b16 %v1181, %v1181
    %v1205 = vpack.c.b16 %v1182, %v1182
    %v1206 = vpack.c.b16 %v1183, %v1183
    %v1207 = vpack.c.b16 %v1184, %v1184
    %vm1231 = vcmask 519168
    %1232 = vst.msk [vmem:[#allocation2] sm:$0xf] %vm1231, %v1185
    %1233 = vst.msk [vmem:[#allocation2 + $0x4] sm:$0xf] %vm1231, %v1186
    %1234 = vst.msk [vmem:[#allocation2 + $0x8] sm:$0xf] %vm1231, %v1187
    %1235 = vst.msk [vmem:[#allocation2 + $0xc] sm:$0xf] %vm1231, %v1188
    %1236 = vst.msk [vmem:[#allocation2 + $0x10] sm:$0xf] %vm1231, %v1189
    %1237 = vst.msk [vmem:[#allocation2 + $0x14] sm:$0xf] %vm1231, %v1190
    %1238 = vst.msk [vmem:[#allocation2 + $0x18] sm:$0xf] %vm1231, %v1191
    %1239 = vst.msk [vmem:[#allocation2 + $0x1c] sm:$0xf] %vm1231, %v1192
    %1240 = vst.msk [vmem:[#allocation2 + $0x20] sm:$0xf] %vm1231, %v1193
    %1241 = vst.msk [vmem:[#allocation2 + $0x24] sm:$0xf] %vm1231, %v1194
    %1242 = vst.msk [vmem:[#allocation2 + $0x28] sm:$0xf] %vm1231, %v1195
    %1243 = vst.msk [vmem:[#allocation2 + $0x2c] sm:$0xf] %vm1231, %v1196
    %1244 = vst.msk [vmem:[#allocation2 + $0x30] sm:$0xf] %vm1231, %v1197
    %1245 = vst.msk [vmem:[#allocation2 + $0x34] sm:$0xf] %vm1231, %v1198
    %1246 = vst.msk [vmem:[#allocation2 + $0x38] sm:$0xf] %vm1231, %v1199
    %1247 = vst.msk [vmem:[#allocation2 + $0x3c] sm:$0xf] %vm1231, %v1200
    %1248 = vst.msk [vmem:[#allocation2 + $0x40] sm:$0xf] %vm1231, %v1201
    %1249 = vst.msk [vmem:[#allocation2 + $0x44] sm:$0xf] %vm1231, %v1202
    %1250 = vst.msk [vmem:[#allocation2 + $0x48] sm:$0xf] %vm1231, %v1203
    %1251 = vst.msk [vmem:[#allocation2 + $0x4c] sm:$0xf] %vm1231, %v1204
    %1252 = vst.msk [vmem:[#allocation2 + $0x50] sm:$0xf] %vm1231, %v1205
    %1253 = vst.msk [vmem:[#allocation2 + $0x54] sm:$0xf] %vm1231, %v1206
    %1254 = vst.msk [vmem:[#allocation2 + $0x58] sm:$0x3] %vm36, %v1207
    %v1255 = vld [vmem:[#allocation2] sm:$0xf]
    %v1256 = vld [vmem:[#allocation2 + $0x4] sm:$0xf]
    %v1257 = vld [vmem:[#allocation2 + $0x8] sm:$0x3]
    %v1258 = vld [vmem:[#allocation2 + $0x8] sm:$0xc]
    %v1259 = vld [vmem:[#allocation2 + $0xc] sm:$0xf]
    %v1260 = vld [vmem:[#allocation2 + $0x10] sm:$0xf]
    %v1261 = vld [vmem:[#allocation2 + $0x14] sm:$0xf]
    %v1262 = vld [vmem:[#allocation2 + $0x18] sm:$0xf]
    %v1263 = vld [vmem:[#allocation2 + $0x1c] sm:$0x3]
    %v1264 = vld [vmem:[#allocation2 + $0x1c] sm:$0xc]
    %v1265 = vld [vmem:[#allocation2 + $0x20] sm:$0xf]
    %v1266 = vld [vmem:[#allocation2 + $0x24] sm:$0xf]
    %v1267 = vld [vmem:[#allocation2 + $0x28] sm:$0xf]
    %v1268 = vld [vmem:[#allocation2 + $0x2c] sm:$0xf]
    %v1269 = vld [vmem:[#allocation2 + $0x30] sm:$0x3]
    %v1270 = vld [vmem:[#allocation2 + $0x30] sm:$0xc]
    %v1271 = vld [vmem:[#allocation2 + $0x34] sm:$0xf]
    %v1272 = vld [vmem:[#allocation2 + $0x38] sm:$0xf]
    %v1273 = vld [vmem:[#allocation2 + $0x3c] sm:$0xf]
    %v1274 = vld [vmem:[#allocation2 + $0x40] sm:$0xf]
    %v1275 = vld [vmem:[#allocation2 + $0x44] sm:$0x3]
    %v1276 = vld [vmem:[#allocation2 + $0x44] sm:$0xc]
    %v1277 = vld [vmem:[#allocation2 + $0x48] sm:$0xf]
    %v1278 = vld [vmem:[#allocation2 + $0x4c] sm:$0xf]
    %v1279 = vld [vmem:[#allocation2 + $0x50] sm:$0xf]
    %v1280 = vld [vmem:[#allocation2 + $0x54] sm:$0xf]
    %v1281 = vld [vmem:[#allocation2 + $0x58] sm:$0x3]
    %v1282 = vld [vmem:[#allocation2] sm:$0xe]
    %v1283 = vld [vmem:[#allocation2 + $0x8] sm:$0x7]
    %v1284 = vld [vmem:[#allocation2 + $0x8] sm:$0x8]
    %v1285 = vld [vmem:[#allocation2 + $0x14] sm:$0x1]
    %v1286 = vld [vmem:[#allocation2 + $0x14] sm:$0xe]
    %v1287 = vld [vmem:[#allocation2 + $0x1c] sm:$0x7]
    %v1288 = vld [vmem:[#allocation2 + $0x1c] sm:$0x8]
    %v1289 = vld [vmem:[#allocation2 + $0x28] sm:$0x1]
    %v1290 = vld [vmem:[#allocation2 + $0x28] sm:$0xe]
    %v1291 = vld [vmem:[#allocation2 + $0x30] sm:$0x7]
    %v1292 = vld [vmem:[#allocation2 + $0x30] sm:$0x8]
    %v1293 = vld [vmem:[#allocation2 + $0x3c] sm:$0x1]
    %v1294 = vld [vmem:[#allocation2 + $0x3c] sm:$0xe]
    %v1295 = vld [vmem:[#allocation2 + $0x44] sm:$0x7]
    %v1296 = vld [vmem:[#allocation2 + $0x44] sm:$0x8]
    %v1297 = vld [vmem:[#allocation2 + $0x50] sm:$0x1]
    %v1298 = vld [vmem:[#allocation2 + $0x50] sm:$0xe]
    %v1299 = vld [vmem:[#allocation2 + $0x58] sm:$0x7]
    %v1303 = vunpack.c.l.b16 %v1255
    %v1304 = vunpack.c.l.b16 %v1256
    %v1305 = vunpack.c.l.b16 %v1257
    %v1306 = vpack.c.b16 %v1304, %v1303
    %v1307 = vpack.c.b16 %v1305, %v1305
    %v1311 = vunpack.c.l.b16 %v1258
    %v1312 = vunpack.c.l.b16 %v1259
    %v1313 = vunpack.c.l.b16 %v1260
    %v1314 = vpack.c.b16 %v1312, %v1311
    %v1315 = vpack.c.b16 %v1313, %v1313
    %vm1316 = vcmask 1045504
    %v1317 = vrot.slane %v1314, 2
    %v1318 = vrot.slane %v1315, 2
    %v1319 = vsel %vm1316, %v1317, %v1318
    %1320 = vrot.lane.b32.xlu0 %v1319, 64
    %v1321 = vpop.permute.xlu0 %1320
    %1322 = vrot.lane.b32.xlu0 %v1318, 64
    %v1323 = vpop.permute.xlu0 %1322
    %v1327 = vunpack.c.l.b16 %v1261
    %v1328 = vunpack.c.l.b16 %v1262
    %v1329 = vunpack.c.l.b16 %v1263
    %v1330 = vpack.c.b16 %v1328, %v1327
    %v1331 = vpack.c.b16 %v1329, %v1329
    %v1335 = vunpack.c.l.b16 %v1264
    %v1336 = vunpack.c.l.b16 %v1265
    %v1337 = vunpack.c.l.b16 %v1266
    %v1338 = vpack.c.b16 %v1336, %v1335
    %v1339 = vpack.c.b16 %v1337, %v1337
    %v1340 = vrot.slane %v1338, 2
    %v1341 = vrot.slane %v1339, 2
    %v1342 = vsel %vm1316, %v1340, %v1341
    %1343 = vrot.lane.b32.xlu0 %v1342, 64
    %v1344 = vpop.permute.xlu0 %1343
    %1345 = vrot.lane.b32.xlu0 %v1341, 64
    %v1346 = vpop.permute.xlu0 %1345
    %v1350 = vunpack.c.l.b16 %v1267
    %v1351 = vunpack.c.l.b16 %v1268
    %v1352 = vunpack.c.l.b16 %v1269
    %v1353 = vpack.c.b16 %v1351, %v1350
    %v1354 = vpack.c.b16 %v1352, %v1352
    %v1358 = vunpack.c.l.b16 %v1270
    %v1359 = vunpack.c.l.b16 %v1271
    %v1360 = vunpack.c.l.b16 %v1272
    %v1361 = vpack.c.b16 %v1359, %v1358
    %v1362 = vpack.c.b16 %v1360, %v1360
    %v1363 = vrot.slane %v1361, 2
    %v1364 = vrot.slane %v1362, 2
    %v1365 = vsel %vm1316, %v1363, %v1364
    %1366 = vrot.lane.b32.xlu0 %v1365, 64
    %v1367 = vpop.permute.xlu0 %1366
    %1368 = vrot.lane.b32.xlu0 %v1364, 64
    %v1369 = vpop.permute.xlu0 %1368
    %v1373 = vunpack.c.l.b16 %v1273
    %v1374 = vunpack.c.l.b16 %v1274
    %v1375 = vunpack.c.l.b16 %v1275
    %v1376 = vpack.c.b16 %v1374, %v1373
    %v1377 = vpack.c.b16 %v1375, %v1375
    %v1381 = vunpack.c.l.b16 %v1276
    %v1382 = vunpack.c.l.b16 %v1277
    %v1383 = vunpack.c.l.b16 %v1278
    %v1384 = vpack.c.b16 %v1382, %v1381
    %v1385 = vpack.c.b16 %v1383, %v1383
    %v1386 = vrot.slane %v1384, 2
    %v1387 = vrot.slane %v1385, 2
    %v1388 = vsel %vm1316, %v1386, %v1387
    %1389 = vrot.lane.b32.xlu0 %v1388, 64
    %v1390 = vpop.permute.xlu0 %1389
    %1391 = vrot.lane.b32.xlu0 %v1387, 64
    %v1392 = vpop.permute.xlu0 %1391
    %v1396 = vunpack.c.l.b16 %v1279
    %v1397 = vunpack.c.l.b16 %v1280
    %v1398 = vunpack.c.l.b16 %v1281
    %v1399 = vpack.c.b16 %v1397, %v1396
    %v1400 = vpack.c.b16 %v1398, %v1398
    %v1403 = vunpack.c.l.b16 %v1282
    %v1404 = vunpack.c.l.b16 %v1283
    %v1405 = vpack.c.b16 %v1304, %v1403
    %v1406 = vpack.c.b16 %v1404, %v1404
    %vm1407 = vcmask 1046528
    %v1408 = vrot.slane %v1405, 1
    %v1409 = vrot.slane %v1406, 1
    %v1410 = vsel %vm1407, %v1408, %v1409
    %1411 = vrot.lane.b32.xlu0 %v1410, 64
    %v1412 = vpop.permute.xlu0 %1411
    %1413 = vrot.lane.b32.xlu0 %v1409, 64
    %v1414 = vpop.permute.xlu0 %1413
    %v1417 = vunpack.c.l.b16 %v1284
    %v1418 = vunpack.c.l.b16 %v1285
    %v1419 = vpack.c.b16 %v1312, %v1417
    %v1420 = vpack.c.b16 %v1418, %v1313
    %vm1421 = vcmask 1044480
    %v1422 = vrot.slane %v1419, 3
    %v1423 = vrot.slane %v1420, 3
    %v1424 = vsel %vm1421, %v1422, %v1423
    %v1427 = vunpack.c.l.b16 %v1286
    %v1428 = vunpack.c.l.b16 %v1287
    %v1429 = vpack.c.b16 %v1328, %v1427
    %v1430 = vpack.c.b16 %v1428, %v1428
    %v1431 = vrot.slane %v1429, 1
    %v1432 = vrot.slane %v1430, 1
    %v1433 = vsel %vm1407, %v1431, %v1432
    %1434 = vrot.lane.b32.xlu0 %v1433, 64
    %v1435 = vpop.permute.xlu0 %1434
    %1436 = vrot.lane.b32.xlu0 %v1432, 64
    %v1437 = vpop.permute.xlu0 %1436
    %v1440 = vunpack.c.l.b16 %v1288
    %v1441 = vunpack.c.l.b16 %v1289
    %v1442 = vpack.c.b16 %v1336, %v1440
    %v1443 = vpack.c.b16 %v1441, %v1337
    %v1444 = vrot.slane %v1442, 3
    %v1445 = vrot.slane %v1443, 3
    %v1446 = vsel %vm1421, %v1444, %v1445
    %v1449 = vunpack.c.l.b16 %v1290
    %v1450 = vunpack.c.l.b16 %v1291
    %v1451 = vpack.c.b16 %v1351, %v1449
    %v1452 = vpack.c.b16 %v1450, %v1450
    %v1453 = vrot.slane %v1451, 1
    %v1454 = vrot.slane %v1452, 1
    %v1455 = vsel %vm1407, %v1453, %v1454
    %1456 = vrot.lane.b32.xlu0 %v1455, 64
    %v1457 = vpop.permute.xlu0 %1456
    %1458 = vrot.lane.b32.xlu0 %v1454, 64
    %v1459 = vpop.permute.xlu0 %1458
    %v1462 = vunpack.c.l.b16 %v1292
    %v1463 = vunpack.c.l.b16 %v1293
    %v1464 = vpack.c.b16 %v1359, %v1462
    %v1465 = vpack.c.b16 %v1463, %v1360
    %v1466 = vrot.slane %v1464, 3
    %v1467 = vrot.slane %v1465, 3
    %v1468 = vsel %vm1421, %v1466, %v1467
    %v1471 = vunpack.c.l.b16 %v1294
    %v1472 = vunpack.c.l.b16 %v1295
    %v1473 = vpack.c.b16 %v1374, %v1471
    %v1474 = vpack.c.b16 %v1472, %v1472
    %v1475 = vrot.slane %v1473, 1
    %v1476 = vrot.slane %v1474, 1
    %v1477 = vsel %vm1407, %v1475, %v1476
    %1478 = vrot.lane.b32.xlu0 %v1477, 64
    %v1479 = vpop.permute.xlu0 %1478
    %1480 = vrot.lane.b32.xlu0 %v1476, 64
    %v1481 = vpop.permute.xlu0 %1480
    %v1484 = vsel %vm694, %v1306, %v1321
    %v1488 = vsel %vm694, %v1307, %v1323
    %v1492 = vsel %vm694, %v1330, %v1344
    %v1496 = vsel %vm694, %v1331, %v1346
    %v1500 = vsel %vm694, %v1353, %v1367
    %v1504 = vsel %vm694, %v1354, %v1369
    %v1508 = vsel %vm694, %v1376, %v1390
    %v1512 = vsel %vm694, %v1377, %v1392
    %v1516 = vsel %vm694, %v1399, %v1412
    %v1520 = vsel %vm694, %v1400, %v1414
    %v1524 = vsel %vm694, %v1424, %v1435
    %v1528 = vsel %vm694, %v1423, %v1437
    %v1532 = vsel %vm694, %v1446, %v1457
    %v1536 = vsel %vm694, %v1445, %v1459
    %v1540 = vsel %vm694, %v1468, %v1479
    %v1544 = vsel %vm694, %v1467, %v1481
    %v1548 = vunpack.c.l.b16 %v1296
    %v1549 = vunpack.c.l.b16 %v1297
    %v1550 = vpack.c.b16 %v1382, %v1548
    %v1551 = vpack.c.b16 %v1549, %v1383
    %v1554 = vunpack.c.l.b16 %v1298
    %v1555 = vunpack.c.l.b16 %v1299
    %v1556 = vpack.c.b16 %v1397, %v1554
    %v1557 = vpack.c.b16 %v1555, %v1555
    %vm1558 = vcmask 1041408
    %v1559 = vrot.slane %v1556, 6
    %v1560 = vrot.slane %v1557, 6
    %v1561 = vsel %vm1558, %v1559, %v1560
    %1562 = vrot.lane.b32.xlu0 %v1559, 64
    %v1563 = vpop.permute.xlu0 %1562
    %1564 = vrot.lane.b32.xlu0 %v1561, 64
    %v1565 = vpop.permute.xlu0 %1564
    %v1568 = vsel %vm694, %v1550, %v1563
    %v1571 = vsel %vm694, %v1551, %v1565
    %v1574 = vrot.slane %v1568, 3
    %v1575 = vrot.slane %v1571, 3
    %v1576 = vsel %vm1421, %v1574, %v1575
    %v1579 = vld [vmem:[%s3] sm:$0xff]
    %v1580 = vld [vmem:[%s3 + $0x8] sm:$0xff]
    %v1581 = vld [vmem:[%s3 + $0x10] sm:$0xff]
    %v1582 = vld [vmem:[%s3 + $0x18] sm:$0xff]
    %v1583 = vld [vmem:[%s3 + $0x20] sm:$0xff]
    %v1584 = vld [vmem:[%s3 + $0x28] sm:$0xff]
    %v1585 = vld [vmem:[%s3 + $0x30] sm:$0xff]
    %v1586 = vld [vmem:[%s3 + $0x38] sm:$0xff]
    %v1587 = vld [vmem:[%s3 + $0x40] sm:$0xff]
    %v1588 = vld [vmem:[%s3 + $0x48] sm:$0xff]
    %v1589 = vld [vmem:[%s3 + $0x50] sm:$0xff]
    %v1590 = vld [vmem:[%s3 + $0x58] sm:$0xff]
    %v1591 = vld [vmem:[%s3 + $0x60] sm:$0xff]
    %v1592 = vld [vmem:[%s3 + $0x68] sm:$0xff]
    %v1593 = vld [vmem:[%s3 + $0x70] sm:$0xff]
    %v1594 = vld [vmem:[%s3 + $0x78] sm:$0xff]
    %v1595 = vld [vmem:[%s3 + $0x80] sm:$0xff]
    %v1596 = vld [vmem:[%s3 + $0x88] sm:$0xff]
    %v1597 = vld [vmem:[%s3 + $0x90] sm:$0xff]
    %v1598 = vld [vmem:[%s3 + $0x98] sm:$0xff]
    %v1599 = vld [vmem:[%s3 + $0xa0] sm:$0xff]
    %v1600 = vld [vmem:[%s3 + $0xa8] sm:$0xff]
    %v1601 = vld [vmem:[%s3 + $0xb0] sm:$0xff]
    %v1602 = vld [vmem:[%s3 + $0xb8] sm:$0xff]
    %v1603 = vld [vmem:[%s3 + $0xc0] sm:$0xff]
    %v1604 = vld [vmem:[%s3 + $0xc8] sm:$0xff]
    %v1605 = vld [vmem:[%s3 + $0xd0] sm:$0xff]
    %v1606 = vld [vmem:[%s3 + $0xd8] sm:$0xff]
    %v1607 = vld [vmem:[%s3 + $0xe0] sm:$0xff]
    %v1608 = vld [vmem:[%s3 + $0xe8] sm:$0xff]
    %v1609 = vld [vmem:[%s3 + $0xf0] sm:$0xff]
    %v1610 = vld [vmem:[%s3 + $0xf8] sm:$0xff]
    %v1611 = vld [vmem:[%s3 + $0x100] sm:$0xff]
    %v1612 = vld [vmem:[%s3 + $0x108] sm:$0xff]
    %v1613 = vld [vmem:[%s3 + $0x110] sm:$0xff]
    %v1614 = vld [vmem:[%s3 + $0x118] sm:$0xff]
    %v1615 = vld [vmem:[%s3 + $0x120] sm:$0xff]
    %v1616 = vld [vmem:[%s3 + $0x128] sm:$0xff]
    %v1617 = vld [vmem:[%s3 + $0x130] sm:$0xff]
    %v1618 = vld [vmem:[%s3 + $0x138] sm:$0xff]
    %v1619 = vld [vmem:[%s3 + $0x140] sm:$0xff]
    %v1620 = vld [vmem:[%s3 + $0x148] sm:$0xff]
    %v1621 = vld [vmem:[%s3 + $0x150] sm:$0xff]
    %v1622 = vld [vmem:[%s3 + $0x158] sm:$0xff]
    %v1623 = vld [vmem:[%s3 + $0x160] sm:$0xff]
    %v1624 = vld [vmem:[%s3 + $0x168] sm:$0xff]
    %v1625 = vld [vmem:[%s3 + $0x170] sm:$0xff]
    %v1626 = vld [vmem:[%s3 + $0x178] sm:$0xff]
    %v1627 = vld [vmem:[%s3 + $0x180] sm:$0xff]
    %v1628 = vld [vmem:[%s3 + $0x188] sm:$0xff]
    %v1629 = vld [vmem:[%s3 + $0x190] sm:$0xff]
    %v1630 = vld [vmem:[%s3 + $0x198] sm:$0xff]
    %v1631 = vld [vmem:[%s3 + $0x1a0] sm:$0xff]
    %v1632 = vld [vmem:[%s3 + $0x1a8] sm:$0xff]
    %v1633 = vld [vmem:[%s3 + $0x1b0] sm:$0xff]
    %v1634 = vld [vmem:[%s3 + $0x1b8] sm:$0xff]
    %v1635 = vld [vmem:[%s3 + $0x1c0] sm:$0xff]
    %v1636 = vld [vmem:[%s3 + $0x1c8] sm:$0xff]
    %v1637 = vld [vmem:[%s3 + $0x1d0] sm:$0xff]
    %v1638 = vld [vmem:[%s3 + $0x1d8] sm:$0xff]
    %v1639 = vld [vmem:[%s3 + $0x1e0] sm:$0xff]
    %v1640 = vld [vmem:[%s3 + $0x1e8] sm:$0xff]
    %v1641 = vld [vmem:[%s3 + $0x1f0] sm:$0xff]
    %v1642 = vld [vmem:[%s3 + $0x1f8] sm:$0xff]
    %v1643 = vld [vmem:[%s3 + $0x200] sm:$0xff]
    %v1644 = vld [vmem:[%s3 + $0x208] sm:$0xff]
    %v1645 = vld [vmem:[%s3 + $0x210] sm:$0xff]
    %v1646 = vld [vmem:[%s3 + $0x218] sm:$0xff]
    %v1647 = vld [vmem:[%s3 + $0x220] sm:$0xff]
    %v1648 = vld [vmem:[%s3 + $0x228] sm:$0xff]
    %v1649 = vld [vmem:[%s3 + $0x230] sm:$0xff]
    %v1650 = vld [vmem:[%s3 + $0x238] sm:$0xff]
    %v1651 = vld [vmem:[%s3 + $0x240] sm:$0xff]
    %v1652 = vld [vmem:[%s3 + $0x248] sm:$0xff]
    %v1653 = vld [vmem:[%s3 + $0x250] sm:$0xff]
    %v1654 = vld [vmem:[%s3 + $0x258] sm:$0xff]
    %v1655 = vld [vmem:[%s3 + $0x260] sm:$0xff]
    %v1656 = vld [vmem:[%s3 + $0x268] sm:$0xff]
    %v1657 = vld [vmem:[%s3 + $0x270] sm:$0xff]
    %v1658 = vld [vmem:[%s3 + $0x278] sm:$0xff]
    %v1659 = vld [vmem:[%s3 + $0x280] sm:$0xff]
    %v1660 = vld [vmem:[%s3 + $0x288] sm:$0xff]
    %v1661 = vld [vmem:[%s3 + $0x290] sm:$0xff]
    %v1662 = vld [vmem:[%s3 + $0x298] sm:$0xff]
    %v1663 = vld [vmem:[%s3 + $0x2a0] sm:$0xff]
    %v1664 = vld [vmem:[%s3 + $0x2a8] sm:$0xff]
    %v1665 = vld [vmem:[%s3 + $0x2b0] sm:$0xff]
    %v1666 = vld [vmem:[%s3 + $0x2b8] sm:$0xff]
    %v1667 = vld [vmem:[%s3 + $0x2c0] sm:$0xff]
    %v1668 = vld [vmem:[%s3 + $0x2c8] sm:$0xff]
    %v1669 = vld [vmem:[%s3 + $0x2d0] sm:$0xff]
    %v1670 = vld [vmem:[%s3 + $0x2d8] sm:$0xff]
    %v1671 = vld [vmem:[%s3 + $0x2e0] sm:$0xff]
    %v1672 = vld [vmem:[%s3 + $0x2e8] sm:$0xff]
    %v1673 = vld [vmem:[%s3 + $0x2f0] sm:$0xff]
    %v1674 = vld [vmem:[%s3 + $0x2f8] sm:$0xff]
    %v1675 = vld [vmem:[%s3 + $0x300] sm:$0xff]
    %v1676 = vld [vmem:[%s3 + $0x308] sm:$0xff]
    %v1677 = vld [vmem:[%s3 + $0x310] sm:$0xff]
    %v1678 = vld [vmem:[%s3 + $0x318] sm:$0xff]
    %v1679 = vld [vmem:[%s3 + $0x320] sm:$0xff]
    %v1680 = vld [vmem:[%s3 + $0x328] sm:$0xff]
    %v1681 = vld [vmem:[%s3 + $0x330] sm:$0xff]
    %v1682 = vld [vmem:[%s3 + $0x338] sm:$0xff]
    %v1683 = vld [vmem:[%s3 + $0x340] sm:$0xff]
    %v1684 = vld [vmem:[%s3 + $0x348] sm:$0xff]
    %v1685 = vld [vmem:[%s3 + $0x350] sm:$0xff]
    %v1686 = vld [vmem:[%s3 + $0x358] sm:$0xff]
    %v1687 = vld [vmem:[%s3 + $0x360] sm:$0xff]
    %v1688 = vld [vmem:[%s3 + $0x368] sm:$0xff]
    %v1689 = vld [vmem:[%s3 + $0x370] sm:$0xff]
    %v1690 = vld [vmem:[%s3 + $0x378] sm:$0xff]
    %v1691 = vld [vmem:[%s3 + $0x380] sm:$0xff]
    %v1692 = vld [vmem:[%s3 + $0x388] sm:$0xff]
    %v1693 = vld [vmem:[%s3 + $0x390] sm:$0xff]
    %v1694 = vld [vmem:[%s3 + $0x398] sm:$0xff]
    %v1695 = vld [vmem:[%s3 + $0x3a0] sm:$0xff]
    %v1696 = vld [vmem:[%s3 + $0x3a8] sm:$0xff]
    %v1697 = vld [vmem:[%s3 + $0x3b0] sm:$0xff]
    %v1698 = vld [vmem:[%s3 + $0x3b8] sm:$0xff]
    %v1699 = vld [vmem:[%s3 + $0x3c0] sm:$0xff]
    %v1700 = vld [vmem:[%s3 + $0x3c8] sm:$0xff]
    %v1701 = vld [vmem:[%s3 + $0x3d0] sm:$0xff]
    %v1702 = vld [vmem:[%s3 + $0x3d8] sm:$0xff]
    %v1703 = vld [vmem:[%s3 + $0x3e0] sm:$0xff]
    %v1704 = vld [vmem:[%s3 + $0x3e8] sm:$0xff]
    %v1705 = vld [vmem:[%s3 + $0x3f0] sm:$0xff]
    %v1706 = vld [vmem:[%s3 + $0x3f8] sm:$0xff]
    %v1707 = vld [vmem:[%s3 + $0x400] sm:$0xff]
    %v1708 = vld [vmem:[%s3 + $0x408] sm:$0xff]
    %v1709 = vld [vmem:[%s3 + $0x410] sm:$0xff]
    %v1710 = vld [vmem:[%s3 + $0x418] sm:$0xff]
    %v1711 = vld [vmem:[%s3 + $0x420] sm:$0xff]
    %v1712 = vld [vmem:[%s3 + $0x428] sm:$0xff]
    %v1713 = vld [vmem:[%s3 + $0x430] sm:$0xff]
    %v1714 = vld [vmem:[%s3 + $0x438] sm:$0xff]
    %v1715 = vld [vmem:[%s3 + $0x440] sm:$0xff]
    %v1716 = vld [vmem:[%s3 + $0x448] sm:$0xff]
    %v1717 = vld [vmem:[%s3 + $0x450] sm:$0xff]
    %v1718 = vld [vmem:[%s3 + $0x458] sm:$0xff]
    %v1719 = vld [vmem:[%s3 + $0x460] sm:$0xff]
    %v1720 = vld [vmem:[%s3 + $0x468] sm:$0xff]
    %v1721 = vld [vmem:[%s3 + $0x470] sm:$0xff]
    %v1722 = vld [vmem:[%s3 + $0x478] sm:$0xff]
    %v1723 = vld [vmem:[%s4] sm:$0x3]
    %v1725 = vlaneseq
    %v1726 = vshrl.u32 %v1725, 7
    %v1727 = vsub.s32 0, %v1726
    %v1728 = vrot.slane %v1723, %v1727
    %v1729 = vlaneseq
    %v1730 = vshrl.u32 %v1729, 7
    %v1731 = vsub.s32 1, %v1730
    %v1732 = vrot.slane %v1723, %v1731
    %v1879 = vunpack.c.l.b16 %v1579
    %v1880 = vunpack.c.h.b16 %v1579
    %v1881 = vunpack.c.l.b16 %v1580
    %v1882 = vunpack.c.h.b16 %v1580
    %v1883 = vunpack.c.l.b16 %v1581
    %v1884 = vunpack.c.h.b16 %v1581
    %v1885 = vunpack.c.l.b16 %v1582
    %v1886 = vunpack.c.h.b16 %v1582
    %v1887 = vunpack.c.l.b16 %v1583
    %v1888 = vunpack.c.h.b16 %v1583
    %v1889 = vunpack.c.l.b16 %v1584
    %v1890 = vunpack.c.h.b16 %v1584
    %v1891 = vunpack.c.l.b16 %v1585
    %v1892 = vunpack.c.h.b16 %v1585
    %v1893 = vunpack.c.l.b16 %v1586
    %v1894 = vunpack.c.h.b16 %v1586
    %v1895 = vunpack.c.l.b16 %v1587
    %v1896 = vunpack.c.h.b16 %v1587
    %v1897 = vunpack.c.l.b16 %v1588
    %v1898 = vunpack.c.h.b16 %v1588
    %v1899 = vunpack.c.l.b16 %v1589
    %v1900 = vunpack.c.h.b16 %v1589
    %v1901 = vunpack.c.l.b16 %v1590
    %v1902 = vunpack.c.h.b16 %v1590
    %v1903 = vunpack.c.l.b16 %v1591
    %v1904 = vunpack.c.h.b16 %v1591
    %v1905 = vunpack.c.l.b16 %v1592
    %v1906 = vunpack.c.h.b16 %v1592
    %v1907 = vunpack.c.l.b16 %v1593
    %v1908 = vunpack.c.h.b16 %v1593
    %v1909 = vunpack.c.l.b16 %v1594
    %v1910 = vunpack.c.h.b16 %v1594
    %v1911 = vunpack.c.l.b16 %v1595
    %v1912 = vunpack.c.h.b16 %v1595
    %v1913 = vunpack.c.l.b16 %v1596
    %v1914 = vunpack.c.h.b16 %v1596
    %v1915 = vunpack.c.l.b16 %v1597
    %v1916 = vunpack.c.h.b16 %v1597
    %v1917 = vunpack.c.l.b16 %v1598
    %v1918 = vunpack.c.h.b16 %v1598
    %v1919 = vunpack.c.l.b16 %v1599
    %v1920 = vunpack.c.h.b16 %v1599
    %v1921 = vunpack.c.l.b16 %v1600
    %v1922 = vunpack.c.h.b16 %v1600
    %v1923 = vunpack.c.l.b16 %v1601
    %v1924 = vunpack.c.h.b16 %v1601
    %v1925 = vunpack.c.l.b16 %v1602
    %v1926 = vunpack.c.h.b16 %v1602
    %v1927 = vunpack.c.l.b16 %v1603
    %v1928 = vunpack.c.h.b16 %v1603
    %v1929 = vunpack.c.l.b16 %v1604
    %v1930 = vunpack.c.h.b16 %v1604
    %v1931 = vunpack.c.l.b16 %v1605
    %v1932 = vunpack.c.h.b16 %v1605
    %v1933 = vunpack.c.l.b16 %v1606
    %v1934 = vunpack.c.h.b16 %v1606
    %v1935 = vunpack.c.l.b16 %v1607
    %v1936 = vunpack.c.h.b16 %v1607
    %v1937 = vunpack.c.l.b16 %v1608
    %v1938 = vunpack.c.h.b16 %v1608
    %v1939 = vunpack.c.l.b16 %v1609
    %v1940 = vunpack.c.h.b16 %v1609
    %v1941 = vunpack.c.l.b16 %v1610
    %v1942 = vunpack.c.h.b16 %v1610
    %v1943 = vunpack.c.l.b16 %v1611
    %v1944 = vunpack.c.h.b16 %v1611
    %v1945 = vunpack.c.l.b16 %v1612
    %v1946 = vunpack.c.h.b16 %v1612
    %v1947 = vunpack.c.l.b16 %v1613
    %v1948 = vunpack.c.h.b16 %v1613
    %v1949 = vunpack.c.l.b16 %v1614
    %v1950 = vunpack.c.h.b16 %v1614
    %v1951 = vunpack.c.l.b16 %v1615
    %v1952 = vunpack.c.h.b16 %v1615
    %v1953 = vunpack.c.l.b16 %v1616
    %v1954 = vunpack.c.h.b16 %v1616
    %v1955 = vunpack.c.l.b16 %v1617
    %v1956 = vunpack.c.h.b16 %v1617
    %v1957 = vunpack.c.l.b16 %v1618
    %v1958 = vunpack.c.h.b16 %v1618
    %v1959 = vunpack.c.l.b16 %v1619
    %v1960 = vunpack.c.h.b16 %v1619
    %v1961 = vunpack.c.l.b16 %v1620
    %v1962 = vunpack.c.h.b16 %v1620
    %v1963 = vunpack.c.l.b16 %v1621
    %v1964 = vunpack.c.h.b16 %v1621
    %v1965 = vunpack.c.l.b16 %v1622
    %v1966 = vunpack.c.h.b16 %v1622
    %v1967 = vunpack.c.l.b16 %v1623
    %v1968 = vunpack.c.h.b16 %v1623
    %v1969 = vunpack.c.l.b16 %v1624
    %v1970 = vunpack.c.h.b16 %v1624
    %v1971 = vunpack.c.l.b16 %v1625
    %v1972 = vunpack.c.h.b16 %v1625
    %v1973 = vunpack.c.l.b16 %v1626
    %v1974 = vunpack.c.h.b16 %v1626
    %v1975 = vunpack.c.l.b16 %v1627
    %v1976 = vunpack.c.h.b16 %v1627
    %v1977 = vunpack.c.l.b16 %v1628
    %v1978 = vunpack.c.h.b16 %v1628
    %v1979 = vunpack.c.l.b16 %v1629
    %v1980 = vunpack.c.h.b16 %v1629
    %v1981 = vunpack.c.l.b16 %v1630
    %v1982 = vunpack.c.h.b16 %v1630
    %v1983 = vunpack.c.l.b16 %v1631
    %v1984 = vunpack.c.h.b16 %v1631
    %v1985 = vunpack.c.l.b16 %v1632
    %v1986 = vunpack.c.h.b16 %v1632
    %v1987 = vunpack.c.l.b16 %v1633
    %v1988 = vunpack.c.h.b16 %v1633
    %v1989 = vunpack.c.l.b16 %v1634
    %v1990 = vunpack.c.h.b16 %v1634
    %v1991 = vunpack.c.l.b16 %v1635
    %v1992 = vunpack.c.h.b16 %v1635
    %v1993 = vunpack.c.l.b16 %v1636
    %v1994 = vunpack.c.h.b16 %v1636
    %v1995 = vunpack.c.l.b16 %v1637
    %v1996 = vunpack.c.h.b16 %v1637
    %v1997 = vunpack.c.l.b16 %v1638
    %v1998 = vunpack.c.h.b16 %v1638
    %v1999 = vunpack.c.l.b16 %v1639
    %v2000 = vunpack.c.h.b16 %v1639
    %v2001 = vunpack.c.l.b16 %v1640
    %v2002 = vunpack.c.h.b16 %v1640
    %v2003 = vunpack.c.l.b16 %v1641
    %v2004 = vunpack.c.h.b16 %v1641
    %v2005 = vunpack.c.l.b16 %v1642
    %v2006 = vunpack.c.h.b16 %v1642
    %v2007 = vunpack.c.l.b16 %v1643
    %v2008 = vunpack.c.h.b16 %v1643
    %v2009 = vunpack.c.l.b16 %v1644
    %v2010 = vunpack.c.h.b16 %v1644
    %v2011 = vunpack.c.l.b16 %v1645
    %v2012 = vunpack.c.h.b16 %v1645
    %v2013 = vunpack.c.l.b16 %v1646
    %v2014 = vunpack.c.h.b16 %v1646
    %v2015 = vunpack.c.l.b16 %v1647
    %v2016 = vunpack.c.h.b16 %v1647
    %v2017 = vunpack.c.l.b16 %v1648
    %v2018 = vunpack.c.h.b16 %v1648
    %v2019 = vunpack.c.l.b16 %v1649
    %v2020 = vunpack.c.h.b16 %v1649
    %v2021 = vunpack.c.l.b16 %v1650
    %v2022 = vunpack.c.h.b16 %v1650
    %v2023 = vunpack.c.l.b16 %v1651
    %v2024 = vunpack.c.h.b16 %v1651
    %v2025 = vunpack.c.l.b16 %v1652
    %v2026 = vunpack.c.h.b16 %v1652
    %v2027 = vunpack.c.l.b16 %v1653
    %v2028 = vunpack.c.h.b16 %v1653
    %v2029 = vunpack.c.l.b16 %v1654
    %v2030 = vunpack.c.h.b16 %v1654
    %v2031 = vunpack.c.l.b16 %v1655
    %v2032 = vunpack.c.h.b16 %v1655
    %v2033 = vunpack.c.l.b16 %v1656
    %v2034 = vunpack.c.h.b16 %v1656
    %v2035 = vunpack.c.l.b16 %v1657
    %v2036 = vunpack.c.h.b16 %v1657
    %v2037 = vunpack.c.l.b16 %v1658
    %v2038 = vunpack.c.h.b16 %v1658
    %v2039 = vunpack.c.l.b16 %v1659
    %v2040 = vunpack.c.h.b16 %v1659
    %v2041 = vunpack.c.l.b16 %v1660
    %v2042 = vunpack.c.h.b16 %v1660
    %v2043 = vunpack.c.l.b16 %v1661
    %v2044 = vunpack.c.h.b16 %v1661
    %v2045 = vunpack.c.l.b16 %v1662
    %v2046 = vunpack.c.h.b16 %v1662
    %v2047 = vunpack.c.l.b16 %v1663
    %v2048 = vunpack.c.h.b16 %v1663
    %v2049 = vunpack.c.l.b16 %v1664
    %v2050 = vunpack.c.h.b16 %v1664
    %v2051 = vunpack.c.l.b16 %v1665
    %v2052 = vunpack.c.h.b16 %v1665
    %v2053 = vunpack.c.l.b16 %v1666
    %v2054 = vunpack.c.h.b16 %v1666
    %v2055 = vunpack.c.l.b16 %v1667
    %v2056 = vunpack.c.h.b16 %v1667
    %v2057 = vunpack.c.l.b16 %v1668
    %v2058 = vunpack.c.h.b16 %v1668
    %v2059 = vunpack.c.l.b16 %v1669
    %v2060 = vunpack.c.h.b16 %v1669
    %v2061 = vunpack.c.l.b16 %v1670
    %v2062 = vunpack.c.h.b16 %v1670
    %v2063 = vunpack.c.l.b16 %v1671
    %v2064 = vunpack.c.h.b16 %v1671
    %v2065 = vunpack.c.l.b16 %v1672
    %v2066 = vunpack.c.h.b16 %v1672
    %v2067 = vunpack.c.l.b16 %v1673
    %v2068 = vunpack.c.h.b16 %v1673
    %v2069 = vunpack.c.l.b16 %v1674
    %v2070 = vunpack.c.h.b16 %v1674
    %v2071 = vunpack.c.l.b16 %v1675
    %v2072 = vunpack.c.h.b16 %v1675
    %v2073 = vunpack.c.l.b16 %v1676
    %v2074 = vunpack.c.h.b16 %v1676
    %v2075 = vunpack.c.l.b16 %v1677
    %v2076 = vunpack.c.h.b16 %v1677
    %v2077 = vunpack.c.l.b16 %v1678
    %v2078 = vunpack.c.h.b16 %v1678
    %v2079 = vunpack.c.l.b16 %v1679
    %v2080 = vunpack.c.h.b16 %v1679
    %v2081 = vunpack.c.l.b16 %v1680
    %v2082 = vunpack.c.h.b16 %v1680
    %v2083 = vunpack.c.l.b16 %v1681
    %v2084 = vunpack.c.h.b16 %v1681
    %v2085 = vunpack.c.l.b16 %v1682
    %v2086 = vunpack.c.h.b16 %v1682
    %v2087 = vunpack.c.l.b16 %v1683
    %v2088 = vunpack.c.h.b16 %v1683
    %v2089 = vunpack.c.l.b16 %v1684
    %v2090 = vunpack.c.h.b16 %v1684
    %v2091 = vunpack.c.l.b16 %v1685
    %v2092 = vunpack.c.h.b16 %v1685
    %v2093 = vunpack.c.l.b16 %v1686
    %v2094 = vunpack.c.h.b16 %v1686
    %v2095 = vunpack.c.l.b16 %v1687
    %v2096 = vunpack.c.h.b16 %v1687
    %v2097 = vunpack.c.l.b16 %v1688
    %v2098 = vunpack.c.h.b16 %v1688
    %v2099 = vunpack.c.l.b16 %v1689
    %v2100 = vunpack.c.h.b16 %v1689
    %v2101 = vunpack.c.l.b16 %v1690
    %v2102 = vunpack.c.h.b16 %v1690
    %v2103 = vunpack.c.l.b16 %v1691
    %v2104 = vunpack.c.h.b16 %v1691
    %v2105 = vunpack.c.l.b16 %v1692
    %v2106 = vunpack.c.h.b16 %v1692
    %v2107 = vunpack.c.l.b16 %v1693
    %v2108 = vunpack.c.h.b16 %v1693
    %v2109 = vunpack.c.l.b16 %v1694
    %v2110 = vunpack.c.h.b16 %v1694
    %v2111 = vunpack.c.l.b16 %v1695
    %v2112 = vunpack.c.h.b16 %v1695
    %v2113 = vunpack.c.l.b16 %v1696
    %v2114 = vunpack.c.h.b16 %v1696
    %v2115 = vunpack.c.l.b16 %v1697
    %v2116 = vunpack.c.h.b16 %v1697
    %v2117 = vunpack.c.l.b16 %v1698
    %v2118 = vunpack.c.h.b16 %v1698
    %v2119 = vunpack.c.l.b16 %v1699
    %v2120 = vunpack.c.h.b16 %v1699
    %v2121 = vunpack.c.l.b16 %v1700
    %v2122 = vunpack.c.h.b16 %v1700
    %v2123 = vunpack.c.l.b16 %v1701
    %v2124 = vunpack.c.h.b16 %v1701
    %v2125 = vunpack.c.l.b16 %v1702
    %v2126 = vunpack.c.h.b16 %v1702
    %v2127 = vunpack.c.l.b16 %v1703
    %v2128 = vunpack.c.h.b16 %v1703
    %v2129 = vunpack.c.l.b16 %v1704
    %v2130 = vunpack.c.h.b16 %v1704
    %v2131 = vunpack.c.l.b16 %v1705
    %v2132 = vunpack.c.h.b16 %v1705
    %v2133 = vunpack.c.l.b16 %v1706
    %v2134 = vunpack.c.h.b16 %v1706
    %v2135 = vunpack.c.l.b16 %v1707
    %v2136 = vunpack.c.h.b16 %v1707
    %v2137 = vunpack.c.l.b16 %v1708
    %v2138 = vunpack.c.h.b16 %v1708
    %v2139 = vunpack.c.l.b16 %v1709
    %v2140 = vunpack.c.h.b16 %v1709
    %v2141 = vunpack.c.l.b16 %v1710
    %v2142 = vunpack.c.h.b16 %v1710
    %v2143 = vunpack.c.l.b16 %v1711
    %v2144 = vunpack.c.h.b16 %v1711
    %v2145 = vunpack.c.l.b16 %v1712
    %v2146 = vunpack.c.h.b16 %v1712
    %v2147 = vunpack.c.l.b16 %v1713
    %v2148 = vunpack.c.h.b16 %v1713
    %v2149 = vunpack.c.l.b16 %v1714
    %v2150 = vunpack.c.h.b16 %v1714
    %v2151 = vunpack.c.l.b16 %v1715
    %v2152 = vunpack.c.h.b16 %v1715
    %v2153 = vunpack.c.l.b16 %v1716
    %v2154 = vunpack.c.h.b16 %v1716
    %v2155 = vunpack.c.l.b16 %v1717
    %v2156 = vunpack.c.h.b16 %v1717
    %v2157 = vunpack.c.l.b16 %v1718
    %v2158 = vunpack.c.h.b16 %v1718
    %v2159 = vunpack.c.l.b16 %v1719
    %v2160 = vunpack.c.h.b16 %v1719
    %v2161 = vunpack.c.l.b16 %v1720
    %v2162 = vunpack.c.h.b16 %v1720
    %v2163 = vunpack.c.l.b16 %v1721
    %v2164 = vunpack.c.h.b16 %v1721
    %v2165 = vunpack.c.l.b16 %v1722
    %v2166 = vunpack.c.h.b16 %v1722
    %v2167 = vpack.c.b16 %v1881, %v1879
    %v2168 = vpack.c.b16 %v1882, %v1880
    %v2169 = vpack.c.b16 %v1885, %v1883
    %v2170 = vpack.c.b16 %v1886, %v1884
    %v2171 = vpack.c.b16 %v1889, %v1887
    %v2172 = vpack.c.b16 %v1890, %v1888
    %v2173 = vpack.c.b16 %v1893, %v1891
    %v2174 = vpack.c.b16 %v1894, %v1892
    %v2175 = vpack.c.b16 %v1897, %v1895
    %v2176 = vpack.c.b16 %v1898, %v1896
    %v2177 = vpack.c.b16 %v1901, %v1899
    %v2178 = vpack.c.b16 %v1902, %v1900
    %v2179 = vpack.c.b16 %v1905, %v1903
    %v2180 = vpack.c.b16 %v1906, %v1904
    %v2181 = vpack.c.b16 %v1909, %v1907
    %v2182 = vpack.c.b16 %v1910, %v1908
    %v2183 = vpack.c.b16 %v1913, %v1911
    %v2184 = vpack.c.b16 %v1914, %v1912
    %v2185 = vpack.c.b16 %v1917, %v1915
    %v2186 = vpack.c.b16 %v1918, %v1916
    %v2187 = vpack.c.b16 %v1921, %v1919
    %v2188 = vpack.c.b16 %v1922, %v1920
    %v2189 = vpack.c.b16 %v1925, %v1923
    %v2190 = vpack.c.b16 %v1926, %v1924
    %v2191 = vpack.c.b16 %v1929, %v1927
    %v2192 = vpack.c.b16 %v1930, %v1928
    %v2193 = vpack.c.b16 %v1933, %v1931
    %v2194 = vpack.c.b16 %v1934, %v1932
    %v2195 = vpack.c.b16 %v1937, %v1935
    %v2196 = vpack.c.b16 %v1938, %v1936
    %v2197 = vpack.c.b16 %v1941, %v1939
    %v2198 = vpack.c.b16 %v1942, %v1940
    %v2199 = vpack.c.b16 %v1945, %v1943
    %v2200 = vpack.c.b16 %v1946, %v1944
    %v2201 = vpack.c.b16 %v1949, %v1947
    %v2202 = vpack.c.b16 %v1950, %v1948
    %v2203 = vpack.c.b16 %v1953, %v1951
    %v2204 = vpack.c.b16 %v1954, %v1952
    %v2205 = vpack.c.b16 %v1957, %v1955
    %v2206 = vpack.c.b16 %v1958, %v1956
    %v2207 = vpack.c.b16 %v1961, %v1959
    %v2208 = vpack.c.b16 %v1962, %v1960
    %v2209 = vpack.c.b16 %v1965, %v1963
    %v2210 = vpack.c.b16 %v1966, %v1964
    %v2211 = vpack.c.b16 %v1969, %v1967
    %v2212 = vpack.c.b16 %v1970, %v1968
    %v2213 = vpack.c.b16 %v1973, %v1971
    %v2214 = vpack.c.b16 %v1974, %v1972
    %v2215 = vpack.c.b16 %v1977, %v1975
    %v2216 = vpack.c.b16 %v1978, %v1976
    %v2217 = vpack.c.b16 %v1981, %v1979
    %v2218 = vpack.c.b16 %v1982, %v1980
    %v2219 = vpack.c.b16 %v1985, %v1983
    %v2220 = vpack.c.b16 %v1986, %v1984
    %v2221 = vpack.c.b16 %v1989, %v1987
    %v2222 = vpack.c.b16 %v1990, %v1988
    %v2223 = vpack.c.b16 %v1993, %v1991
    %v2224 = vpack.c.b16 %v1994, %v1992
    %v2225 = vpack.c.b16 %v1997, %v1995
    %v2226 = vpack.c.b16 %v1998, %v1996
    %v2227 = vpack.c.b16 %v2001, %v1999
    %v2228 = vpack.c.b16 %v2002, %v2000
    %v2229 = vpack.c.b16 %v2005, %v2003
    %v2230 = vpack.c.b16 %v2006, %v2004
    %v2231 = vpack.c.b16 %v2009, %v2007
    %v2232 = vpack.c.b16 %v2010, %v2008
    %v2233 = vpack.c.b16 %v2013, %v2011
    %v2234 = vpack.c.b16 %v2014, %v2012
    %v2235 = vpack.c.b16 %v2017, %v2015
    %v2236 = vpack.c.b16 %v2018, %v2016
    %v2237 = vpack.c.b16 %v2021, %v2019
    %v2238 = vpack.c.b16 %v2022, %v2020
    %v2239 = vpack.c.b16 %v2025, %v2023
    %v2240 = vpack.c.b16 %v2026, %v2024
    %v2241 = vpack.c.b16 %v2029, %v2027
    %v2242 = vpack.c.b16 %v2030, %v2028
    %v2243 = vpack.c.b16 %v2033, %v2031
    %v2244 = vpack.c.b16 %v2034, %v2032
    %v2245 = vpack.c.b16 %v2037, %v2035
    %v2246 = vpack.c.b16 %v2038, %v2036
    %v2247 = vpack.c.b16 %v2041, %v2039
    %v2248 = vpack.c.b16 %v2042, %v2040
    %v2249 = vpack.c.b16 %v2045, %v2043
    %v2250 = vpack.c.b16 %v2046, %v2044
    %v2251 = vpack.c.b16 %v2049, %v2047
    %v2252 = vpack.c.b16 %v2050, %v2048
    %v2253 = vpack.c.b16 %v2053, %v2051
    %v2254 = vpack.c.b16 %v2054, %v2052
    %v2255 = vpack.c.b16 %v2057, %v2055
    %v2256 = vpack.c.b16 %v2058, %v2056
    %v2257 = vpack.c.b16 %v2061, %v2059
    %v2258 = vpack.c.b16 %v2062, %v2060
    %v2259 = vpack.c.b16 %v2065, %v2063
    %v2260 = vpack.c.b16 %v2066, %v2064
    %v2261 = vpack.c.b16 %v2069, %v2067
    %v2262 = vpack.c.b16 %v2070, %v2068
    %v2263 = vpack.c.b16 %v2073, %v2071
    %v2264 = vpack.c.b16 %v2074, %v2072
    %v2265 = vpack.c.b16 %v2077, %v2075
    %v2266 = vpack.c.b16 %v2078, %v2076
    %v2267 = vpack.c.b16 %v2081, %v2079
    %v2268 = vpack.c.b16 %v2082, %v2080
    %v2269 = vpack.c.b16 %v2085, %v2083
    %v2270 = vpack.c.b16 %v2086, %v2084
    %v2271 = vpack.c.b16 %v2089, %v2087
    %v2272 = vpack.c.b16 %v2090, %v2088
    %v2273 = vpack.c.b16 %v2093, %v2091
    %v2274 = vpack.c.b16 %v2094, %v2092
    %v2275 = vpack.c.b16 %v2097, %v2095
    %v2276 = vpack.c.b16 %v2098, %v2096
    %v2277 = vpack.c.b16 %v2101, %v2099
    %v2278 = vpack.c.b16 %v2102, %v2100
    %v2279 = vpack.c.b16 %v2105, %v2103
    %v2280 = vpack.c.b16 %v2106, %v2104
    %v2281 = vpack.c.b16 %v2109, %v2107
    %v2282 = vpack.c.b16 %v2110, %v2108
    %v2283 = vpack.c.b16 %v2113, %v2111
    %v2284 = vpack.c.b16 %v2114, %v2112
    %v2285 = vpack.c.b16 %v2117, %v2115
    %v2286 = vpack.c.b16 %v2118, %v2116
    %v2287 = vpack.c.b16 %v2121, %v2119
    %v2288 = vpack.c.b16 %v2122, %v2120
    %v2289 = vpack.c.b16 %v2125, %v2123
    %v2290 = vpack.c.b16 %v2126, %v2124
    %v2291 = vpack.c.b16 %v2129, %v2127
    %v2292 = vpack.c.b16 %v2130, %v2128
    %v2293 = vpack.c.b16 %v2133, %v2131
    %v2294 = vpack.c.b16 %v2134, %v2132
    %v2295 = vpack.c.b16 %v2137, %v2135
    %v2296 = vpack.c.b16 %v2138, %v2136
    %v2297 = vpack.c.b16 %v2141, %v2139
    %v2298 = vpack.c.b16 %v2142, %v2140
    %v2299 = vpack.c.b16 %v2145, %v2143
    %v2300 = vpack.c.b16 %v2146, %v2144
    %v2301 = vpack.c.b16 %v2149, %v2147
    %v2302 = vpack.c.b16 %v2150, %v2148
    %v2303 = vpack.c.b16 %v2153, %v2151
    %v2304 = vpack.c.b16 %v2154, %v2152
    %v2305 = vpack.c.b16 %v2157, %v2155
    %v2306 = vpack.c.b16 %v2158, %v2156
    %v2307 = vpack.c.b16 %v2161, %v2159
    %v2308 = vpack.c.b16 %v2162, %v2160
    %v2309 = vpack.c.b16 %v2165, %v2163
    %v2310 = vpack.c.b16 %v2166, %v2164
    %2455 = vmatprep.subr.bf16.mxu0 %v2168
    %2456 = vmatpush1.bf16.msra.mxu0 %v2167
    %2457 = vmatprep.subr.bf16.mxu0 %v2170
    %2458 = vmatpush1.bf16.msra.mxu0 %v2169
    %2459 = vmatprep.subr.bf16.mxu0 %v2172
    %2460 = vmatpush1.bf16.msra.mxu0 %v2171
    %2461 = vmatprep.subr.bf16.mxu0 %v2174
    %2462 = vmatpush1.bf16.msra.mxu0 %v2173
    %2463 = vmatprep.subr.bf16.mxu0 %v2176
    %2464 = vmatpush1.bf16.msra.mxu0 %v2175
    %2465 = vmatprep.subr.bf16.mxu0 %v2178
    %2466 = vmatpush1.bf16.msra.mxu0 %v2177
    %2467 = vmatprep.subr.bf16.mxu0 %v2180
    %2468 = vmatpush1.bf16.msra.mxu0 %v2179
    %2469 = vmatprep.subr.bf16.mxu0 %v2182
    %2470 = vmatpush1.bf16.msra.mxu0 %v2181
    %2471 = vmatprep.subr.bf16.mxu0 %v2184
    %2472 = vmatpush1.bf16.msra.mxu0 %v2183
    %2473 = vmatprep.subr.bf16.mxu0 %v2186
    %2474 = vmatpush1.bf16.msra.mxu0 %v2185
    %2475 = vmatprep.subr.bf16.mxu0 %v2188
    %2476 = vmatpush1.bf16.msra.mxu0 %v2187
    %2477 = vmatprep.subr.bf16.mxu0 %v2190
    %2478 = vmatpush1.bf16.msra.mxu0 %v2189
    %2479 = vmatprep.subr.bf16.mxu0 %v2192
    %2480 = vmatpush1.bf16.msra.mxu0 %v2191
    %2481 = vmatprep.subr.bf16.mxu0 %v2194
    %2482 = vmatpush1.bf16.msra.mxu0 %v2193
    %2483 = vmatprep.subr.bf16.mxu0 %v2196
    %2484 = vmatpush1.bf16.msra.mxu0 %v2195
    %2485 = vmatprep.subr.bf16.mxu0 %v2198
    %2486 = vmatpush1.bf16.msra.mxu0 %v2197
    %2487 = vmatprep.mubr.bf16.mxu0 %v1492
    %2488 = vmatmul.mubr.bf16.gmra.mrb[0].mxu0 %v1484
    %v2489 = vpop.f32.mrb[0].mxu0
    %v2490 = vadd.f32 %v1728, %v2489
    %v2491 = vpop.f32.mrb[0].mxu0
    %v2492 = vadd.f32 %v1732, %v2491
    %v2493 = vpop.f32.mrb[0].mxu0
    %v2494 = vadd.f32 %v1728, %v2493
    %v2495 = vpop.f32.mrb[0].mxu0
    %v2496 = vadd.f32 %v1732, %v2495
    %2497 = vmatprep.mubr.bf16.mxu0 %v1496
    %2498 = vmatmul.mubr.bf16.gmra.mrb[0].mxu0 %v1488
    %v2499 = vpop.f32.mrb[0].mxu0
    %v2500 = vadd.f32 %v1728, %v2499
    %v2501 = vpop.f32.mrb[0].mxu0
    %v2502 = vadd.f32 %v1732, %v2501
    %v2503 = vpop.f32.mrb[0].mxu0
    %v2504 = vpop.f32.mrb[0].mxu0
    %2505 = vdwg.mxu0
    %2506 = vmatprep.subr.bf16.mxu0 %v2200
    %2507 = vmatpush1.bf16.msra.mxu0 %v2199
    %2508 = vmatprep.subr.bf16.mxu0 %v2202
    %2509 = vmatpush1.bf16.msra.mxu0 %v2201
    %2510 = vmatprep.subr.bf16.mxu0 %v2204
    %2511 = vmatpush1.bf16.msra.mxu0 %v2203
    %2512 = vmatprep.subr.bf16.mxu0 %v2206
    %2513 = vmatpush1.bf16.msra.mxu0 %v2205
    %2514 = vmatprep.subr.bf16.mxu0 %v2208
    %2515 = vmatpush1.bf16.msra.mxu0 %v2207
    %2516 = vmatprep.subr.bf16.mxu0 %v2210
    %2517 = vmatpush1.bf16.msra.mxu0 %v2209
    %2518 = vmatprep.subr.bf16.mxu0 %v2212
    %2519 = vmatpush1.bf16.msra.mxu0 %v2211
    %2520 = vmatprep.subr.bf16.mxu0 %v2214
    %2521 = vmatpush1.bf16.msra.mxu0 %v2213
    %2522 = vmatprep.subr.bf16.mxu0 %v2216
    %2523 = vmatpush1.bf16.msra.mxu0 %v2215
    %2524 = vmatprep.subr.bf16.mxu0 %v2218
    %2525 = vmatpush1.bf16.msra.mxu0 %v2217
    %2526 = vmatprep.subr.bf16.mxu0 %v2220
    %2527 = vmatpush1.bf16.msra.mxu0 %v2219
    %2528 = vmatprep.subr.bf16.mxu0 %v2222
    %2529 = vmatpush1.bf16.msra.mxu0 %v2221
    %2530 = vmatprep.subr.bf16.mxu0 %v2224
    %2531 = vmatpush1.bf16.msra.mxu0 %v2223
    %2532 = vmatprep.subr.bf16.mxu0 %v2226
    %2533 = vmatpush1.bf16.msra.mxu0 %v2225
    %2534 = vmatprep.subr.bf16.mxu0 %v2228
    %2535 = vmatpush1.bf16.msra.mxu0 %v2227
    %2536 = vmatprep.subr.bf16.mxu0 %v2230
    %2537 = vmatpush1.bf16.msra.mxu0 %v2229
    %2538 = vmatprep.mubr.bf16.mxu0 %v1508
    %2539 = vmatmul.mubr.bf16.gmra.mrb[0].mxu0 %v1500
    %v2540 = vpop.f32.mrb[0].mxu0
    %v2541 = vadd.f32 %v2490, %v2540
    %v2542 = vpop.f32.mrb[0].mxu0
    %v2543 = vadd.f32 %v2492, %v2542
    %v2544 = vpop.f32.mrb[0].mxu0
    %v2545 = vadd.f32 %v2494, %v2544
    %v2546 = vpop.f32.mrb[0].mxu0
    %v2547 = vadd.f32 %v2496, %v2546
    %2548 = vmatprep.mubr.bf16.mxu0 %v1512
    %2549 = vmatmul.mubr.bf16.gmra.mrb[0].mxu0 %v1504
    %v2550 = vpop.f32.mrb[0].mxu0
    %v2551 = vadd.f32 %v2500, %v2550
    %v2552 = vpop.f32.mrb[0].mxu0
    %v2553 = vadd.f32 %v2502, %v2552
    %v2554 = vpop.f32.mrb[0].mxu0
    %v2555 = vpop.f32.mrb[0].mxu0
    %2556 = vdwg.mxu0
    %2557 = vmatprep.subr.bf16.mxu0 %v2232
    %2558 = vmatpush1.bf16.msra.mxu0 %v2231
    %2559 = vmatprep.subr.bf16.mxu0 %v2234
    %2560 = vmatpush1.bf16.msra.mxu0 %v2233
    %2561 = vmatprep.subr.bf16.mxu0 %v2236
    %2562 = vmatpush1.bf16.msra.mxu0 %v2235
    %2563 = vmatprep.subr.bf16.mxu0 %v2238
    %2564 = vmatpush1.bf16.msra.mxu0 %v2237
    %2565 = vmatprep.subr.bf16.mxu0 %v2240
    %2566 = vmatpush1.bf16.msra.mxu0 %v2239
    %2567 = vmatprep.subr.bf16.mxu0 %v2242
    %2568 = vmatpush1.bf16.msra.mxu0 %v2241
    %2569 = vmatprep.subr.bf16.mxu0 %v2244
    %2570 = vmatpush1.bf16.msra.mxu0 %v2243
    %2571 = vmatprep.subr.bf16.mxu0 %v2246
    %2572 = vmatpush1.bf16.msra.mxu0 %v2245
    %2573 = vmatprep.subr.bf16.mxu0 %v2248
    %2574 = vmatpush1.bf16.msra.mxu0 %v2247
    %2575 = vmatprep.subr.bf16.mxu0 %v2250
    %2576 = vmatpush1.bf16.msra.mxu0 %v2249
    %2577 = vmatprep.subr.bf16.mxu0 %v2252
    %2578 = vmatpush1.bf16.msra.mxu0 %v2251
    %2579 = vmatprep.subr.bf16.mxu0 %v2254
    %2580 = vmatpush1.bf16.msra.mxu0 %v2253
    %2581 = vmatprep.subr.bf16.mxu0 %v2256
    %2582 = vmatpush1.bf16.msra.mxu0 %v2255
    %2583 = vmatprep.subr.bf16.mxu0 %v2258
    %2584 = vmatpush1.bf16.msra.mxu0 %v2257
    %2585 = vmatprep.subr.bf16.mxu0 %v2260
    %2586 = vmatpush1.bf16.msra.mxu0 %v2259
    %2587 = vmatprep.subr.bf16.mxu0 %v2262
    %2588 = vmatpush1.bf16.msra.mxu0 %v2261
    %2589 = vmatprep.mubr.bf16.mxu0 %v1524
    %2590 = vmatmul.mubr.bf16.gmra.mrb[0].mxu0 %v1516
    %v2591 = vpop.f32.mrb[0].mxu0
    %v2592 = vadd.f32 %v2541, %v2591
    %v2593 = vpop.f32.mrb[0].mxu0
    %v2594 = vadd.f32 %v2543, %v2593
    %v2595 = vpop.f32.mrb[0].mxu0
    %v2596 = vadd.f32 %v2545, %v2595
    %v2597 = vpop.f32.mrb[0].mxu0
    %v2598 = vadd.f32 %v2547, %v2597
    %2599 = vmatprep.mubr.bf16.mxu0 %v1528
    %2600 = vmatmul.mubr.bf16.gmra.mrb[0].mxu0 %v1520
    %v2601 = vpop.f32.mrb[0].mxu0
    %v2602 = vadd.f32 %v2551, %v2601
    %v2603 = vpop.f32.mrb[0].mxu0
    %v2604 = vadd.f32 %v2553, %v2603
    %v2605 = vpop.f32.mrb[0].mxu0
    %v2606 = vpop.f32.mrb[0].mxu0
    %2607 = vdwg.mxu0
    %2608 = vmatprep.subr.bf16.mxu0 %v2264
    %2609 = vmatpush1.bf16.msra.mxu0 %v2263
    %2610 = vmatprep.subr.bf16.mxu0 %v2266
    %2611 = vmatpush1.bf16.msra.mxu0 %v2265
    %2612 = vmatprep.subr.bf16.mxu0 %v2268
    %2613 = vmatpush1.bf16.msra.mxu0 %v2267
    %2614 = vmatprep.subr.bf16.mxu0 %v2270
    %2615 = vmatpush1.bf16.msra.mxu0 %v2269
    %2616 = vmatprep.subr.bf16.mxu0 %v2272
    %2617 = vmatpush1.bf16.msra.mxu0 %v2271
    %2618 = vmatprep.subr.bf16.mxu0 %v2274
    %2619 = vmatpush1.bf16.msra.mxu0 %v2273
    %2620 = vmatprep.subr.bf16.mxu0 %v2276
    %2621 = vmatpush1.bf16.msra.mxu0 %v2275
    %2622 = vmatprep.subr.bf16.mxu0 %v2278
    %2623 = vmatpush1.bf16.msra.mxu0 %v2277
    %2624 = vmatprep.subr.bf16.mxu0 %v2280
    %2625 = vmatpush1.bf16.msra.mxu0 %v2279
    %2626 = vmatprep.subr.bf16.mxu0 %v2282
    %2627 = vmatpush1.bf16.msra.mxu0 %v2281
    %2628 = vmatprep.subr.bf16.mxu0 %v2284
    %2629 = vmatpush1.bf16.msra.mxu0 %v2283
    %2630 = vmatprep.subr.bf16.mxu0 %v2286
    %2631 = vmatpush1.bf16.msra.mxu0 %v2285
    %2632 = vmatprep.subr.bf16.mxu0 %v2288
    %2633 = vmatpush1.bf16.msra.mxu0 %v2287
    %2634 = vmatprep.subr.bf16.mxu0 %v2290
    %2635 = vmatpush1.bf16.msra.mxu0 %v2289
    %2636 = vmatprep.subr.bf16.mxu0 %v2292
    %2637 = vmatpush1.bf16.msra.mxu0 %v2291
    %2638 = vmatprep.subr.bf16.mxu0 %v2294
    %2639 = vmatpush1.bf16.msra.mxu0 %v2293
    %2640 = vmatprep.mubr.bf16.mxu0 %v1540
    %2641 = vmatmul.mubr.bf16.gmra.mrb[0].mxu0 %v1532
    %v2642 = vpop.f32.mrb[0].mxu0
    %v2643 = vadd.f32 %v2592, %v2642
    %v2644 = vpop.f32.mrb[0].mxu0
    %v2645 = vadd.f32 %v2594, %v2644
    %v2646 = vpop.f32.mrb[0].mxu0
    %v2647 = vadd.f32 %v2596, %v2646
    %v2648 = vpop.f32.mrb[0].mxu0
    %v2649 = vadd.f32 %v2598, %v2648
    %2650 = vmatprep.mubr.bf16.mxu0 %v1544
    %2651 = vmatmul.mubr.bf16.gmra.mrb[0].mxu0 %v1536
    %v2652 = vpop.f32.mrb[0].mxu0
    %v2653 = vadd.f32 %v2602, %v2652
    %v2654 = vpop.f32.mrb[0].mxu0
    %v2655 = vadd.f32 %v2604, %v2654
    %v2656 = vpop.f32.mrb[0].mxu0
    %v2657 = vpop.f32.mrb[0].mxu0
    %2658 = vdwg.mxu0
    %2659 = vmatprep.subr.bf16.mxu0 %v2296
    %2660 = vmatpush1.bf16.msra.mxu0 %v2295
    %2661 = vmatprep.subr.bf16.mxu0 %v2298
    %2662 = vmatpush1.bf16.msra.mxu0 %v2297
    %2663 = vmatprep.subr.bf16.mxu0 %v2300
    %2664 = vmatpush1.bf16.msra.mxu0 %v2299
    %2665 = vmatprep.subr.bf16.mxu0 %v2302
    %2666 = vmatpush1.bf16.msra.mxu0 %v2301
    %2667 = vmatprep.subr.bf16.mxu0 %v2304
    %2668 = vmatpush1.bf16.msra.mxu0 %v2303
    %2669 = vmatprep.subr.bf16.mxu0 %v2306
    %2670 = vmatpush1.bf16.msra.mxu0 %v2305
    %2671 = vmatprep.subr.bf16.mxu0 %v2308
    %2672 = vmatpush1.bf16.msra.mxu0 %v2307
    %2673 = vmatprep.subr.bf16.mxu0 %v2310
    %2674 = vmatpush1.bf16.msra.mxu0 %v2309
    %2675 = vmatprep.subr.bf16.mxu0 0
    %2676 = vmatpush1.bf16.msra.mxu0 0
    %2677 = vmatprep.subr.bf16.mxu0 0
    %2678 = vmatpush1.bf16.msra.mxu0 0
    %2679 = vmatprep.subr.bf16.mxu0 0
    %2680 = vmatpush1.bf16.msra.mxu0 0
    %2681 = vmatprep.subr.bf16.mxu0 0
    %2682 = vmatpush1.bf16.msra.mxu0 0
    %2683 = vmatprep.subr.bf16.mxu0 0
    %2684 = vmatpush1.bf16.msra.mxu0 0
    %2685 = vmatprep.subr.bf16.mxu0 0
    %2686 = vmatpush1.bf16.msra.mxu0 0
    %2687 = vmatprep.subr.bf16.mxu0 0
    %2688 = vmatpush1.bf16.msra.mxu0 0
    %2689 = vmatprep.subr.bf16.mxu0 0
    %2690 = vmatpush1.bf16.msra.mxu0 0
    %2691 = vmatprep.mubr.bf16.mxu0 0
    %2692 = vmatmul.mubr.bf16.gmra.mrb[0].mxu0 %v1576
    %v2693 = vpop.f32.mrb[0].mxu0
    %v2694 = vadd.f32 %v2643, %v2693
    %v2695 = vpop.f32.mrb[0].mxu0
    %v2696 = vadd.f32 %v2645, %v2695
    %v2697 = vpop.f32.mrb[0].mxu0
    %v2698 = vadd.f32 %v2647, %v2697
    %v2699 = vpop.f32.mrb[0].mxu0
    %v2700 = vadd.f32 %v2649, %v2699
    %2701 = vmatprep.mubr.bf16.mxu0 0
    %2702 = vmatmul.mubr.bf16.gmra.mrb[0].mxu0 %v1575
    %v2703 = vpop.f32.mrb[0].mxu0
    %v2704 = vadd.f32 %v2653, %v2703
    %v2705 = vpop.f32.mrb[0].mxu0
    %v2706 = vadd.f32 %v2655, %v2705
    %v2707 = vpop.f32.mrb[0].mxu0
    %v2708 = vpop.f32.mrb[0].mxu0
    %2709 = vdwg.mxu0
    %v2710 = vmax.f32 %v2694, 0.0
    %v2711 = vmax.f32 %v2696, 0.0
    %v2712 = vmax.f32 %v2698, 0.0
    %v2713 = vmax.f32 %v2700, 0.0
    %v2714 = vmax.f32 %v2704, 0.0
    %v2715 = vmax.f32 %v2706, 0.0
    %v2716 = vpack.c.bf16 %v2712, %v2710
    %v2717 = vpack.c.bf16 %v2713, %v2711
    %v2718 = vpack.c.bf16 %v2714, %v2714
    %v2719 = vpack.c.bf16 %v2715, %v2715
    %v2724 = vunpack.c.l.b16 %v2716
    %v2725 = vunpack.c.l.b16 %v2717
    %v2726 = vunpack.c.h.b16 %v2716
    %v2727 = vunpack.c.h.b16 %v2717
    %v2728 = vunpack.c.l.b16 %v2718
    %v2729 = vunpack.c.l.b16 %v2719
    %v2730 = vpack.c.b16 %v2725, %v2724
    %v2731 = vpack.c.b16 %v2727, %v2726
    %v2732 = vpack.c.b16 %v2729, %v2728
    %2736 = vst [vmem:[#allocation3] sm:$0xff] %v2730
    %2737 = vst [vmem:[#allocation3 + $0x8] sm:$0xff] %v2731
    %2738 = vst [vmem:[#allocation3 + $0x10] sm:$0x33] %v2732
    %v2739 = vld [vmem:[#allocation3] sm:$0x11]
    %v2740 = vld [vmem:[#allocation3] sm:$0x22]
    %v2741 = vld [vmem:[#allocation3] sm:$0x44]
    %v2742 = vld [vmem:[#allocation3] sm:$0x88]
    %v2743 = vld [vmem:[#allocation3 + $0x8] sm:$0x11]
    %v2744 = vld [vmem:[#allocation3 + $0x8] sm:$0x22]
    %v2745 = vld [vmem:[#allocation3 + $0x8] sm:$0x44]
    %v2746 = vld [vmem:[#allocation3 + $0x8] sm:$0x88]
    %v2747 = vld [vmem:[#allocation3 + $0x10] sm:$0x11]
    %v2749 = vunpack.c.l.b16 %v2739
    %v2750 = vunpack.c.h.b16 %v2739
    %v2751 = vpack.c.b16 %v2749, %v2749
    %v2752 = vpack.c.b16 %v2750, %v2750
    %v2756 = vunpack.c.l.b16 %v2740
    %v2757 = vunpack.c.h.b16 %v2740
    %v2758 = vpack.c.b16 %v2756, %v2756
    %v2759 = vpack.c.b16 %v2757, %v2757
    %v2760 = vrot.slane %v2758, 1
    %v2761 = vrot.slane %v2759, 1
    %v2765 = vunpack.c.l.b16 %v2741
    %v2766 = vunpack.c.h.b16 %v2741
    %v2767 = vpack.c.b16 %v2765, %v2765
    %v2768 = vpack.c.b16 %v2766, %v2766
    %v2769 = vrot.slane %v2767, 2
    %v2770 = vrot.slane %v2768, 2
    %v2774 = vunpack.c.l.b16 %v2742
    %v2775 = vunpack.c.h.b16 %v2742
    %v2776 = vpack.c.b16 %v2774, %v2774
    %v2777 = vpack.c.b16 %v2775, %v2775
    %v2778 = vrot.slane %v2776, 3
    %v2779 = vrot.slane %v2777, 3
    %v2783 = vunpack.c.l.b16 %v2743
    %v2784 = vunpack.c.h.b16 %v2743
    %v2785 = vpack.c.b16 %v2783, %v2783
    %v2786 = vpack.c.b16 %v2784, %v2784
    %v2790 = vunpack.c.l.b16 %v2744
    %v2791 = vunpack.c.h.b16 %v2744
    %v2792 = vpack.c.b16 %v2790, %v2790
    %v2793 = vpack.c.b16 %v2791, %v2791
    %v2794 = vrot.slane %v2792, 1
    %v2795 = vrot.slane %v2793, 1
    %v2799 = vunpack.c.l.b16 %v2745
    %v2800 = vunpack.c.h.b16 %v2745
    %v2801 = vpack.c.b16 %v2799, %v2799
    %v2802 = vpack.c.b16 %v2800, %v2800
    %v2803 = vrot.slane %v2801, 2
    %v2804 = vrot.slane %v2802, 2
    %v2808 = vunpack.c.l.b16 %v2746
    %v2809 = vunpack.c.h.b16 %v2746
    %v2810 = vpack.c.b16 %v2808, %v2808
    %v2811 = vpack.c.b16 %v2809, %v2809
    %v2812 = vrot.slane %v2810, 3
    %v2813 = vrot.slane %v2811, 3
    %v2817 = vunpack.c.l.b16 %v2747
    %v2818 = vunpack.c.h.b16 %v2747
    %v2819 = vpack.c.b16 %v2817, %v2817
    %v2820 = vpack.c.b16 %v2818, %v2818
    %v2823 = vld [vmem:[%s5] sm:$0xff]
    %v2824 = vld [vmem:[%s5 + $0x8] sm:$0xff]
    %v2825 = vld [vmem:[%s5 + $0x10] sm:$0xff]
    %v2826 = vld [vmem:[%s5 + $0x18] sm:$0xff]
    %v2827 = vld [vmem:[%s5 + $0x20] sm:$0xff]
    %v2828 = vld [vmem:[%s5 + $0x28] sm:$0xff]
    %v2829 = vld [vmem:[%s5 + $0x30] sm:$0xff]
    %v2830 = vld [vmem:[%s5 + $0x38] sm:$0xff]
    %v2831 = vld [vmem:[%s5 + $0x40] sm:$0xff]
    %v2832 = vld [vmem:[%s5 + $0x48] sm:$0xff]
    %v2833 = vld [vmem:[%s5 + $0x50] sm:$0xff]
    %v2834 = vld [vmem:[%s5 + $0x58] sm:$0xff]
    %v2835 = vld [vmem:[%s5 + $0x60] sm:$0xff]
    %v2836 = vld [vmem:[%s5 + $0x68] sm:$0xff]
    %v2837 = vld [vmem:[%s5 + $0x70] sm:$0xff]
    %v2838 = vld [vmem:[%s5 + $0x78] sm:$0xff]
    %v2839 = vld [vmem:[%s5 + $0x80] sm:$0xff]
    %v2840 = vld [vmem:[%s5 + $0x88] sm:$0xff]
    %v2841 = vld [vmem:[%s5 + $0x90] sm:$0xff]
    %v2842 = vld [vmem:[%s5 + $0x98] sm:$0xff]
    %v2843 = vld [vmem:[%s5 + $0xa0] sm:$0xff]
    %v2844 = vld [vmem:[%s5 + $0xa8] sm:$0xff]
    %v2845 = vld [vmem:[%s5 + $0xb0] sm:$0xff]
    %v2846 = vld [vmem:[%s5 + $0xb8] sm:$0xff]
    %v2847 = vld [vmem:[%s5 + $0xc0] sm:$0xff]
    %v2848 = vld [vmem:[%s5 + $0xc8] sm:$0xff]
    %v2849 = vld [vmem:[%s5 + $0xd0] sm:$0xff]
    %v2850 = vld [vmem:[%s5 + $0xd8] sm:$0xff]
    %v2851 = vld [vmem:[%s5 + $0xe0] sm:$0xff]
    %v2852 = vld [vmem:[%s5 + $0xe8] sm:$0xff]
    %v2853 = vld [vmem:[%s5 + $0xf0] sm:$0xff]
    %v2854 = vld [vmem:[%s5 + $0xf8] sm:$0xff]
    %v2855 = vld [vmem:[%s5 + $0x100] sm:$0xff]
    %v2856 = vld [vmem:[%s5 + $0x108] sm:$0xff]
    %v2857 = vld [vmem:[%s5 + $0x110] sm:$0xff]
    %v2858 = vld [vmem:[%s5 + $0x118] sm:$0xff]
    %v2859 = vld [vmem:[%s5 + $0x120] sm:$0xff]
    %v2860 = vld [vmem:[%s5 + $0x128] sm:$0xff]
    %v2861 = vld [vmem:[%s5 + $0x130] sm:$0xff]
    %v2862 = vld [vmem:[%s5 + $0x138] sm:$0xff]
    %v2863 = vld [vmem:[%s5 + $0x140] sm:$0xff]
    %v2864 = vld [vmem:[%s5 + $0x148] sm:$0xff]
    %v2865 = vld [vmem:[%s5 + $0x150] sm:$0xff]
    %v2866 = vld [vmem:[%s5 + $0x158] sm:$0xff]
    %v2867 = vld [vmem:[%s5 + $0x160] sm:$0xff]
    %v2868 = vld [vmem:[%s5 + $0x168] sm:$0xff]
    %v2869 = vld [vmem:[%s5 + $0x170] sm:$0xff]
    %v2870 = vld [vmem:[%s5 + $0x178] sm:$0xff]
    %v2871 = vld [vmem:[%s5 + $0x180] sm:$0xff]
    %v2872 = vld [vmem:[%s5 + $0x188] sm:$0xff]
    %v2873 = vld [vmem:[%s5 + $0x190] sm:$0xff]
    %v2874 = vld [vmem:[%s5 + $0x198] sm:$0xff]
    %v2875 = vld [vmem:[%s5 + $0x1a0] sm:$0xff]
    %v2876 = vld [vmem:[%s5 + $0x1a8] sm:$0xff]
    %v2877 = vld [vmem:[%s5 + $0x1b0] sm:$0xff]
    %v2878 = vld [vmem:[%s5 + $0x1b8] sm:$0xff]
    %v2879 = vld [vmem:[%s5 + $0x1c0] sm:$0xff]
    %v2880 = vld [vmem:[%s5 + $0x1c8] sm:$0xff]
    %v2881 = vld [vmem:[%s5 + $0x1d0] sm:$0xff]
    %v2882 = vld [vmem:[%s5 + $0x1d8] sm:$0xff]
    %v2883 = vld [vmem:[%s5 + $0x1e0] sm:$0xff]
    %v2884 = vld [vmem:[%s5 + $0x1e8] sm:$0xff]
    %v2885 = vld [vmem:[%s5 + $0x1f0] sm:$0xff]
    %v2886 = vld [vmem:[%s5 + $0x1f8] sm:$0xff]
    %v2887 = vld [vmem:[%s5 + $0x200] sm:$0xff]
    %v2888 = vld [vmem:[%s5 + $0x208] sm:$0xff]
    %v2889 = vld [vmem:[%s5 + $0x210] sm:$0xff]
    %v2890 = vld [vmem:[%s5 + $0x218] sm:$0xff]
    %v2891 = vld [vmem:[%s5 + $0x220] sm:$0xff]
    %v2892 = vld [vmem:[%s5 + $0x228] sm:$0xff]
    %v2893 = vld [vmem:[%s5 + $0x230] sm:$0xff]
    %v2894 = vld [vmem:[%s5 + $0x238] sm:$0xff]
    %v2895 = vld [vmem:[%s5 + $0x240] sm:$0xff]
    %v2896 = vld [vmem:[%s5 + $0x248] sm:$0xff]
    %v2897 = vld [vmem:[%s5 + $0x250] sm:$0xff]
    %v2898 = vld [vmem:[%s5 + $0x258] sm:$0xff]
    %v2899 = vld [vmem:[%s5 + $0x260] sm:$0xff]
    %v2900 = vld [vmem:[%s5 + $0x268] sm:$0xff]
    %v2901 = vld [vmem:[%s5 + $0x270] sm:$0xff]
    %v2902 = vld [vmem:[%s5 + $0x278] sm:$0xff]
    %v2903 = vld [vmem:[%s5 + $0x280] sm:$0xff]
    %v2904 = vld [vmem:[%s5 + $0x288] sm:$0xff]
    %v2905 = vld [vmem:[%s5 + $0x290] sm:$0xff]
    %v2906 = vld [vmem:[%s5 + $0x298] sm:$0xff]
    %v2907 = vld [vmem:[%s5 + $0x2a0] sm:$0xff]
    %v2908 = vld [vmem:[%s5 + $0x2a8] sm:$0xff]
    %v2909 = vld [vmem:[%s5 + $0x2b0] sm:$0xff]
    %v2910 = vld [vmem:[%s5 + $0x2b8] sm:$0xff]
    %v2911 = vld [vmem:[%s5 + $0x2c0] sm:$0xff]
    %v2912 = vld [vmem:[%s5 + $0x2c8] sm:$0xff]
    %v2913 = vld [vmem:[%s5 + $0x2d0] sm:$0xff]
    %v2914 = vld [vmem:[%s5 + $0x2d8] sm:$0xff]
    %v2915 = vld [vmem:[%s5 + $0x2e0] sm:$0xff]
    %v2916 = vld [vmem:[%s5 + $0x2e8] sm:$0xff]
    %v2917 = vld [vmem:[%s5 + $0x2f0] sm:$0xff]
    %v2918 = vld [vmem:[%s5 + $0x2f8] sm:$0xff]
    %v2919 = vld [vmem:[%s5 + $0x300] sm:$0xff]
    %v2920 = vld [vmem:[%s5 + $0x308] sm:$0xff]
    %v2921 = vld [vmem:[%s5 + $0x310] sm:$0xff]
    %v2922 = vld [vmem:[%s5 + $0x318] sm:$0xff]
    %v2923 = vld [vmem:[%s5 + $0x320] sm:$0xff]
    %v2924 = vld [vmem:[%s5 + $0x328] sm:$0xff]
    %v2925 = vld [vmem:[%s5 + $0x330] sm:$0xff]
    %v2926 = vld [vmem:[%s5 + $0x338] sm:$0xff]
    %v2927 = vld [vmem:[%s5 + $0x340] sm:$0xff]
    %v2928 = vld [vmem:[%s5 + $0x348] sm:$0xff]
    %v2929 = vld [vmem:[%s5 + $0x350] sm:$0xff]
    %v2930 = vld [vmem:[%s5 + $0x358] sm:$0xff]
    %v2931 = vld [vmem:[%s5 + $0x360] sm:$0xff]
    %v2932 = vld [vmem:[%s5 + $0x368] sm:$0xff]
    %v2933 = vld [vmem:[%s5 + $0x370] sm:$0xff]
    %v2934 = vld [vmem:[%s5 + $0x378] sm:$0xff]
    %v2935 = vld [vmem:[%s5 + $0x380] sm:$0xff]
    %v2936 = vld [vmem:[%s5 + $0x388] sm:$0xff]
    %v2937 = vld [vmem:[%s5 + $0x390] sm:$0xff]
    %v2938 = vld [vmem:[%s5 + $0x398] sm:$0xff]
    %v2939 = vld [vmem:[%s5 + $0x3a0] sm:$0xff]
    %v2940 = vld [vmem:[%s5 + $0x3a8] sm:$0xff]
    %v2941 = vld [vmem:[%s5 + $0x3b0] sm:$0xff]
    %v2942 = vld [vmem:[%s5 + $0x3b8] sm:$0xff]
    %v2943 = vld [vmem:[%s5 + $0x3c0] sm:$0xff]
    %v2944 = vld [vmem:[%s5 + $0x3c8] sm:$0xff]
    %v2945 = vld [vmem:[%s5 + $0x3d0] sm:$0xff]
    %v2946 = vld [vmem:[%s5 + $0x3d8] sm:$0xff]
    %v2947 = vld [vmem:[%s5 + $0x3e0] sm:$0xff]
    %v2948 = vld [vmem:[%s5 + $0x3e8] sm:$0xff]
    %v2949 = vld [vmem:[%s5 + $0x3f0] sm:$0xff]
    %v2950 = vld [vmem:[%s5 + $0x3f8] sm:$0xff]
    %v2951 = vld [vmem:[%s5 + $0x400] sm:$0xff]
    %v2952 = vld [vmem:[%s5 + $0x408] sm:$0xff]
    %v2953 = vld [vmem:[%s5 + $0x410] sm:$0xff]
    %v2954 = vld [vmem:[%s5 + $0x418] sm:$0xff]
    %v2955 = vld [vmem:[%s5 + $0x420] sm:$0xff]
    %v2956 = vld [vmem:[%s5 + $0x428] sm:$0xff]
    %v2957 = vld [vmem:[%s5 + $0x430] sm:$0xff]
    %v2958 = vld [vmem:[%s5 + $0x438] sm:$0xff]
    %v2959 = vld [vmem:[%s5 + $0x440] sm:$0xff]
    %v2960 = vld [vmem:[%s5 + $0x448] sm:$0xff]
    %v2961 = vld [vmem:[%s5 + $0x450] sm:$0xff]
    %v2962 = vld [vmem:[%s5 + $0x458] sm:$0xff]
    %v2963 = vld [vmem:[%s5 + $0x460] sm:$0xff]
    %v2964 = vld [vmem:[%s5 + $0x468] sm:$0xff]
    %v2965 = vld [vmem:[%s5 + $0x470] sm:$0xff]
    %v2966 = vld [vmem:[%s5 + $0x478] sm:$0xff]
    %v2967 = vld [vmem:[%s5 + $0x480] sm:$0xff]
    %v2968 = vld [vmem:[%s5 + $0x488] sm:$0xff]
    %v2969 = vld [vmem:[%s5 + $0x490] sm:$0xff]
    %v2970 = vld [vmem:[%s5 + $0x498] sm:$0xff]
    %v2971 = vld [vmem:[%s5 + $0x4a0] sm:$0xff]
    %v2972 = vld [vmem:[%s5 + $0x4a8] sm:$0xff]
    %v2973 = vld [vmem:[%s5 + $0x4b0] sm:$0xff]
    %v2974 = vld [vmem:[%s5 + $0x4b8] sm:$0xff]
    %v2975 = vld [vmem:[%s5 + $0x4c0] sm:$0xff]
    %v2976 = vld [vmem:[%s5 + $0x4c8] sm:$0xff]
    %v2977 = vld [vmem:[%s5 + $0x4d0] sm:$0xff]
    %v2978 = vld [vmem:[%s5 + $0x4d8] sm:$0xff]
    %v2979 = vld [vmem:[%s5 + $0x4e0] sm:$0xff]
    %v2980 = vld [vmem:[%s5 + $0x4e8] sm:$0xff]
    %v2981 = vld [vmem:[%s5 + $0x4f0] sm:$0xff]
    %v2982 = vld [vmem:[%s5 + $0x4f8] sm:$0xff]
    %v2983 = vld [vmem:[%s5 + $0x500] sm:$0xff]
    %v2984 = vld [vmem:[%s5 + $0x508] sm:$0xff]
    %v2985 = vld [vmem:[%s5 + $0x510] sm:$0xff]
    %v2986 = vld [vmem:[%s5 + $0x518] sm:$0xff]
    %v2987 = vld [vmem:[%s5 + $0x520] sm:$0xff]
    %v2988 = vld [vmem:[%s5 + $0x528] sm:$0xff]
    %v2989 = vld [vmem:[%s5 + $0x530] sm:$0xff]
    %v2990 = vld [vmem:[%s5 + $0x538] sm:$0xff]
    %v2991 = vld [vmem:[%s5 + $0x540] sm:$0xff]
    %v2992 = vld [vmem:[%s5 + $0x548] sm:$0xff]
    %v2993 = vld [vmem:[%s5 + $0x550] sm:$0xff]
    %v2994 = vld [vmem:[%s5 + $0x558] sm:$0xff]
    %v2995 = vld [vmem:[%s5 + $0x560] sm:$0xff]
    %v2996 = vld [vmem:[%s5 + $0x568] sm:$0xff]
    %v2997 = vld [vmem:[%s5 + $0x570] sm:$0xff]
    %v2998 = vld [vmem:[%s5 + $0x578] sm:$0xff]
    %v2999 = vld [vmem:[%s5 + $0x580] sm:$0xff]
    %v3000 = vld [vmem:[%s5 + $0x588] sm:$0xff]
    %v3001 = vld [vmem:[%s5 + $0x590] sm:$0xff]
    %v3002 = vld [vmem:[%s5 + $0x598] sm:$0xff]
    %v3003 = vld [vmem:[%s5 + $0x5a0] sm:$0xff]
    %v3004 = vld [vmem:[%s5 + $0x5a8] sm:$0xff]
    %v3005 = vld [vmem:[%s5 + $0x5b0] sm:$0xff]
    %v3006 = vld [vmem:[%s5 + $0x5b8] sm:$0xff]
    %v3007 = vld [vmem:[%s5 + $0x5c0] sm:$0xff]
    %v3008 = vld [vmem:[%s5 + $0x5c8] sm:$0xff]
    %v3009 = vld [vmem:[%s5 + $0x5d0] sm:$0xff]
    %v3010 = vld [vmem:[%s5 + $0x5d8] sm:$0xff]
    %v3011 = vld [vmem:[%s5 + $0x5e0] sm:$0xff]
    %v3012 = vld [vmem:[%s5 + $0x5e8] sm:$0xff]
    %v3013 = vld [vmem:[%s5 + $0x5f0] sm:$0xff]
    %v3014 = vld [vmem:[%s5 + $0x5f8] sm:$0xff]
    %v3015 = vld [vmem:[%s5 + $0x600] sm:$0xff]
    %v3016 = vld [vmem:[%s5 + $0x608] sm:$0xff]
    %v3017 = vld [vmem:[%s5 + $0x610] sm:$0xff]
    %v3018 = vld [vmem:[%s5 + $0x618] sm:$0xff]
    %v3019 = vld [vmem:[%s5 + $0x620] sm:$0xff]
    %v3020 = vld [vmem:[%s5 + $0x628] sm:$0xff]
    %v3021 = vld [vmem:[%s5 + $0x630] sm:$0xff]
    %v3022 = vld [vmem:[%s5 + $0x638] sm:$0xff]
    %v3023 = vld [vmem:[%s5 + $0x640] sm:$0xff]
    %v3024 = vld [vmem:[%s5 + $0x648] sm:$0xff]
    %v3025 = vld [vmem:[%s5 + $0x650] sm:$0xff]
    %v3026 = vld [vmem:[%s5 + $0x658] sm:$0xff]
    %v3027 = vld [vmem:[%s5 + $0x660] sm:$0xff]
    %v3028 = vld [vmem:[%s5 + $0x668] sm:$0xff]
    %v3029 = vld [vmem:[%s5 + $0x670] sm:$0xff]
    %v3030 = vld [vmem:[%s5 + $0x678] sm:$0xff]
    %v3031 = vld [vmem:[%s5 + $0x680] sm:$0xff]
    %v3032 = vld [vmem:[%s5 + $0x688] sm:$0xff]
    %v3033 = vld [vmem:[%s5 + $0x690] sm:$0xff]
    %v3034 = vld [vmem:[%s5 + $0x698] sm:$0xff]
    %v3035 = vld [vmem:[%s5 + $0x6a0] sm:$0xff]
    %v3036 = vld [vmem:[%s5 + $0x6a8] sm:$0xff]
    %v3037 = vld [vmem:[%s5 + $0x6b0] sm:$0xff]
    %v3038 = vld [vmem:[%s5 + $0x6b8] sm:$0xff]
    %v3039 = vld [vmem:[%s5 + $0x6c0] sm:$0xff]
    %v3040 = vld [vmem:[%s5 + $0x6c8] sm:$0xff]
    %v3041 = vld [vmem:[%s5 + $0x6d0] sm:$0xff]
    %v3042 = vld [vmem:[%s5 + $0x6d8] sm:$0xff]
    %v3043 = vld [vmem:[%s5 + $0x6e0] sm:$0xff]
    %v3044 = vld [vmem:[%s5 + $0x6e8] sm:$0xff]
    %v3045 = vld [vmem:[%s5 + $0x6f0] sm:$0xff]
    %v3046 = vld [vmem:[%s5 + $0x6f8] sm:$0xff]
    %v3047 = vld [vmem:[%s5 + $0x700] sm:$0xff]
    %v3048 = vld [vmem:[%s5 + $0x708] sm:$0xff]
    %v3049 = vld [vmem:[%s5 + $0x710] sm:$0xff]
    %v3050 = vld [vmem:[%s5 + $0x718] sm:$0xff]
    %v3051 = vld [vmem:[%s5 + $0x720] sm:$0xff]
    %v3052 = vld [vmem:[%s5 + $0x728] sm:$0xff]
    %v3053 = vld [vmem:[%s5 + $0x730] sm:$0xff]
    %v3054 = vld [vmem:[%s5 + $0x738] sm:$0xff]
    %v3055 = vld [vmem:[%s5 + $0x740] sm:$0xff]
    %v3056 = vld [vmem:[%s5 + $0x748] sm:$0xff]
    %v3057 = vld [vmem:[%s5 + $0x750] sm:$0xff]
    %v3058 = vld [vmem:[%s5 + $0x758] sm:$0xff]
    %v3059 = vld [vmem:[%s5 + $0x760] sm:$0xff]
    %v3060 = vld [vmem:[%s5 + $0x768] sm:$0xff]
    %v3061 = vld [vmem:[%s5 + $0x770] sm:$0xff]
    %v3062 = vld [vmem:[%s5 + $0x778] sm:$0xff]
    %v3063 = vld [vmem:[%s5 + $0x780] sm:$0xff]
    %v3064 = vld [vmem:[%s5 + $0x788] sm:$0xff]
    %v3065 = vld [vmem:[%s5 + $0x790] sm:$0xff]
    %v3066 = vld [vmem:[%s5 + $0x798] sm:$0xff]
    %v3067 = vld [vmem:[%s5 + $0x7a0] sm:$0xff]
    %v3068 = vld [vmem:[%s5 + $0x7a8] sm:$0xff]
    %v3069 = vld [vmem:[%s5 + $0x7b0] sm:$0xff]
    %v3070 = vld [vmem:[%s5 + $0x7b8] sm:$0xff]
    %v3071 = vld [vmem:[%s5 + $0x7c0] sm:$0xff]
    %v3072 = vld [vmem:[%s5 + $0x7c8] sm:$0xff]
    %v3073 = vld [vmem:[%s5 + $0x7d0] sm:$0xff]
    %v3074 = vld [vmem:[%s5 + $0x7d8] sm:$0xff]
    %v3075 = vld [vmem:[%s5 + $0x7e0] sm:$0xff]
    %v3076 = vld [vmem:[%s5 + $0x7e8] sm:$0xff]
    %v3077 = vld [vmem:[%s5 + $0x7f0] sm:$0xff]
    %v3078 = vld [vmem:[%s5 + $0x7f8] sm:$0xff]
    %v3079 = vld [vmem:[%s5 + $0x800] sm:$0xff]
    %v3080 = vld [vmem:[%s5 + $0x808] sm:$0xff]
    %v3081 = vld [vmem:[%s5 + $0x810] sm:$0xff]
    %v3082 = vld [vmem:[%s5 + $0x818] sm:$0xff]
    %v3083 = vld [vmem:[%s5 + $0x820] sm:$0xff]
    %v3084 = vld [vmem:[%s5 + $0x828] sm:$0xff]
    %v3085 = vld [vmem:[%s5 + $0x830] sm:$0xff]
    %v3086 = vld [vmem:[%s5 + $0x838] sm:$0xff]
    %v3087 = vld [vmem:[%s5 + $0x840] sm:$0xff]
    %v3088 = vld [vmem:[%s5 + $0x848] sm:$0xff]
    %v3089 = vld [vmem:[%s5 + $0x850] sm:$0xff]
    %v3090 = vld [vmem:[%s5 + $0x858] sm:$0xff]
    %v3091 = vld [vmem:[%s5 + $0x860] sm:$0xff]
    %v3092 = vld [vmem:[%s5 + $0x868] sm:$0xff]
    %v3093 = vld [vmem:[%s5 + $0x870] sm:$0xff]
    %v3094 = vld [vmem:[%s5 + $0x878] sm:$0xff]
    %v3095 = vld [vmem:[%s5 + $0x880] sm:$0xff]
    %v3096 = vld [vmem:[%s5 + $0x888] sm:$0xff]
    %v3097 = vld [vmem:[%s5 + $0x890] sm:$0xff]
    %v3098 = vld [vmem:[%s5 + $0x898] sm:$0xff]
    %v3099 = vld [vmem:[%s5 + $0x8a0] sm:$0xff]
    %v3100 = vld [vmem:[%s5 + $0x8a8] sm:$0xff]
    %v3101 = vld [vmem:[%s5 + $0x8b0] sm:$0xff]
    %v3102 = vld [vmem:[%s5 + $0x8b8] sm:$0xff]
    %v3103 = vld [vmem:[%s5 + $0x8c0] sm:$0xff]
    %v3104 = vld [vmem:[%s5 + $0x8c8] sm:$0xff]
    %v3105 = vld [vmem:[%s5 + $0x8d0] sm:$0xff]
    %v3106 = vld [vmem:[%s5 + $0x8d8] sm:$0xff]
    %v3107 = vld [vmem:[%s5 + $0x8e0] sm:$0xff]
    %v3108 = vld [vmem:[%s5 + $0x8e8] sm:$0xff]
    %v3109 = vld [vmem:[%s5 + $0x8f0] sm:$0xff]
    %v3110 = vld [vmem:[%s5 + $0x8f8] sm:$0xff]
    %v3111 = vld [vmem:[%s6] sm:$0x3]
    %v3113 = vlaneseq
    %v3114 = vshrl.u32 %v3113, 7
    %v3115 = vsub.s32 0, %v3114
    %v3116 = vrot.slane %v3111, %v3115
    %v3117 = vlaneseq
    %v3118 = vshrl.u32 %v3117, 7
    %v3119 = vsub.s32 1, %v3118
    %v3120 = vrot.slane %v3111, %v3119
    %v3411 = vunpack.c.l.b16 %v2823
    %v3412 = vunpack.c.h.b16 %v2823
    %v3413 = vunpack.c.l.b16 %v2824
    %v3414 = vunpack.c.h.b16 %v2824
    %v3415 = vunpack.c.l.b16 %v2825
    %v3416 = vunpack.c.h.b16 %v2825
    %v3417 = vunpack.c.l.b16 %v2826
    %v3418 = vunpack.c.h.b16 %v2826
    %v3419 = vunpack.c.l.b16 %v2827
    %v3420 = vunpack.c.h.b16 %v2827
    %v3421 = vunpack.c.l.b16 %v2828
    %v3422 = vunpack.c.h.b16 %v2828
    %v3423 = vunpack.c.l.b16 %v2829
    %v3424 = vunpack.c.h.b16 %v2829
    %v3425 = vunpack.c.l.b16 %v2830
    %v3426 = vunpack.c.h.b16 %v2830
    %v3427 = vunpack.c.l.b16 %v2831
    %v3428 = vunpack.c.h.b16 %v2831
    %v3429 = vunpack.c.l.b16 %v2832
    %v3430 = vunpack.c.h.b16 %v2832
    %v3431 = vunpack.c.l.b16 %v2833
    %v3432 = vunpack.c.h.b16 %v2833
    %v3433 = vunpack.c.l.b16 %v2834
    %v3434 = vunpack.c.h.b16 %v2834
    %v3435 = vunpack.c.l.b16 %v2835
    %v3436 = vunpack.c.h.b16 %v2835
    %v3437 = vunpack.c.l.b16 %v2836
    %v3438 = vunpack.c.h.b16 %v2836
    %v3439 = vunpack.c.l.b16 %v2837
    %v3440 = vunpack.c.h.b16 %v2837
    %v3441 = vunpack.c.l.b16 %v2838
    %v3442 = vunpack.c.h.b16 %v2838
    %v3443 = vunpack.c.l.b16 %v2839
    %v3444 = vunpack.c.h.b16 %v2839
    %v3445 = vunpack.c.l.b16 %v2840
    %v3446 = vunpack.c.h.b16 %v2840
    %v3447 = vunpack.c.l.b16 %v2841
    %v3448 = vunpack.c.h.b16 %v2841
    %v3449 = vunpack.c.l.b16 %v2842
    %v3450 = vunpack.c.h.b16 %v2842
    %v3451 = vunpack.c.l.b16 %v2843
    %v3452 = vunpack.c.h.b16 %v2843
    %v3453 = vunpack.c.l.b16 %v2844
    %v3454 = vunpack.c.h.b16 %v2844
    %v3455 = vunpack.c.l.b16 %v2845
    %v3456 = vunpack.c.h.b16 %v2845
    %v3457 = vunpack.c.l.b16 %v2846
    %v3458 = vunpack.c.h.b16 %v2846
    %v3459 = vunpack.c.l.b16 %v2847
    %v3460 = vunpack.c.h.b16 %v2847
    %v3461 = vunpack.c.l.b16 %v2848
    %v3462 = vunpack.c.h.b16 %v2848
    %v3463 = vunpack.c.l.b16 %v2849
    %v3464 = vunpack.c.h.b16 %v2849
    %v3465 = vunpack.c.l.b16 %v2850
    %v3466 = vunpack.c.h.b16 %v2850
    %v3467 = vunpack.c.l.b16 %v2851
    %v3468 = vunpack.c.h.b16 %v2851
    %v3469 = vunpack.c.l.b16 %v2852
    %v3470 = vunpack.c.h.b16 %v2852
    %v3471 = vunpack.c.l.b16 %v2853
    %v3472 = vunpack.c.h.b16 %v2853
    %v3473 = vunpack.c.l.b16 %v2854
    %v3474 = vunpack.c.h.b16 %v2854
    %v3475 = vunpack.c.l.b16 %v2855
    %v3476 = vunpack.c.h.b16 %v2855
    %v3477 = vunpack.c.l.b16 %v2856
    %v3478 = vunpack.c.h.b16 %v2856
    %v3479 = vunpack.c.l.b16 %v2857
    %v3480 = vunpack.c.h.b16 %v2857
    %v3481 = vunpack.c.l.b16 %v2858
    %v3482 = vunpack.c.h.b16 %v2858
    %v3483 = vunpack.c.l.b16 %v2859
    %v3484 = vunpack.c.h.b16 %v2859
    %v3485 = vunpack.c.l.b16 %v2860
    %v3486 = vunpack.c.h.b16 %v2860
    %v3487 = vunpack.c.l.b16 %v2861
    %v3488 = vunpack.c.h.b16 %v2861
    %v3489 = vunpack.c.l.b16 %v2862
    %v3490 = vunpack.c.h.b16 %v2862
    %v3491 = vunpack.c.l.b16 %v2863
    %v3492 = vunpack.c.h.b16 %v2863
    %v3493 = vunpack.c.l.b16 %v2864
    %v3494 = vunpack.c.h.b16 %v2864
    %v3495 = vunpack.c.l.b16 %v2865
    %v3496 = vunpack.c.h.b16 %v2865
    %v3497 = vunpack.c.l.b16 %v2866
    %v3498 = vunpack.c.h.b16 %v2866
    %v3499 = vunpack.c.l.b16 %v2867
    %v3500 = vunpack.c.h.b16 %v2867
    %v3501 = vunpack.c.l.b16 %v2868
    %v3502 = vunpack.c.h.b16 %v2868
    %v3503 = vunpack.c.l.b16 %v2869
    %v3504 = vunpack.c.h.b16 %v2869
    %v3505 = vunpack.c.l.b16 %v2870
    %v3506 = vunpack.c.h.b16 %v2870
    %v3507 = vunpack.c.l.b16 %v2871
    %v3508 = vunpack.c.h.b16 %v2871
    %v3509 = vunpack.c.l.b16 %v2872
    %v3510 = vunpack.c.h.b16 %v2872
    %v3511 = vunpack.c.l.b16 %v2873
    %v3512 = vunpack.c.h.b16 %v2873
    %v3513 = vunpack.c.l.b16 %v2874
    %v3514 = vunpack.c.h.b16 %v2874
    %v3515 = vunpack.c.l.b16 %v2875
    %v3516 = vunpack.c.h.b16 %v2875
    %v3517 = vunpack.c.l.b16 %v2876
    %v3518 = vunpack.c.h.b16 %v2876
    %v3519 = vunpack.c.l.b16 %v2877
    %v3520 = vunpack.c.h.b16 %v2877
    %v3521 = vunpack.c.l.b16 %v2878
    %v3522 = vunpack.c.h.b16 %v2878
    %v3523 = vunpack.c.l.b16 %v2879
    %v3524 = vunpack.c.h.b16 %v2879
    %v3525 = vunpack.c.l.b16 %v2880
    %v3526 = vunpack.c.h.b16 %v2880
    %v3527 = vunpack.c.l.b16 %v2881
    %v3528 = vunpack.c.h.b16 %v2881
    %v3529 = vunpack.c.l.b16 %v2882
    %v3530 = vunpack.c.h.b16 %v2882
    %v3531 = vunpack.c.l.b16 %v2883
    %v3532 = vunpack.c.h.b16 %v2883
    %v3533 = vunpack.c.l.b16 %v2884
    %v3534 = vunpack.c.h.b16 %v2884
    %v3535 = vunpack.c.l.b16 %v2885
    %v3536 = vunpack.c.h.b16 %v2885
    %v3537 = vunpack.c.l.b16 %v2886
    %v3538 = vunpack.c.h.b16 %v2886
    %v3539 = vunpack.c.l.b16 %v2887
    %v3540 = vunpack.c.h.b16 %v2887
    %v3541 = vunpack.c.l.b16 %v2888
    %v3542 = vunpack.c.h.b16 %v2888
    %v3543 = vunpack.c.l.b16 %v2889
    %v3544 = vunpack.c.h.b16 %v2889
    %v3545 = vunpack.c.l.b16 %v2890
    %v3546 = vunpack.c.h.b16 %v2890
    %v3547 = vunpack.c.l.b16 %v2891
    %v3548 = vunpack.c.h.b16 %v2891
    %v3549 = vunpack.c.l.b16 %v2892
    %v3550 = vunpack.c.h.b16 %v2892
    %v3551 = vunpack.c.l.b16 %v2893
    %v3552 = vunpack.c.h.b16 %v2893
    %v3553 = vunpack.c.l.b16 %v2894
    %v3554 = vunpack.c.h.b16 %v2894
    %v3555 = vunpack.c.l.b16 %v2895
    %v3556 = vunpack.c.h.b16 %v2895
    %v3557 = vunpack.c.l.b16 %v2896
    %v3558 = vunpack.c.h.b16 %v2896
    %v3559 = vunpack.c.l.b16 %v2897
    %v3560 = vunpack.c.h.b16 %v2897
    %v3561 = vunpack.c.l.b16 %v2898
    %v3562 = vunpack.c.h.b16 %v2898
    %v3563 = vunpack.c.l.b16 %v2899
    %v3564 = vunpack.c.h.b16 %v2899
    %v3565 = vunpack.c.l.b16 %v2900
    %v3566 = vunpack.c.h.b16 %v2900
    %v3567 = vunpack.c.l.b16 %v2901
    %v3568 = vunpack.c.h.b16 %v2901
    %v3569 = vunpack.c.l.b16 %v2902
    %v3570 = vunpack.c.h.b16 %v2902
    %v3571 = vunpack.c.l.b16 %v2903
    %v3572 = vunpack.c.h.b16 %v2903
    %v3573 = vunpack.c.l.b16 %v2904
    %v3574 = vunpack.c.h.b16 %v2904
    %v3575 = vunpack.c.l.b16 %v2905
    %v3576 = vunpack.c.h.b16 %v2905
    %v3577 = vunpack.c.l.b16 %v2906
    %v3578 = vunpack.c.h.b16 %v2906
    %v3579 = vunpack.c.l.b16 %v2907
    %v3580 = vunpack.c.h.b16 %v2907
    %v3581 = vunpack.c.l.b16 %v2908
    %v3582 = vunpack.c.h.b16 %v2908
    %v3583 = vunpack.c.l.b16 %v2909
    %v3584 = vunpack.c.h.b16 %v2909
    %v3585 = vunpack.c.l.b16 %v2910
    %v3586 = vunpack.c.h.b16 %v2910
    %v3587 = vunpack.c.l.b16 %v2911
    %v3588 = vunpack.c.h.b16 %v2911
    %v3589 = vunpack.c.l.b16 %v2912
    %v3590 = vunpack.c.h.b16 %v2912
    %v3591 = vunpack.c.l.b16 %v2913
    %v3592 = vunpack.c.h.b16 %v2913
    %v3593 = vunpack.c.l.b16 %v2914
    %v3594 = vunpack.c.h.b16 %v2914
    %v3595 = vunpack.c.l.b16 %v2915
    %v3596 = vunpack.c.h.b16 %v2915
    %v3597 = vunpack.c.l.b16 %v2916
    %v3598 = vunpack.c.h.b16 %v2916
    %v3599 = vunpack.c.l.b16 %v2917
    %v3600 = vunpack.c.h.b16 %v2917
    %v3601 = vunpack.c.l.b16 %v2918
    %v3602 = vunpack.c.h.b16 %v2918
    %v3603 = vunpack.c.l.b16 %v2919
    %v3604 = vunpack.c.h.b16 %v2919
    %v3605 = vunpack.c.l.b16 %v2920
    %v3606 = vunpack.c.h.b16 %v2920
    %v3607 = vunpack.c.l.b16 %v2921
    %v3608 = vunpack.c.h.b16 %v2921
    %v3609 = vunpack.c.l.b16 %v2922
    %v3610 = vunpack.c.h.b16 %v2922
    %v3611 = vunpack.c.l.b16 %v2923
    %v3612 = vunpack.c.h.b16 %v2923
    %v3613 = vunpack.c.l.b16 %v2924
    %v3614 = vunpack.c.h.b16 %v2924
    %v3615 = vunpack.c.l.b16 %v2925
    %v3616 = vunpack.c.h.b16 %v2925
    %v3617 = vunpack.c.l.b16 %v2926
    %v3618 = vunpack.c.h.b16 %v2926
    %v3619 = vunpack.c.l.b16 %v2927
    %v3620 = vunpack.c.h.b16 %v2927
    %v3621 = vunpack.c.l.b16 %v2928
    %v3622 = vunpack.c.h.b16 %v2928
    %v3623 = vunpack.c.l.b16 %v2929
    %v3624 = vunpack.c.h.b16 %v2929
    %v3625 = vunpack.c.l.b16 %v2930
    %v3626 = vunpack.c.h.b16 %v2930
    %v3627 = vunpack.c.l.b16 %v2931
    %v3628 = vunpack.c.h.b16 %v2931
    %v3629 = vunpack.c.l.b16 %v2932
    %v3630 = vunpack.c.h.b16 %v2932
    %v3631 = vunpack.c.l.b16 %v2933
    %v3632 = vunpack.c.h.b16 %v2933
    %v3633 = vunpack.c.l.b16 %v2934
    %v3634 = vunpack.c.h.b16 %v2934
    %v3635 = vunpack.c.l.b16 %v2935
    %v3636 = vunpack.c.h.b16 %v2935
    %v3637 = vunpack.c.l.b16 %v2936
    %v3638 = vunpack.c.h.b16 %v2936
    %v3639 = vunpack.c.l.b16 %v2937
    %v3640 = vunpack.c.h.b16 %v2937
    %v3641 = vunpack.c.l.b16 %v2938
    %v3642 = vunpack.c.h.b16 %v2938
    %v3643 = vunpack.c.l.b16 %v2939
    %v3644 = vunpack.c.h.b16 %v2939
    %v3645 = vunpack.c.l.b16 %v2940
    %v3646 = vunpack.c.h.b16 %v2940
    %v3647 = vunpack.c.l.b16 %v2941
    %v3648 = vunpack.c.h.b16 %v2941
    %v3649 = vunpack.c.l.b16 %v2942
    %v3650 = vunpack.c.h.b16 %v2942
    %v3651 = vunpack.c.l.b16 %v2943
    %v3652 = vunpack.c.h.b16 %v2943
    %v3653 = vunpack.c.l.b16 %v2944
    %v3654 = vunpack.c.h.b16 %v2944
    %v3655 = vunpack.c.l.b16 %v2945
    %v3656 = vunpack.c.h.b16 %v2945
    %v3657 = vunpack.c.l.b16 %v2946
    %v3658 = vunpack.c.h.b16 %v2946
    %v3659 = vunpack.c.l.b16 %v2947
    %v3660 = vunpack.c.h.b16 %v2947
    %v3661 = vunpack.c.l.b16 %v2948
    %v3662 = vunpack.c.h.b16 %v2948
    %v3663 = vunpack.c.l.b16 %v2949
    %v3664 = vunpack.c.h.b16 %v2949
    %v3665 = vunpack.c.l.b16 %v2950
    %v3666 = vunpack.c.h.b16 %v2950
    %v3667 = vunpack.c.l.b16 %v2951
    %v3668 = vunpack.c.h.b16 %v2951
    %v3669 = vunpack.c.l.b16 %v2952
    %v3670 = vunpack.c.h.b16 %v2952
    %v3671 = vunpack.c.l.b16 %v2953
    %v3672 = vunpack.c.h.b16 %v2953
    %v3673 = vunpack.c.l.b16 %v2954
    %v3674 = vunpack.c.h.b16 %v2954
    %v3675 = vunpack.c.l.b16 %v2955
    %v3676 = vunpack.c.h.b16 %v2955
    %v3677 = vunpack.c.l.b16 %v2956
    %v3678 = vunpack.c.h.b16 %v2956
    %v3679 = vunpack.c.l.b16 %v2957
    %v3680 = vunpack.c.h.b16 %v2957
    %v3681 = vunpack.c.l.b16 %v2958
    %v3682 = vunpack.c.h.b16 %v2958
    %v3683 = vunpack.c.l.b16 %v2959
    %v3684 = vunpack.c.h.b16 %v2959
    %v3685 = vunpack.c.l.b16 %v2960
    %v3686 = vunpack.c.h.b16 %v2960
    %v3687 = vunpack.c.l.b16 %v2961
    %v3688 = vunpack.c.h.b16 %v2961
    %v3689 = vunpack.c.l.b16 %v2962
    %v3690 = vunpack.c.h.b16 %v2962
    %v3691 = vunpack.c.l.b16 %v2963
    %v3692 = vunpack.c.h.b16 %v2963
    %v3693 = vunpack.c.l.b16 %v2964
    %v3694 = vunpack.c.h.b16 %v2964
    %v3695 = vunpack.c.l.b16 %v2965
    %v3696 = vunpack.c.h.b16 %v2965
    %v3697 = vunpack.c.l.b16 %v2966
    %v3698 = vunpack.c.h.b16 %v2966
    %v3699 = vunpack.c.l.b16 %v2967
    %v3700 = vunpack.c.h.b16 %v2967
    %v3701 = vunpack.c.l.b16 %v2968
    %v3702 = vunpack.c.h.b16 %v2968
    %v3703 = vunpack.c.l.b16 %v2969
    %v3704 = vunpack.c.h.b16 %v2969
    %v3705 = vunpack.c.l.b16 %v2970
    %v3706 = vunpack.c.h.b16 %v2970
    %v3707 = vunpack.c.l.b16 %v2971
    %v3708 = vunpack.c.h.b16 %v2971
    %v3709 = vunpack.c.l.b16 %v2972
    %v3710 = vunpack.c.h.b16 %v2972
    %v3711 = vunpack.c.l.b16 %v2973
    %v3712 = vunpack.c.h.b16 %v2973
    %v3713 = vunpack.c.l.b16 %v2974
    %v3714 = vunpack.c.h.b16 %v2974
    %v3715 = vunpack.c.l.b16 %v2975
    %v3716 = vunpack.c.h.b16 %v2975
    %v3717 = vunpack.c.l.b16 %v2976
    %v3718 = vunpack.c.h.b16 %v2976
    %v3719 = vunpack.c.l.b16 %v2977
    %v3720 = vunpack.c.h.b16 %v2977
    %v3721 = vunpack.c.l.b16 %v2978
    %v3722 = vunpack.c.h.b16 %v2978
    %v3723 = vunpack.c.l.b16 %v2979
    %v3724 = vunpack.c.h.b16 %v2979
    %v3725 = vunpack.c.l.b16 %v2980
    %v3726 = vunpack.c.h.b16 %v2980
    %v3727 = vunpack.c.l.b16 %v2981
    %v3728 = vunpack.c.h.b16 %v2981
    %v3729 = vunpack.c.l.b16 %v2982
    %v3730 = vunpack.c.h.b16 %v2982
    %v3731 = vunpack.c.l.b16 %v2983
    %v3732 = vunpack.c.h.b16 %v2983
    %v3733 = vunpack.c.l.b16 %v2984
    %v3734 = vunpack.c.h.b16 %v2984
    %v3735 = vunpack.c.l.b16 %v2985
    %v3736 = vunpack.c.h.b16 %v2985
    %v3737 = vunpack.c.l.b16 %v2986
    %v3738 = vunpack.c.h.b16 %v2986
    %v3739 = vunpack.c.l.b16 %v2987
    %v3740 = vunpack.c.h.b16 %v2987
    %v3741 = vunpack.c.l.b16 %v2988
    %v3742 = vunpack.c.h.b16 %v2988
    %v3743 = vunpack.c.l.b16 %v2989
    %v3744 = vunpack.c.h.b16 %v2989
    %v3745 = vunpack.c.l.b16 %v2990
    %v3746 = vunpack.c.h.b16 %v2990
    %v3747 = vunpack.c.l.b16 %v2991
    %v3748 = vunpack.c.h.b16 %v2991
    %v3749 = vunpack.c.l.b16 %v2992
    %v3750 = vunpack.c.h.b16 %v2992
    %v3751 = vunpack.c.l.b16 %v2993
    %v3752 = vunpack.c.h.b16 %v2993
    %v3753 = vunpack.c.l.b16 %v2994
    %v3754 = vunpack.c.h.b16 %v2994
    %v3755 = vunpack.c.l.b16 %v2995
    %v3756 = vunpack.c.h.b16 %v2995
    %v3757 = vunpack.c.l.b16 %v2996
    %v3758 = vunpack.c.h.b16 %v2996
    %v3759 = vunpack.c.l.b16 %v2997
    %v3760 = vunpack.c.h.b16 %v2997
    %v3761 = vunpack.c.l.b16 %v2998
    %v3762 = vunpack.c.h.b16 %v2998
    %v3763 = vunpack.c.l.b16 %v2999
    %v3764 = vunpack.c.h.b16 %v2999
    %v3765 = vunpack.c.l.b16 %v3000
    %v3766 = vunpack.c.h.b16 %v3000
    %v3767 = vunpack.c.l.b16 %v3001
    %v3768 = vunpack.c.h.b16 %v3001
    %v3769 = vunpack.c.l.b16 %v3002
    %v3770 = vunpack.c.h.b16 %v3002
    %v3771 = vunpack.c.l.b16 %v3003
    %v3772 = vunpack.c.h.b16 %v3003
    %v3773 = vunpack.c.l.b16 %v3004
    %v3774 = vunpack.c.h.b16 %v3004
    %v3775 = vunpack.c.l.b16 %v3005
    %v3776 = vunpack.c.h.b16 %v3005
    %v3777 = vunpack.c.l.b16 %v3006
    %v3778 = vunpack.c.h.b16 %v3006
    %v3779 = vunpack.c.l.b16 %v3007
    %v3780 = vunpack.c.h.b16 %v3007
    %v3781 = vunpack.c.l.b16 %v3008
    %v3782 = vunpack.c.h.b16 %v3008
    %v3783 = vunpack.c.l.b16 %v3009
    %v3784 = vunpack.c.h.b16 %v3009
    %v3785 = vunpack.c.l.b16 %v3010
    %v3786 = vunpack.c.h.b16 %v3010
    %v3787 = vunpack.c.l.b16 %v3011
    %v3788 = vunpack.c.h.b16 %v3011
    %v3789 = vunpack.c.l.b16 %v3012
    %v3790 = vunpack.c.h.b16 %v3012
    %v3791 = vunpack.c.l.b16 %v3013
    %v3792 = vunpack.c.h.b16 %v3013
    %v3793 = vunpack.c.l.b16 %v3014
    %v3794 = vunpack.c.h.b16 %v3014
    %v3795 = vunpack.c.l.b16 %v3015
    %v3796 = vunpack.c.h.b16 %v3015
    %v3797 = vunpack.c.l.b16 %v3016
    %v3798 = vunpack.c.h.b16 %v3016
    %v3799 = vunpack.c.l.b16 %v3017
    %v3800 = vunpack.c.h.b16 %v3017
    %v3801 = vunpack.c.l.b16 %v3018
    %v3802 = vunpack.c.h.b16 %v3018
    %v3803 = vunpack.c.l.b16 %v3019
    %v3804 = vunpack.c.h.b16 %v3019
    %v3805 = vunpack.c.l.b16 %v3020
    %v3806 = vunpack.c.h.b16 %v3020
    %v3807 = vunpack.c.l.b16 %v3021
    %v3808 = vunpack.c.h.b16 %v3021
    %v3809 = vunpack.c.l.b16 %v3022
    %v3810 = vunpack.c.h.b16 %v3022
    %v3811 = vunpack.c.l.b16 %v3023
    %v3812 = vunpack.c.h.b16 %v3023
    %v3813 = vunpack.c.l.b16 %v3024
    %v3814 = vunpack.c.h.b16 %v3024
    %v3815 = vunpack.c.l.b16 %v3025
    %v3816 = vunpack.c.h.b16 %v3025
    %v3817 = vunpack.c.l.b16 %v3026
    %v3818 = vunpack.c.h.b16 %v3026
    %v3819 = vunpack.c.l.b16 %v3027
    %v3820 = vunpack.c.h.b16 %v3027
    %v3821 = vunpack.c.l.b16 %v3028
    %v3822 = vunpack.c.h.b16 %v3028
    %v3823 = vunpack.c.l.b16 %v3029
    %v3824 = vunpack.c.h.b16 %v3029
    %v3825 = vunpack.c.l.b16 %v3030
    %v3826 = vunpack.c.h.b16 %v3030
    %v3827 = vunpack.c.l.b16 %v3031
    %v3828 = vunpack.c.h.b16 %v3031
    %v3829 = vunpack.c.l.b16 %v3032
    %v3830 = vunpack.c.h.b16 %v3032
    %v3831 = vunpack.c.l.b16 %v3033
    %v3832 = vunpack.c.h.b16 %v3033
    %v3833 = vunpack.c.l.b16 %v3034
    %v3834 = vunpack.c.h.b16 %v3034
    %v3835 = vunpack.c.l.b16 %v3035
    %v3836 = vunpack.c.h.b16 %v3035
    %v3837 = vunpack.c.l.b16 %v3036
    %v3838 = vunpack.c.h.b16 %v3036
    %v3839 = vunpack.c.l.b16 %v3037
    %v3840 = vunpack.c.h.b16 %v3037
    %v3841 = vunpack.c.l.b16 %v3038
    %v3842 = vunpack.c.h.b16 %v3038
    %v3843 = vunpack.c.l.b16 %v3039
    %v3844 = vunpack.c.h.b16 %v3039
    %v3845 = vunpack.c.l.b16 %v3040
    %v3846 = vunpack.c.h.b16 %v3040
    %v3847 = vunpack.c.l.b16 %v3041
    %v3848 = vunpack.c.h.b16 %v3041
    %v3849 = vunpack.c.l.b16 %v3042
    %v3850 = vunpack.c.h.b16 %v3042
    %v3851 = vunpack.c.l.b16 %v3043
    %v3852 = vunpack.c.h.b16 %v3043
    %v3853 = vunpack.c.l.b16 %v3044
    %v3854 = vunpack.c.h.b16 %v3044
    %v3855 = vunpack.c.l.b16 %v3045
    %v3856 = vunpack.c.h.b16 %v3045
    %v3857 = vunpack.c.l.b16 %v3046
    %v3858 = vunpack.c.h.b16 %v3046
    %v3859 = vunpack.c.l.b16 %v3047
    %v3860 = vunpack.c.h.b16 %v3047
    %v3861 = vunpack.c.l.b16 %v3048
    %v3862 = vunpack.c.h.b16 %v3048
    %v3863 = vunpack.c.l.b16 %v3049
    %v3864 = vunpack.c.h.b16 %v3049
    %v3865 = vunpack.c.l.b16 %v3050
    %v3866 = vunpack.c.h.b16 %v3050
    %v3867 = vunpack.c.l.b16 %v3051
    %v3868 = vunpack.c.h.b16 %v3051
    %v3869 = vunpack.c.l.b16 %v3052
    %v3870 = vunpack.c.h.b16 %v3052
    %v3871 = vunpack.c.l.b16 %v3053
    %v3872 = vunpack.c.h.b16 %v3053
    %v3873 = vunpack.c.l.b16 %v3054
    %v3874 = vunpack.c.h.b16 %v3054
    %v3875 = vunpack.c.l.b16 %v3055
    %v3876 = vunpack.c.h.b16 %v3055
    %v3877 = vunpack.c.l.b16 %v3056
    %v3878 = vunpack.c.h.b16 %v3056
    %v3879 = vunpack.c.l.b16 %v3057
    %v3880 = vunpack.c.h.b16 %v3057
    %v3881 = vunpack.c.l.b16 %v3058
    %v3882 = vunpack.c.h.b16 %v3058
    %v3883 = vunpack.c.l.b16 %v3059
    %v3884 = vunpack.c.h.b16 %v3059
    %v3885 = vunpack.c.l.b16 %v3060
    %v3886 = vunpack.c.h.b16 %v3060
    %v3887 = vunpack.c.l.b16 %v3061
    %v3888 = vunpack.c.h.b16 %v3061
    %v3889 = vunpack.c.l.b16 %v3062
    %v3890 = vunpack.c.h.b16 %v3062
    %v3891 = vunpack.c.l.b16 %v3063
    %v3892 = vunpack.c.h.b16 %v3063
    %v3893 = vunpack.c.l.b16 %v3064
    %v3894 = vunpack.c.h.b16 %v3064
    %v3895 = vunpack.c.l.b16 %v3065
    %v3896 = vunpack.c.h.b16 %v3065
    %v3897 = vunpack.c.l.b16 %v3066
    %v3898 = vunpack.c.h.b16 %v3066
    %v3899 = vunpack.c.l.b16 %v3067
    %v3900 = vunpack.c.h.b16 %v3067
    %v3901 = vunpack.c.l.b16 %v3068
    %v3902 = vunpack.c.h.b16 %v3068
    %v3903 = vunpack.c.l.b16 %v3069
    %v3904 = vunpack.c.h.b16 %v3069
    %v3905 = vunpack.c.l.b16 %v3070
    %v3906 = vunpack.c.h.b16 %v3070
    %v3907 = vunpack.c.l.b16 %v3071
    %v3908 = vunpack.c.h.b16 %v3071
    %v3909 = vunpack.c.l.b16 %v3072
    %v3910 = vunpack.c.h.b16 %v3072
    %v3911 = vunpack.c.l.b16 %v3073
    %v3912 = vunpack.c.h.b16 %v3073
    %v3913 = vunpack.c.l.b16 %v3074
    %v3914 = vunpack.c.h.b16 %v3074
    %v3915 = vunpack.c.l.b16 %v3075
    %v3916 = vunpack.c.h.b16 %v3075
    %v3917 = vunpack.c.l.b16 %v3076
    %v3918 = vunpack.c.h.b16 %v3076
    %v3919 = vunpack.c.l.b16 %v3077
    %v3920 = vunpack.c.h.b16 %v3077
    %v3921 = vunpack.c.l.b16 %v3078
    %v3922 = vunpack.c.h.b16 %v3078
    %v3923 = vunpack.c.l.b16 %v3079
    %v3924 = vunpack.c.h.b16 %v3079
    %v3925 = vunpack.c.l.b16 %v3080
    %v3926 = vunpack.c.h.b16 %v3080
    %v3927 = vunpack.c.l.b16 %v3081
    %v3928 = vunpack.c.h.b16 %v3081
    %v3929 = vunpack.c.l.b16 %v3082
    %v3930 = vunpack.c.h.b16 %v3082
    %v3931 = vunpack.c.l.b16 %v3083
    %v3932 = vunpack.c.h.b16 %v3083
    %v3933 = vunpack.c.l.b16 %v3084
    %v3934 = vunpack.c.h.b16 %v3084
    %v3935 = vunpack.c.l.b16 %v3085
    %v3936 = vunpack.c.h.b16 %v3085
    %v3937 = vunpack.c.l.b16 %v3086
    %v3938 = vunpack.c.h.b16 %v3086
    %v3939 = vunpack.c.l.b16 %v3087
    %v3940 = vunpack.c.h.b16 %v3087
    %v3941 = vunpack.c.l.b16 %v3088
    %v3942 = vunpack.c.h.b16 %v3088
    %v3943 = vunpack.c.l.b16 %v3089
    %v3944 = vunpack.c.h.b16 %v3089
    %v3945 = vunpack.c.l.b16 %v3090
    %v3946 = vunpack.c.h.b16 %v3090
    %v3947 = vunpack.c.l.b16 %v3091
    %v3948 = vunpack.c.h.b16 %v3091
    %v3949 = vunpack.c.l.b16 %v3092
    %v3950 = vunpack.c.h.b16 %v3092
    %v3951 = vunpack.c.l.b16 %v3093
    %v3952 = vunpack.c.h.b16 %v3093
    %v3953 = vunpack.c.l.b16 %v3094
    %v3954 = vunpack.c.h.b16 %v3094
    %v3955 = vunpack.c.l.b16 %v3095
    %v3956 = vunpack.c.h.b16 %v3095
    %v3957 = vunpack.c.l.b16 %v3096
    %v3958 = vunpack.c.h.b16 %v3096
    %v3959 = vunpack.c.l.b16 %v3097
    %v3960 = vunpack.c.h.b16 %v3097
    %v3961 = vunpack.c.l.b16 %v3098
    %v3962 = vunpack.c.h.b16 %v3098
    %v3963 = vunpack.c.l.b16 %v3099
    %v3964 = vunpack.c.h.b16 %v3099
    %v3965 = vunpack.c.l.b16 %v3100
    %v3966 = vunpack.c.h.b16 %v3100
    %v3967 = vunpack.c.l.b16 %v3101
    %v3968 = vunpack.c.h.b16 %v3101
    %v3969 = vunpack.c.l.b16 %v3102
    %v3970 = vunpack.c.h.b16 %v3102
    %v3971 = vunpack.c.l.b16 %v3103
    %v3972 = vunpack.c.h.b16 %v3103
    %v3973 = vunpack.c.l.b16 %v3104
    %v3974 = vunpack.c.h.b16 %v3104
    %v3975 = vunpack.c.l.b16 %v3105
    %v3976 = vunpack.c.h.b16 %v3105
    %v3977 = vunpack.c.l.b16 %v3106
    %v3978 = vunpack.c.h.b16 %v3106
    %v3979 = vunpack.c.l.b16 %v3107
    %v3980 = vunpack.c.h.b16 %v3107
    %v3981 = vunpack.c.l.b16 %v3108
    %v3982 = vunpack.c.h.b16 %v3108
    %v3983 = vunpack.c.l.b16 %v3109
    %v3984 = vunpack.c.h.b16 %v3109
    %v3985 = vunpack.c.l.b16 %v3110
    %v3986 = vunpack.c.h.b16 %v3110
    %v3987 = vpack.c.b16 %v3413, %v3411
    %v3988 = vpack.c.b16 %v3414, %v3412
    %v3989 = vpack.c.b16 %v3417, %v3415
    %v3990 = vpack.c.b16 %v3418, %v3416
    %v3991 = vpack.c.b16 %v3421, %v3419
    %v3992 = vpack.c.b16 %v3422, %v3420
    %v3993 = vpack.c.b16 %v3425, %v3423
    %v3994 = vpack.c.b16 %v3426, %v3424
    %v3995 = vpack.c.b16 %v3429, %v3427
    %v3996 = vpack.c.b16 %v3430, %v3428
    %v3997 = vpack.c.b16 %v3433, %v3431
    %v3998 = vpack.c.b16 %v3434, %v3432
    %v3999 = vpack.c.b16 %v3437, %v3435
    %v4000 = vpack.c.b16 %v3438, %v3436
    %v4001 = vpack.c.b16 %v3441, %v3439
    %v4002 = vpack.c.b16 %v3442, %v3440
    %v4003 = vpack.c.b16 %v3445, %v3443
    %v4004 = vpack.c.b16 %v3446, %v3444
    %v4005 = vpack.c.b16 %v3449, %v3447
    %v4006 = vpack.c.b16 %v3450, %v3448
    %v4007 = vpack.c.b16 %v3453, %v3451
    %v4008 = vpack.c.b16 %v3454, %v3452
    %v4009 = vpack.c.b16 %v3457, %v3455
    %v4010 = vpack.c.b16 %v3458, %v3456
    %v4011 = vpack.c.b16 %v3461, %v3459
    %v4012 = vpack.c.b16 %v3462, %v3460
    %v4013 = vpack.c.b16 %v3465, %v3463
    %v4014 = vpack.c.b16 %v3466, %v3464
    %v4015 = vpack.c.b16 %v3469, %v3467
    %v4016 = vpack.c.b16 %v3470, %v3468
    %v4017 = vpack.c.b16 %v3473, %v3471
    %v4018 = vpack.c.b16 %v3474, %v3472
    %v4019 = vpack.c.b16 %v3477, %v3475
    %v4020 = vpack.c.b16 %v3478, %v3476
    %v4021 = vpack.c.b16 %v3481, %v3479
    %v4022 = vpack.c.b16 %v3482, %v3480
    %v4023 = vpack.c.b16 %v3485, %v3483
    %v4024 = vpack.c.b16 %v3486, %v3484
    %v4025 = vpack.c.b16 %v3489, %v3487
    %v4026 = vpack.c.b16 %v3490, %v3488
    %v4027 = vpack.c.b16 %v3493, %v3491
    %v4028 = vpack.c.b16 %v3494, %v3492
    %v4029 = vpack.c.b16 %v3497, %v3495
    %v4030 = vpack.c.b16 %v3498, %v3496
    %v4031 = vpack.c.b16 %v3501, %v3499
    %v4032 = vpack.c.b16 %v3502, %v3500
    %v4033 = vpack.c.b16 %v3505, %v3503
    %v4034 = vpack.c.b16 %v3506, %v3504
    %v4035 = vpack.c.b16 %v3509, %v3507
    %v4036 = vpack.c.b16 %v3510, %v3508
    %v4037 = vpack.c.b16 %v3513, %v3511
    %v4038 = vpack.c.b16 %v3514, %v3512
    %v4039 = vpack.c.b16 %v3517, %v3515
    %v4040 = vpack.c.b16 %v3518, %v3516
    %v4041 = vpack.c.b16 %v3521, %v3519
    %v4042 = vpack.c.b16 %v3522, %v3520
    %v4043 = vpack.c.b16 %v3525, %v3523
    %v4044 = vpack.c.b16 %v3526, %v3524
    %v4045 = vpack.c.b16 %v3529, %v3527
    %v4046 = vpack.c.b16 %v3530, %v3528
    %v4047 = vpack.c.b16 %v3533, %v3531
    %v4048 = vpack.c.b16 %v3534, %v3532
    %v4049 = vpack.c.b16 %v3537, %v3535
    %v4050 = vpack.c.b16 %v3538, %v3536
    %v4051 = vpack.c.b16 %v3541, %v3539
    %v4052 = vpack.c.b16 %v3542, %v3540
    %v4053 = vpack.c.b16 %v3545, %v3543
    %v4054 = vpack.c.b16 %v3546, %v3544
    %v4055 = vpack.c.b16 %v3549, %v3547
    %v4056 = vpack.c.b16 %v3550, %v3548
    %v4057 = vpack.c.b16 %v3553, %v3551
    %v4058 = vpack.c.b16 %v3554, %v3552
    %v4059 = vpack.c.b16 %v3557, %v3555
    %v4060 = vpack.c.b16 %v3558, %v3556
    %v4061 = vpack.c.b16 %v3561, %v3559
    %v4062 = vpack.c.b16 %v3562, %v3560
    %v4063 = vpack.c.b16 %v3565, %v3563
    %v4064 = vpack.c.b16 %v3566, %v3564
    %v4065 = vpack.c.b16 %v3569, %v3567
    %v4066 = vpack.c.b16 %v3570, %v3568
    %v4067 = vpack.c.b16 %v3573, %v3571
    %v4068 = vpack.c.b16 %v3574, %v3572
    %v4069 = vpack.c.b16 %v3577, %v3575
    %v4070 = vpack.c.b16 %v3578, %v3576
    %v4071 = vpack.c.b16 %v3581, %v3579
    %v4072 = vpack.c.b16 %v3582, %v3580
    %v4073 = vpack.c.b16 %v3585, %v3583
    %v4074 = vpack.c.b16 %v3586, %v3584
    %v4075 = vpack.c.b16 %v3589, %v3587
    %v4076 = vpack.c.b16 %v3590, %v3588
    %v4077 = vpack.c.b16 %v3593, %v3591
    %v4078 = vpack.c.b16 %v3594, %v3592
    %v4079 = vpack.c.b16 %v3597, %v3595
    %v4080 = vpack.c.b16 %v3598, %v3596
    %v4081 = vpack.c.b16 %v3601, %v3599
    %v4082 = vpack.c.b16 %v3602, %v3600
    %v4083 = vpack.c.b16 %v3605, %v3603
    %v4084 = vpack.c.b16 %v3606, %v3604
    %v4085 = vpack.c.b16 %v3609, %v3607
    %v4086 = vpack.c.b16 %v3610, %v3608
    %v4087 = vpack.c.b16 %v3613, %v3611
    %v4088 = vpack.c.b16 %v3614, %v3612
    %v4089 = vpack.c.b16 %v3617, %v3615
    %v4090 = vpack.c.b16 %v3618, %v3616
    %v4091 = vpack.c.b16 %v3621, %v3619
    %v4092 = vpack.c.b16 %v3622, %v3620
    %v4093 = vpack.c.b16 %v3625, %v3623
    %v4094 = vpack.c.b16 %v3626, %v3624
    %v4095 = vpack.c.b16 %v3629, %v3627
    %v4096 = vpack.c.b16 %v3630, %v3628
    %v4097 = vpack.c.b16 %v3633, %v3631
    %v4098 = vpack.c.b16 %v3634, %v3632
    %v4099 = vpack.c.b16 %v3637, %v3635
    %v4100 = vpack.c.b16 %v3638, %v3636
    %v4101 = vpack.c.b16 %v3641, %v3639
    %v4102 = vpack.c.b16 %v3642, %v3640
    %v4103 = vpack.c.b16 %v3645, %v3643
    %v4104 = vpack.c.b16 %v3646, %v3644
    %v4105 = vpack.c.b16 %v3649, %v3647
    %v4106 = vpack.c.b16 %v3650, %v3648
    %v4107 = vpack.c.b16 %v3653, %v3651
    %v4108 = vpack.c.b16 %v3654, %v3652
    %v4109 = vpack.c.b16 %v3657, %v3655
    %v4110 = vpack.c.b16 %v3658, %v3656
    %v4111 = vpack.c.b16 %v3661, %v3659
    %v4112 = vpack.c.b16 %v3662, %v3660
    %v4113 = vpack.c.b16 %v3665, %v3663
    %v4114 = vpack.c.b16 %v3666, %v3664
    %v4115 = vpack.c.b16 %v3669, %v3667
    %v4116 = vpack.c.b16 %v3670, %v3668
    %v4117 = vpack.c.b16 %v3673, %v3671
    %v4118 = vpack.c.b16 %v3674, %v3672
    %v4119 = vpack.c.b16 %v3677, %v3675
    %v4120 = vpack.c.b16 %v3678, %v3676
    %v4121 = vpack.c.b16 %v3681, %v3679
    %v4122 = vpack.c.b16 %v3682, %v3680
    %v4123 = vpack.c.b16 %v3685, %v3683
    %v4124 = vpack.c.b16 %v3686, %v3684
    %v4125 = vpack.c.b16 %v3689, %v3687
    %v4126 = vpack.c.b16 %v3690, %v3688
    %v4127 = vpack.c.b16 %v3693, %v3691
    %v4128 = vpack.c.b16 %v3694, %v3692
    %v4129 = vpack.c.b16 %v3697, %v3695
    %v4130 = vpack.c.b16 %v3698, %v3696
    %v4131 = vpack.c.b16 %v3701, %v3699
    %v4132 = vpack.c.b16 %v3702, %v3700
    %v4133 = vpack.c.b16 %v3705, %v3703
    %v4134 = vpack.c.b16 %v3706, %v3704
    %v4135 = vpack.c.b16 %v3709, %v3707
    %v4136 = vpack.c.b16 %v3710, %v3708
    %v4137 = vpack.c.b16 %v3713, %v3711
    %v4138 = vpack.c.b16 %v3714, %v3712
    %v4139 = vpack.c.b16 %v3717, %v3715
    %v4140 = vpack.c.b16 %v3718, %v3716
    %v4141 = vpack.c.b16 %v3721, %v3719
    %v4142 = vpack.c.b16 %v3722, %v3720
    %v4143 = vpack.c.b16 %v3725, %v3723
    %v4144 = vpack.c.b16 %v3726, %v3724
    %v4145 = vpack.c.b16 %v3729, %v3727
    %v4146 = vpack.c.b16 %v3730, %v3728
    %v4147 = vpack.c.b16 %v3733, %v3731
    %v4148 = vpack.c.b16 %v3734, %v3732
    %v4149 = vpack.c.b16 %v3737, %v3735
    %v4150 = vpack.c.b16 %v3738, %v3736
    %v4151 = vpack.c.b16 %v3741, %v3739
    %v4152 = vpack.c.b16 %v3742, %v3740
    %v4153 = vpack.c.b16 %v3745, %v3743
    %v4154 = vpack.c.b16 %v3746, %v3744
    %v4155 = vpack.c.b16 %v3749, %v3747
    %v4156 = vpack.c.b16 %v3750, %v3748
    %v4157 = vpack.c.b16 %v3753, %v3751
    %v4158 = vpack.c.b16 %v3754, %v3752
    %v4159 = vpack.c.b16 %v3757, %v3755
    %v4160 = vpack.c.b16 %v3758, %v3756
    %v4161 = vpack.c.b16 %v3761, %v3759
    %v4162 = vpack.c.b16 %v3762, %v3760
    %v4163 = vpack.c.b16 %v3765, %v3763
    %v4164 = vpack.c.b16 %v3766, %v3764
    %v4165 = vpack.c.b16 %v3769, %v3767
    %v4166 = vpack.c.b16 %v3770, %v3768
    %v4167 = vpack.c.b16 %v3773, %v3771
    %v4168 = vpack.c.b16 %v3774, %v3772
    %v4169 = vpack.c.b16 %v3777, %v3775
    %v4170 = vpack.c.b16 %v3778, %v3776
    %v4171 = vpack.c.b16 %v3781, %v3779
    %v4172 = vpack.c.b16 %v3782, %v3780
    %v4173 = vpack.c.b16 %v3785, %v3783
    %v4174 = vpack.c.b16 %v3786, %v3784
    %v4175 = vpack.c.b16 %v3789, %v3787
    %v4176 = vpack.c.b16 %v3790, %v3788
    %v4177 = vpack.c.b16 %v3793, %v3791
    %v4178 = vpack.c.b16 %v3794, %v3792
    %v4179 = vpack.c.b16 %v3797, %v3795
    %v4180 = vpack.c.b16 %v3798, %v3796
    %v4181 = vpack.c.b16 %v3801, %v3799
    %v4182 = vpack.c.b16 %v3802, %v3800
    %v4183 = vpack.c.b16 %v3805, %v3803
    %v4184 = vpack.c.b16 %v3806, %v3804
    %v4185 = vpack.c.b16 %v3809, %v3807
    %v4186 = vpack.c.b16 %v3810, %v3808
    %v4187 = vpack.c.b16 %v3813, %v3811
    %v4188 = vpack.c.b16 %v3814, %v3812
    %v4189 = vpack.c.b16 %v3817, %v3815
    %v4190 = vpack.c.b16 %v3818, %v3816
    %v4191 = vpack.c.b16 %v3821, %v3819
    %v4192 = vpack.c.b16 %v3822, %v3820
    %v4193 = vpack.c.b16 %v3825, %v3823
    %v4194 = vpack.c.b16 %v3826, %v3824
    %v4195 = vpack.c.b16 %v3829, %v3827
    %v4196 = vpack.c.b16 %v3830, %v3828
    %v4197 = vpack.c.b16 %v3833, %v3831
    %v4198 = vpack.c.b16 %v3834, %v3832
    %v4199 = vpack.c.b16 %v3837, %v3835
    %v4200 = vpack.c.b16 %v3838, %v3836
    %v4201 = vpack.c.b16 %v3841, %v3839
    %v4202 = vpack.c.b16 %v3842, %v3840
    %v4203 = vpack.c.b16 %v3845, %v3843
    %v4204 = vpack.c.b16 %v3846, %v3844
    %v4205 = vpack.c.b16 %v3849, %v3847
    %v4206 = vpack.c.b16 %v3850, %v3848
    %v4207 = vpack.c.b16 %v3853, %v3851
    %v4208 = vpack.c.b16 %v3854, %v3852
    %v4209 = vpack.c.b16 %v3857, %v3855
    %v4210 = vpack.c.b16 %v3858, %v3856
    %v4211 = vpack.c.b16 %v3861, %v3859
    %v4212 = vpack.c.b16 %v3862, %v3860
    %v4213 = vpack.c.b16 %v3865, %v3863
    %v4214 = vpack.c.b16 %v3866, %v3864
    %v4215 = vpack.c.b16 %v3869, %v3867
    %v4216 = vpack.c.b16 %v3870, %v3868
    %v4217 = vpack.c.b16 %v3873, %v3871
    %v4218 = vpack.c.b16 %v3874, %v3872
    %v4219 = vpack.c.b16 %v3877, %v3875
    %v4220 = vpack.c.b16 %v3878, %v3876
    %v4221 = vpack.c.b16 %v3881, %v3879
    %v4222 = vpack.c.b16 %v3882, %v3880
    %v4223 = vpack.c.b16 %v3885, %v3883
    %v4224 = vpack.c.b16 %v3886, %v3884
    %v4225 = vpack.c.b16 %v3889, %v3887
    %v4226 = vpack.c.b16 %v3890, %v3888
    %v4227 = vpack.c.b16 %v3893, %v3891
    %v4228 = vpack.c.b16 %v3894, %v3892
    %v4229 = vpack.c.b16 %v3897, %v3895
    %v4230 = vpack.c.b16 %v3898, %v3896
    %v4231 = vpack.c.b16 %v3901, %v3899
    %v4232 = vpack.c.b16 %v3902, %v3900
    %v4233 = vpack.c.b16 %v3905, %v3903
    %v4234 = vpack.c.b16 %v3906, %v3904
    %v4235 = vpack.c.b16 %v3909, %v3907
    %v4236 = vpack.c.b16 %v3910, %v3908
    %v4237 = vpack.c.b16 %v3913, %v3911
    %v4238 = vpack.c.b16 %v3914, %v3912
    %v4239 = vpack.c.b16 %v3917, %v3915
    %v4240 = vpack.c.b16 %v3918, %v3916
    %v4241 = vpack.c.b16 %v3921, %v3919
    %v4242 = vpack.c.b16 %v3922, %v3920
    %v4243 = vpack.c.b16 %v3925, %v3923
    %v4244 = vpack.c.b16 %v3926, %v3924
    %v4245 = vpack.c.b16 %v3929, %v3927
    %v4246 = vpack.c.b16 %v3930, %v3928
    %v4247 = vpack.c.b16 %v3933, %v3931
    %v4248 = vpack.c.b16 %v3934, %v3932
    %v4249 = vpack.c.b16 %v3937, %v3935
    %v4250 = vpack.c.b16 %v3938, %v3936
    %v4251 = vpack.c.b16 %v3941, %v3939
    %v4252 = vpack.c.b16 %v3942, %v3940
    %v4253 = vpack.c.b16 %v3945, %v3943
    %v4254 = vpack.c.b16 %v3946, %v3944
    %v4255 = vpack.c.b16 %v3949, %v3947
    %v4256 = vpack.c.b16 %v3950, %v3948
    %v4257 = vpack.c.b16 %v3953, %v3951
    %v4258 = vpack.c.b16 %v3954, %v3952
    %v4259 = vpack.c.b16 %v3957, %v3955
    %v4260 = vpack.c.b16 %v3958, %v3956
    %v4261 = vpack.c.b16 %v3961, %v3959
    %v4262 = vpack.c.b16 %v3962, %v3960
    %v4263 = vpack.c.b16 %v3965, %v3963
    %v4264 = vpack.c.b16 %v3966, %v3964
    %v4265 = vpack.c.b16 %v3969, %v3967
    %v4266 = vpack.c.b16 %v3970, %v3968
    %v4267 = vpack.c.b16 %v3973, %v3971
    %v4268 = vpack.c.b16 %v3974, %v3972
    %v4269 = vpack.c.b16 %v3977, %v3975
    %v4270 = vpack.c.b16 %v3978, %v3976
    %v4271 = vpack.c.b16 %v3981, %v3979
    %v4272 = vpack.c.b16 %v3982, %v3980
    %v4273 = vpack.c.b16 %v3985, %v3983
    %v4274 = vpack.c.b16 %v3986, %v3984
    %4563 = vmatprep.subr.bf16.mxu0 %v3988
    %4564 = vmatpush1.bf16.msra.mxu0 %v3987
    %4565 = vmatprep.subr.bf16.mxu0 %v3990
    %4566 = vmatpush1.bf16.msra.mxu0 %v3989
    %4567 = vmatprep.subr.bf16.mxu0 %v3992
    %4568 = vmatpush1.bf16.msra.mxu0 %v3991
    %4569 = vmatprep.subr.bf16.mxu0 %v3994
    %4570 = vmatpush1.bf16.msra.mxu0 %v3993
    %4571 = vmatprep.subr.bf16.mxu0 %v3996
    %4572 = vmatpush1.bf16.msra.mxu0 %v3995
    %4573 = vmatprep.subr.bf16.mxu0 %v3998
    %4574 = vmatpush1.bf16.msra.mxu0 %v3997
    %4575 = vmatprep.subr.bf16.mxu0 %v4000
    %4576 = vmatpush1.bf16.msra.mxu0 %v3999
    %4577 = vmatprep.subr.bf16.mxu0 %v4002
    %4578 = vmatpush1.bf16.msra.mxu0 %v4001
    %4579 = vmatprep.subr.bf16.mxu0 %v4004
    %4580 = vmatpush1.bf16.msra.mxu0 %v4003
    %4581 = vmatprep.subr.bf16.mxu0 %v4006
    %4582 = vmatpush1.bf16.msra.mxu0 %v4005
    %4583 = vmatprep.subr.bf16.mxu0 %v4008
    %4584 = vmatpush1.bf16.msra.mxu0 %v4007
    %4585 = vmatprep.subr.bf16.mxu0 %v4010
    %4586 = vmatpush1.bf16.msra.mxu0 %v4009
    %4587 = vmatprep.subr.bf16.mxu0 %v4012
    %4588 = vmatpush1.bf16.msra.mxu0 %v4011
    %4589 = vmatprep.subr.bf16.mxu0 %v4014
    %4590 = vmatpush1.bf16.msra.mxu0 %v4013
    %4591 = vmatprep.subr.bf16.mxu0 %v4016
    %4592 = vmatpush1.bf16.msra.mxu0 %v4015
    %4593 = vmatprep.subr.bf16.mxu0 %v4018
    %4594 = vmatpush1.bf16.msra.mxu0 %v4017
    %4595 = vmatprep.mubr.bf16.mxu0 %v2752
    %4596 = vmatmul.mubr.bf16.gmra.mrb[0].mxu0 %v2751
    %v4597 = vpop.f32.mrb[0].mxu0
    %v4598 = vadd.f32 %v3116, %v4597
    %v4599 = vpop.f32.mrb[0].mxu0
    %v4600 = vadd.f32 %v3120, %v4599
    %v4601 = vpop.f32.mrb[0].mxu0
    %v4602 = vpop.f32.mrb[0].mxu0
    %4603 = vdwg.mxu0
    %4604 = vmatprep.subr.bf16.mxu0 %v4020
    %4605 = vmatpush1.bf16.msra.mxu0 %v4019
    %4606 = vmatprep.subr.bf16.mxu0 %v4022
    %4607 = vmatpush1.bf16.msra.mxu0 %v4021
    %4608 = vmatprep.subr.bf16.mxu0 %v4024
    %4609 = vmatpush1.bf16.msra.mxu0 %v4023
    %4610 = vmatprep.subr.bf16.mxu0 %v4026
    %4611 = vmatpush1.bf16.msra.mxu0 %v4025
    %4612 = vmatprep.subr.bf16.mxu0 %v4028
    %4613 = vmatpush1.bf16.msra.mxu0 %v4027
    %4614 = vmatprep.subr.bf16.mxu0 %v4030
    %4615 = vmatpush1.bf16.msra.mxu0 %v4029
    %4616 = vmatprep.subr.bf16.mxu0 %v4032
    %4617 = vmatpush1.bf16.msra.mxu0 %v4031
    %4618 = vmatprep.subr.bf16.mxu0 %v4034
    %4619 = vmatpush1.bf16.msra.mxu0 %v4033
    %4620 = vmatprep.subr.bf16.mxu0 %v4036
    %4621 = vmatpush1.bf16.msra.mxu0 %v4035
    %4622 = vmatprep.subr.bf16.mxu0 %v4038
    %4623 = vmatpush1.bf16.msra.mxu0 %v4037
    %4624 = vmatprep.subr.bf16.mxu0 %v4040
    %4625 = vmatpush1.bf16.msra.mxu0 %v4039
    %4626 = vmatprep.subr.bf16.mxu0 %v4042
    %4627 = vmatpush1.bf16.msra.mxu0 %v4041
    %4628 = vmatprep.subr.bf16.mxu0 %v4044
    %4629 = vmatpush1.bf16.msra.mxu0 %v4043
    %4630 = vmatprep.subr.bf16.mxu0 %v4046
    %4631 = vmatpush1.bf16.msra.mxu0 %v4045
    %4632 = vmatprep.subr.bf16.mxu0 %v4048
    %4633 = vmatpush1.bf16.msra.mxu0 %v4047
    %4634 = vmatprep.subr.bf16.mxu0 %v4050
    %4635 = vmatpush1.bf16.msra.mxu0 %v4049
    %4636 = vmatprep.mubr.bf16.mxu0 %v2761
    %4637 = vmatmul.mubr.bf16.gmra.mrb[0].mxu0 %v2760
    %v4638 = vpop.f32.mrb[0].mxu0
    %v4639 = vadd.f32 %v4598, %v4638
    %v4640 = vpop.f32.mrb[0].mxu0
    %v4641 = vadd.f32 %v4600, %v4640
    %v4642 = vpop.f32.mrb[0].mxu0
    %v4643 = vpop.f32.mrb[0].mxu0
    %4644 = vdwg.mxu0
    %4645 = vmatprep.subr.bf16.mxu0 %v4052
    %4646 = vmatpush1.bf16.msra.mxu0 %v4051
    %4647 = vmatprep.subr.bf16.mxu0 %v4054
    %4648 = vmatpush1.bf16.msra.mxu0 %v4053
    %4649 = vmatprep.subr.bf16.mxu0 %v4056
    %4650 = vmatpush1.bf16.msra.mxu0 %v4055
    %4651 = vmatprep.subr.bf16.mxu0 %v4058
    %4652 = vmatpush1.bf16.msra.mxu0 %v4057
    %4653 = vmatprep.subr.bf16.mxu0 %v4060
    %4654 = vmatpush1.bf16.msra.mxu0 %v4059
    %4655 = vmatprep.subr.bf16.mxu0 %v4062
    %4656 = vmatpush1.bf16.msra.mxu0 %v4061
    %4657 = vmatprep.subr.bf16.mxu0 %v4064
    %4658 = vmatpush1.bf16.msra.mxu0 %v4063
    %4659 = vmatprep.subr.bf16.mxu0 %v4066
    %4660 = vmatpush1.bf16.msra.mxu0 %v4065
    %4661 = vmatprep.subr.bf16.mxu0 %v4068
    %4662 = vmatpush1.bf16.msra.mxu0 %v4067
    %4663 = vmatprep.subr.bf16.mxu0 %v4070
    %4664 = vmatpush1.bf16.msra.mxu0 %v4069
    %4665 = vmatprep.subr.bf16.mxu0 %v4072
    %4666 = vmatpush1.bf16.msra.mxu0 %v4071
    %4667 = vmatprep.subr.bf16.mxu0 %v4074
    %4668 = vmatpush1.bf16.msra.mxu0 %v4073
    %4669 = vmatprep.subr.bf16.mxu0 %v4076
    %4670 = vmatpush1.bf16.msra.mxu0 %v4075
    %4671 = vmatprep.subr.bf16.mxu0 %v4078
    %4672 = vmatpush1.bf16.msra.mxu0 %v4077
    %4673 = vmatprep.subr.bf16.mxu0 %v4080
    %4674 = vmatpush1.bf16.msra.mxu0 %v4079
    %4675 = vmatprep.subr.bf16.mxu0 %v4082
    %4676 = vmatpush1.bf16.msra.mxu0 %v4081
    %4677 = vmatprep.mubr.bf16.mxu0 %v2770
    %4678 = vmatmul.mubr.bf16.gmra.mrb[0].mxu0 %v2769
    %v4679 = vpop.f32.mrb[0].mxu0
    %v4680 = vadd.f32 %v4639, %v4679
    %v4681 = vpop.f32.mrb[0].mxu0
    %v4682 = vadd.f32 %v4641, %v4681
    %v4683 = vpop.f32.mrb[0].mxu0
    %v4684 = vpop.f32.mrb[0].mxu0
    %4685 = vdwg.mxu0
    %4686 = vmatprep.subr.bf16.mxu0 %v4084
    %4687 = vmatpush1.bf16.msra.mxu0 %v4083
    %4688 = vmatprep.subr.bf16.mxu0 %v4086
    %4689 = vmatpush1.bf16.msra.mxu0 %v4085
    %4690 = vmatprep.subr.bf16.mxu0 %v4088
    %4691 = vmatpush1.bf16.msra.mxu0 %v4087
    %4692 = vmatprep.subr.bf16.mxu0 %v4090
    %4693 = vmatpush1.bf16.msra.mxu0 %v4089
    %4694 = vmatprep.subr.bf16.mxu0 %v4092
    %4695 = vmatpush1.bf16.msra.mxu0 %v4091
    %4696 = vmatprep.subr.bf16.mxu0 %v4094
    %4697 = vmatpush1.bf16.msra.mxu0 %v4093
    %4698 = vmatprep.subr.bf16.mxu0 %v4096
    %4699 = vmatpush1.bf16.msra.mxu0 %v4095
    %4700 = vmatprep.subr.bf16.mxu0 %v4098
    %4701 = vmatpush1.bf16.msra.mxu0 %v4097
    %4702 = vmatprep.subr.bf16.mxu0 %v4100
    %4703 = vmatpush1.bf16.msra.mxu0 %v4099
    %4704 = vmatprep.subr.bf16.mxu0 %v4102
    %4705 = vmatpush1.bf16.msra.mxu0 %v4101
    %4706 = vmatprep.subr.bf16.mxu0 %v4104
    %4707 = vmatpush1.bf16.msra.mxu0 %v4103
    %4708 = vmatprep.subr.bf16.mxu0 %v4106
    %4709 = vmatpush1.bf16.msra.mxu0 %v4105
    %4710 = vmatprep.subr.bf16.mxu0 %v4108
    %4711 = vmatpush1.bf16.msra.mxu0 %v4107
    %4712 = vmatprep.subr.bf16.mxu0 %v4110
    %4713 = vmatpush1.bf16.msra.mxu0 %v4109
    %4714 = vmatprep.subr.bf16.mxu0 %v4112
    %4715 = vmatpush1.bf16.msra.mxu0 %v4111
    %4716 = vmatprep.subr.bf16.mxu0 %v4114
    %4717 = vmatpush1.bf16.msra.mxu0 %v4113
    %4718 = vmatprep.mubr.bf16.mxu0 %v2779
    %4719 = vmatmul.mubr.bf16.gmra.mrb[0].mxu0 %v2778
    %v4720 = vpop.f32.mrb[0].mxu0
    %v4721 = vadd.f32 %v4680, %v4720
    %v4722 = vpop.f32.mrb[0].mxu0
    %v4723 = vadd.f32 %v4682, %v4722
    %v4724 = vpop.f32.mrb[0].mxu0
    %v4725 = vpop.f32.mrb[0].mxu0
    %4726 = vdwg.mxu0
    %4727 = vmatprep.subr.bf16.mxu0 %v4116
    %4728 = vmatpush1.bf16.msra.mxu0 %v4115
    %4729 = vmatprep.subr.bf16.mxu0 %v4118
    %4730 = vmatpush1.bf16.msra.mxu0 %v4117
    %4731 = vmatprep.subr.bf16.mxu0 %v4120
    %4732 = vmatpush1.bf16.msra.mxu0 %v4119
    %4733 = vmatprep.subr.bf16.mxu0 %v4122
    %4734 = vmatpush1.bf16.msra.mxu0 %v4121
    %4735 = vmatprep.subr.bf16.mxu0 %v4124
    %4736 = vmatpush1.bf16.msra.mxu0 %v4123
    %4737 = vmatprep.subr.bf16.mxu0 %v4126
    %4738 = vmatpush1.bf16.msra.mxu0 %v4125
    %4739 = vmatprep.subr.bf16.mxu0 %v4128
    %4740 = vmatpush1.bf16.msra.mxu0 %v4127
    %4741 = vmatprep.subr.bf16.mxu0 %v4130
    %4742 = vmatpush1.bf16.msra.mxu0 %v4129
    %4743 = vmatprep.subr.bf16.mxu0 %v4132
    %4744 = vmatpush1.bf16.msra.mxu0 %v4131
    %4745 = vmatprep.subr.bf16.mxu0 %v4134
    %4746 = vmatpush1.bf16.msra.mxu0 %v4133
    %4747 = vmatprep.subr.bf16.mxu0 %v4136
    %4748 = vmatpush1.bf16.msra.mxu0 %v4135
    %4749 = vmatprep.subr.bf16.mxu0 %v4138
    %4750 = vmatpush1.bf16.msra.mxu0 %v4137
    %4751 = vmatprep.subr.bf16.mxu0 %v4140
    %4752 = vmatpush1.bf16.msra.mxu0 %v4139
    %4753 = vmatprep.subr.bf16.mxu0 %v4142
    %4754 = vmatpush1.bf16.msra.mxu0 %v4141
    %4755 = vmatprep.subr.bf16.mxu0 %v4144
    %4756 = vmatpush1.bf16.msra.mxu0 %v4143
    %4757 = vmatprep.subr.bf16.mxu0 %v4146
    %4758 = vmatpush1.bf16.msra.mxu0 %v4145
    %4759 = vmatprep.mubr.bf16.mxu0 %v2786
    %4760 = vmatmul.mubr.bf16.gmra.mrb[0].mxu0 %v2785
    %v4761 = vpop.f32.mrb[0].mxu0
    %v4762 = vadd.f32 %v4721, %v4761
    %v4763 = vpop.f32.mrb[0].mxu0
    %v4764 = vadd.f32 %v4723, %v4763
    %v4765 = vpop.f32.mrb[0].mxu0
    %v4766 = vpop.f32.mrb[0].mxu0
    %4767 = vdwg.mxu0
    %4768 = vmatprep.subr.bf16.mxu0 %v4148
    %4769 = vmatpush1.bf16.msra.mxu0 %v4147
    %4770 = vmatprep.subr.bf16.mxu0 %v4150
    %4771 = vmatpush1.bf16.msra.mxu0 %v4149
    %4772 = vmatprep.subr.bf16.mxu0 %v4152
    %4773 = vmatpush1.bf16.msra.mxu0 %v4151
    %4774 = vmatprep.subr.bf16.mxu0 %v4154
    %4775 = vmatpush1.bf16.msra.mxu0 %v4153
    %4776 = vmatprep.subr.bf16.mxu0 %v4156
    %4777 = vmatpush1.bf16.msra.mxu0 %v4155
    %4778 = vmatprep.subr.bf16.mxu0 %v4158
    %4779 = vmatpush1.bf16.msra.mxu0 %v4157
    %4780 = vmatprep.subr.bf16.mxu0 %v4160
    %4781 = vmatpush1.bf16.msra.mxu0 %v4159
    %4782 = vmatprep.subr.bf16.mxu0 %v4162
    %4783 = vmatpush1.bf16.msra.mxu0 %v4161
    %4784 = vmatprep.subr.bf16.mxu0 %v4164
    %4785 = vmatpush1.bf16.msra.mxu0 %v4163
    %4786 = vmatprep.subr.bf16.mxu0 %v4166
    %4787 = vmatpush1.bf16.msra.mxu0 %v4165
    %4788 = vmatprep.subr.bf16.mxu0 %v4168
    %4789 = vmatpush1.bf16.msra.mxu0 %v4167
    %4790 = vmatprep.subr.bf16.mxu0 %v4170
    %4791 = vmatpush1.bf16.msra.mxu0 %v4169
    %4792 = vmatprep.subr.bf16.mxu0 %v4172
    %4793 = vmatpush1.bf16.msra.mxu0 %v4171
    %4794 = vmatprep.subr.bf16.mxu0 %v4174
    %4795 = vmatpush1.bf16.msra.mxu0 %v4173
    %4796 = vmatprep.subr.bf16.mxu0 %v4176
    %4797 = vmatpush1.bf16.msra.mxu0 %v4175
    %4798 = vmatprep.subr.bf16.mxu0 %v4178
    %4799 = vmatpush1.bf16.msra.mxu0 %v4177
    %4800 = vmatprep.mubr.bf16.mxu0 %v2795
    %4801 = vmatmul.mubr.bf16.gmra.mrb[0].mxu0 %v2794
    %v4802 = vpop.f32.mrb[0].mxu0
    %v4803 = vadd.f32 %v4762, %v4802
    %v4804 = vpop.f32.mrb[0].mxu0
    %v4805 = vadd.f32 %v4764, %v4804
    %v4806 = vpop.f32.mrb[0].mxu0
    %v4807 = vpop.f32.mrb[0].mxu0
    %4808 = vdwg.mxu0
    %4809 = vmatprep.subr.bf16.mxu0 %v4180
    %4810 = vmatpush1.bf16.msra.mxu0 %v4179
    %4811 = vmatprep.subr.bf16.mxu0 %v4182
    %4812 = vmatpush1.bf16.msra.mxu0 %v4181
    %4813 = vmatprep.subr.bf16.mxu0 %v4184
    %4814 = vmatpush1.bf16.msra.mxu0 %v4183
    %4815 = vmatprep.subr.bf16.mxu0 %v4186
    %4816 = vmatpush1.bf16.msra.mxu0 %v4185
    %4817 = vmatprep.subr.bf16.mxu0 %v4188
    %4818 = vmatpush1.bf16.msra.mxu0 %v4187
    %4819 = vmatprep.subr.bf16.mxu0 %v4190
    %4820 = vmatpush1.bf16.msra.mxu0 %v4189
    %4821 = vmatprep.subr.bf16.mxu0 %v4192
    %4822 = vmatpush1.bf16.msra.mxu0 %v4191
    %4823 = vmatprep.subr.bf16.mxu0 %v4194
    %4824 = vmatpush1.bf16.msra.mxu0 %v4193
    %4825 = vmatprep.subr.bf16.mxu0 %v4196
    %4826 = vmatpush1.bf16.msra.mxu0 %v4195
    %4827 = vmatprep.subr.bf16.mxu0 %v4198
    %4828 = vmatpush1.bf16.msra.mxu0 %v4197
    %4829 = vmatprep.subr.bf16.mxu0 %v4200
    %4830 = vmatpush1.bf16.msra.mxu0 %v4199
    %4831 = vmatprep.subr.bf16.mxu0 %v4202
    %4832 = vmatpush1.bf16.msra.mxu0 %v4201
    %4833 = vmatprep.subr.bf16.mxu0 %v4204
    %4834 = vmatpush1.bf16.msra.mxu0 %v4203
    %4835 = vmatprep.subr.bf16.mxu0 %v4206
    %4836 = vmatpush1.bf16.msra.mxu0 %v4205
    %4837 = vmatprep.subr.bf16.mxu0 %v4208
    %4838 = vmatpush1.bf16.msra.mxu0 %v4207
    %4839 = vmatprep.subr.bf16.mxu0 %v4210
    %4840 = vmatpush1.bf16.msra.mxu0 %v4209
    %4841 = vmatprep.mubr.bf16.mxu0 %v2804
    %4842 = vmatmul.mubr.bf16.gmra.mrb[0].mxu0 %v2803
    %v4843 = vpop.f32.mrb[0].mxu0
    %v4844 = vadd.f32 %v4803, %v4843
    %v4845 = vpop.f32.mrb[0].mxu0
    %v4846 = vadd.f32 %v4805, %v4845
    %v4847 = vpop.f32.mrb[0].mxu0
    %v4848 = vpop.f32.mrb[0].mxu0
    %4849 = vdwg.mxu0
    %4850 = vmatprep.subr.bf16.mxu0 %v4212
    %4851 = vmatpush1.bf16.msra.mxu0 %v4211
    %4852 = vmatprep.subr.bf16.mxu0 %v4214
    %4853 = vmatpush1.bf16.msra.mxu0 %v4213
    %4854 = vmatprep.subr.bf16.mxu0 %v4216
    %4855 = vmatpush1.bf16.msra.mxu0 %v4215
    %4856 = vmatprep.subr.bf16.mxu0 %v4218
    %4857 = vmatpush1.bf16.msra.mxu0 %v4217
    %4858 = vmatprep.subr.bf16.mxu0 %v4220
    %4859 = vmatpush1.bf16.msra.mxu0 %v4219
    %4860 = vmatprep.subr.bf16.mxu0 %v4222
    %4861 = vmatpush1.bf16.msra.mxu0 %v4221
    %4862 = vmatprep.subr.bf16.mxu0 %v4224
    %4863 = vmatpush1.bf16.msra.mxu0 %v4223
    %4864 = vmatprep.subr.bf16.mxu0 %v4226
    %4865 = vmatpush1.bf16.msra.mxu0 %v4225
    %4866 = vmatprep.subr.bf16.mxu0 %v4228
    %4867 = vmatpush1.bf16.msra.mxu0 %v4227
    %4868 = vmatprep.subr.bf16.mxu0 %v4230
    %4869 = vmatpush1.bf16.msra.mxu0 %v4229
    %4870 = vmatprep.subr.bf16.mxu0 %v4232
    %4871 = vmatpush1.bf16.msra.mxu0 %v4231
    %4872 = vmatprep.subr.bf16.mxu0 %v4234
    %4873 = vmatpush1.bf16.msra.mxu0 %v4233
    %4874 = vmatprep.subr.bf16.mxu0 %v4236
    %4875 = vmatpush1.bf16.msra.mxu0 %v4235
    %4876 = vmatprep.subr.bf16.mxu0 %v4238
    %4877 = vmatpush1.bf16.msra.mxu0 %v4237
    %4878 = vmatprep.subr.bf16.mxu0 %v4240
    %4879 = vmatpush1.bf16.msra.mxu0 %v4239
    %4880 = vmatprep.subr.bf16.mxu0 %v4242
    %4881 = vmatpush1.bf16.msra.mxu0 %v4241
    %4882 = vmatprep.mubr.bf16.mxu0 %v2813
    %4883 = vmatmul.mubr.bf16.gmra.mrb[0].mxu0 %v2812
    %v4884 = vpop.f32.mrb[0].mxu0
    %v4885 = vadd.f32 %v4844, %v4884
    %v4886 = vpop.f32.mrb[0].mxu0
    %v4887 = vadd.f32 %v4846, %v4886
    %v4888 = vpop.f32.mrb[0].mxu0
    %v4889 = vpop.f32.mrb[0].mxu0
    %4890 = vdwg.mxu0
    %4891 = vmatprep.subr.bf16.mxu0 %v4244
    %4892 = vmatpush1.bf16.msra.mxu0 %v4243
    %4893 = vmatprep.subr.bf16.mxu0 %v4246
    %4894 = vmatpush1.bf16.msra.mxu0 %v4245
    %4895 = vmatprep.subr.bf16.mxu0 %v4248
    %4896 = vmatpush1.bf16.msra.mxu0 %v4247
    %4897 = vmatprep.subr.bf16.mxu0 %v4250
    %4898 = vmatpush1.bf16.msra.mxu0 %v4249
    %4899 = vmatprep.subr.bf16.mxu0 %v4252
    %4900 = vmatpush1.bf16.msra.mxu0 %v4251
    %4901 = vmatprep.subr.bf16.mxu0 %v4254
    %4902 = vmatpush1.bf16.msra.mxu0 %v4253
    %4903 = vmatprep.subr.bf16.mxu0 %v4256
    %4904 = vmatpush1.bf16.msra.mxu0 %v4255
    %4905 = vmatprep.subr.bf16.mxu0 %v4258
    %4906 = vmatpush1.bf16.msra.mxu0 %v4257
    %4907 = vmatprep.subr.bf16.mxu0 %v4260
    %4908 = vmatpush1.bf16.msra.mxu0 %v4259
    %4909 = vmatprep.subr.bf16.mxu0 %v4262
    %4910 = vmatpush1.bf16.msra.mxu0 %v4261
    %4911 = vmatprep.subr.bf16.mxu0 %v4264
    %4912 = vmatpush1.bf16.msra.mxu0 %v4263
    %4913 = vmatprep.subr.bf16.mxu0 %v4266
    %4914 = vmatpush1.bf16.msra.mxu0 %v4265
    %4915 = vmatprep.subr.bf16.mxu0 %v4268
    %4916 = vmatpush1.bf16.msra.mxu0 %v4267
    %4917 = vmatprep.subr.bf16.mxu0 %v4270
    %4918 = vmatpush1.bf16.msra.mxu0 %v4269
    %4919 = vmatprep.subr.bf16.mxu0 %v4272
    %4920 = vmatpush1.bf16.msra.mxu0 %v4271
    %4921 = vmatprep.subr.bf16.mxu0 %v4274
    %4922 = vmatpush1.bf16.msra.mxu0 %v4273
    %4923 = vmatprep.mubr.bf16.mxu0 %v2820
    %4924 = vmatmul.mubr.bf16.gmra.mrb[0].mxu0 %v2819
    %v4925 = vpop.f32.mrb[0].mxu0
    %v4926 = vadd.f32 %v4885, %v4925
    %v4927 = vpop.f32.mrb[0].mxu0
    %v4928 = vadd.f32 %v4887, %v4927
    %v4929 = vpop.f32.mrb[0].mxu0
    %v4930 = vpop.f32.mrb[0].mxu0
    %4931 = vdwg.mxu0
    %v4932 = vmax.f32 %v4926, 0.0
    %v4933 = vmax.f32 %v4928, 0.0
    %v4934 = vpack.c.bf16 %v4932, %v4932
    %v4935 = vpack.c.bf16 %v4933, %v4933
    %v4936 = vld [vmem:[%s7] sm:$0xf]
    %v4937 = vld [vmem:[%s7 + $0x4] sm:$0xf]
    %v4938 = vld [vmem:[%s7 + $0x8] sm:$0xf]
    %v4939 = vld [vmem:[%s7 + $0xc] sm:$0xf]
    %v4940 = vld [vmem:[%s7 + $0x10] sm:$0xf]
    %v4941 = vld [vmem:[%s7 + $0x14] sm:$0xf]
    %v4942 = vld [vmem:[%s7 + $0x18] sm:$0xf]
    %v4943 = vld [vmem:[%s7 + $0x1c] sm:$0xf]
    %v4944 = vld [vmem:[%s7 + $0x20] sm:$0xf]
    %v4945 = vld [vmem:[%s7 + $0x24] sm:$0xf]
    %v4946 = vld [vmem:[%s7 + $0x28] sm:$0xf]
    %v4947 = vld [vmem:[%s7 + $0x2c] sm:$0xf]
    %v4948 = vld [vmem:[%s7 + $0x30] sm:$0xf]
    %v4949 = vld [vmem:[%s7 + $0x34] sm:$0xf]
    %v4950 = vld [vmem:[%s7 + $0x38] sm:$0xf]
    %v4951 = vld [vmem:[%s7 + $0x3c] sm:$0xf]
    %v4952 = vld [vmem:[%s7 + $0x40] sm:$0xf]
    %v4953 = vld [vmem:[%s7 + $0x44] sm:$0xf]
    %v4954 = vld [vmem:[%s7 + $0x48] sm:$0xf]
    %v4955 = vld [vmem:[%s7 + $0x4c] sm:$0xf]
    %v4956 = vld [vmem:[%s7 + $0x50] sm:$0xf]
    %v4957 = vld [vmem:[%s7 + $0x54] sm:$0xf]
    %v4958 = vld [vmem:[%s7 + $0x58] sm:$0xf]
    %v4959 = vld [vmem:[%s7 + $0x5c] sm:$0xf]
    %v4960 = vld [vmem:[%s7 + $0x60] sm:$0xf]
    %v4961 = vld [vmem:[%s7 + $0x64] sm:$0xf]
    %v4962 = vld [vmem:[%s7 + $0x68] sm:$0xf]
    %v4963 = vld [vmem:[%s7 + $0x6c] sm:$0xf]
    %v4964 = vld [vmem:[%s7 + $0x70] sm:$0xf]
    %v4965 = vld [vmem:[%s7 + $0x74] sm:$0xf]
    %v4966 = vld [vmem:[%s7 + $0x78] sm:$0xf]
    %v4967 = vld [vmem:[%s7 + $0x7c] sm:$0xf]
    %v4968 = vld [vmem:[%s8] sm:$0x1]
    %v4970 = vlaneseq
    %v4971 = vshrl.u32 %v4970, 7
    %v4972 = vsub.s32 0, %v4971
    %v4973 = vrot.slane %v4968, %v4972
    %v5007 = vunpack.c.l.b16 %v4936
    %v5008 = vunpack.c.l.b16 %v4937
    %v5009 = vunpack.c.l.b16 %v4938
    %v5010 = vunpack.c.l.b16 %v4939
    %v5011 = vunpack.c.l.b16 %v4940
    %v5012 = vunpack.c.l.b16 %v4941
    %v5013 = vunpack.c.l.b16 %v4942
    %v5014 = vunpack.c.l.b16 %v4943
    %v5015 = vunpack.c.l.b16 %v4944
    %v5016 = vunpack.c.l.b16 %v4945
    %v5017 = vunpack.c.l.b16 %v4946
    %v5018 = vunpack.c.l.b16 %v4947
    %v5019 = vunpack.c.l.b16 %v4948
    %v5020 = vunpack.c.l.b16 %v4949
    %v5021 = vunpack.c.l.b16 %v4950
    %v5022 = vunpack.c.l.b16 %v4951
    %v5023 = vunpack.c.l.b16 %v4952
    %v5024 = vunpack.c.l.b16 %v4953
    %v5025 = vunpack.c.l.b16 %v4954
    %v5026 = vunpack.c.l.b16 %v4955
    %v5027 = vunpack.c.l.b16 %v4956
    %v5028 = vunpack.c.l.b16 %v4957
    %v5029 = vunpack.c.l.b16 %v4958
    %v5030 = vunpack.c.l.b16 %v4959
    %v5031 = vunpack.c.l.b16 %v4960
    %v5032 = vunpack.c.l.b16 %v4961
    %v5033 = vunpack.c.l.b16 %v4962
    %v5034 = vunpack.c.l.b16 %v4963
    %v5035 = vunpack.c.l.b16 %v4964
    %v5036 = vunpack.c.l.b16 %v4965
    %v5037 = vunpack.c.l.b16 %v4966
    %v5038 = vunpack.c.l.b16 %v4967
    %v5039 = vpack.c.b16 %v5008, %v5007
    %v5040 = vpack.c.b16 %v5010, %v5009
    %v5041 = vpack.c.b16 %v5012, %v5011
    %v5042 = vpack.c.b16 %v5014, %v5013
    %v5043 = vpack.c.b16 %v5016, %v5015
    %v5044 = vpack.c.b16 %v5018, %v5017
    %v5045 = vpack.c.b16 %v5020, %v5019
    %v5046 = vpack.c.b16 %v5022, %v5021
    %v5047 = vpack.c.b16 %v5024, %v5023
    %v5048 = vpack.c.b16 %v5026, %v5025
    %v5049 = vpack.c.b16 %v5028, %v5027
    %v5050 = vpack.c.b16 %v5030, %v5029
    %v5051 = vpack.c.b16 %v5032, %v5031
    %v5052 = vpack.c.b16 %v5034, %v5033
    %v5053 = vpack.c.b16 %v5036, %v5035
    %v5054 = vpack.c.b16 %v5038, %v5037
    %5071 = vmatprep.subr.bf16.mxu0 0
    %5072 = vmatpush1.bf16.msra.mxu0 %v5039
    %5073 = vmatprep.subr.bf16.mxu0 0
    %5074 = vmatpush1.bf16.msra.mxu0 %v5040
    %5075 = vmatprep.subr.bf16.mxu0 0
    %5076 = vmatpush1.bf16.msra.mxu0 %v5041
    %5077 = vmatprep.subr.bf16.mxu0 0
    %5078 = vmatpush1.bf16.msra.mxu0 %v5042
    %5079 = vmatprep.subr.bf16.mxu0 0
    %5080 = vmatpush1.bf16.msra.mxu0 %v5043
    %5081 = vmatprep.subr.bf16.mxu0 0
    %5082 = vmatpush1.bf16.msra.mxu0 %v5044
    %5083 = vmatprep.subr.bf16.mxu0 0
    %5084 = vmatpush1.bf16.msra.mxu0 %v5045
    %5085 = vmatprep.subr.bf16.mxu0 0
    %5086 = vmatpush1.bf16.msra.mxu0 %v5046
    %5087 = vmatprep.subr.bf16.mxu0 0
    %5088 = vmatpush1.bf16.msra.mxu0 %v5047
    %5089 = vmatprep.subr.bf16.mxu0 0
    %5090 = vmatpush1.bf16.msra.mxu0 %v5048
    %5091 = vmatprep.subr.bf16.mxu0 0
    %5092 = vmatpush1.bf16.msra.mxu0 %v5049
    %5093 = vmatprep.subr.bf16.mxu0 0
    %5094 = vmatpush1.bf16.msra.mxu0 %v5050
    %5095 = vmatprep.subr.bf16.mxu0 0
    %5096 = vmatpush1.bf16.msra.mxu0 %v5051
    %5097 = vmatprep.subr.bf16.mxu0 0
    %5098 = vmatpush1.bf16.msra.mxu0 %v5052
    %5099 = vmatprep.subr.bf16.mxu0 0
    %5100 = vmatpush1.bf16.msra.mxu0 %v5053
    %5101 = vmatprep.subr.bf16.mxu0 0
    %5102 = vmatpush1.bf16.msra.mxu0 %v5054
    %5103 = vmatprep.mubr.bf16.mxu0 %v4935
    %5104 = vmatmul.mubr.bf16.gmra.mrb[0].mxu0 %v4934
    %v5105 = vpop.f32.mrb[0].mxu0
    %v5106 = vadd.f32 %v4973, %v5105
    %v5107 = vpop.f32.mrb[0].mxu0
    %v5108 = vpop.f32.mrb[0].mxu0
    %v5109 = vpop.f32.mrb[0].mxu0
    %5110 = vdwg.mxu0
    %5111 = vst [vmem:[#allocation4] sm:$0x3] %v5106
    // Predicated region
    $region38: #{agent_net_forward.1} parent=1 // pred_check
      _
    $region39: #{agent_net_forward.1} parent=1 // pred_check_branch
      %5113 = sbr.rel (0) target = $region41
    $region40: #{agent_net_forward.1} parent=1 // pred_region
      %s5115 = ssub.s32 32, 32
      %5116 = vsyncadd [#allocation5], %s5115
      %s5118 = sshll.u32 [#allocation4], 4
      %s5119 = int_to_ptr.vmem [resolvable:$true] %s5118
      %5121 = dma.vmem_to_hbm [thread:$0]  %s5119, 32, %s9, [#allocation5]
    $region41: #{agent_net_forward.1} parent=1 // pred_fallthru
      _
    // Predicated region
    $region42: #{agent_net_forward.1} parent=1 // pred_check
      _
    $region43: #{agent_net_forward.1} parent=1 // pred_check_branch
      %5123 = sbr.rel (0) target = $region45
    $region44: #{agent_net_forward.1} parent=1 // pred_region
      %5124 = dma.done [#allocation5], 32
    $region45: #{agent_net_forward.1} parent=1 // pred_fallthru
      _
    %5125 = vsyncpa [#allocation5], 1

</llo_original>
